<compile_context>
chip_gen: v7x
topology: tpu7x:2x2x1
jax: 0.10.0
libtpu: 0.0.40
codegen_flags: <defaults>
</compile_context>

<pallas_src>
import math

import jax
import jax.numpy as jnp
from jax.experimental import pallas as pl
from jax.experimental.pallas import tpu as pltpu


# conv stack config: (out_channels, kernel, stride) per layer (torch order).
_CONV_CFG = [(32, 8, 4), (64, 4, 4), (64, 3, 2), (64, 3, 2)]


def _conv_out(n, k, s):
    return (n - k) // s + 1


# ---------------------------------------------------------------------------
# Parameter init (torch layout) + packing into kernel-friendly layouts.
# ---------------------------------------------------------------------------
def _uniform(key, shape, bound):
    return jax.random.uniform(key, shape, jnp.float32, -bound, bound)


def init_branch_params(key, n_in_channels, state_size, hidden_dim, out_dim):
    """Torch-layout parameters for one branch (conv trunk + 2-layer head)."""
    keys = jax.random.split(key, 6)
    params = {}
    cin = n_in_channels
    for li, (cout, ksz, _stride) in enumerate(_CONV_CFG):
        fan_in = cin * ksz * ksz
        bound = 1.0 / math.sqrt(fan_in)
        kw_, kb_ = jax.random.split(keys[li])
        params[f"c{li + 1}w"] = _uniform(kw_, (cout, cin, ksz, ksz), bound)
        params[f"c{li + 1}b"] = _uniform(kb_, (cout,), bound)
        cin = cout
    im_feat = _CONV_CFG[-1][0]                 # conv4 output spatial is 1x1
    fan_in = im_feat + state_size
    bound = 1.0 / math.sqrt(fan_in)
    kw_, kb_ = jax.random.split(keys[4])
    params["h1w"] = _uniform(kw_, (hidden_dim, fan_in), bound)
    params["h1b"] = _uniform(kb_, (hidden_dim,), bound)
    bound = 1.0 / math.sqrt(hidden_dim)
    kw_, kb_ = jax.random.split(keys[5])
    params["h2w"] = _uniform(kw_, (out_dim, hidden_dim), bound)
    params["h2b"] = _uniform(kb_, (out_dim,), bound)
    return params


def _conv1_cols(w):
    # torch (out, in, k, k) -> (in*k*k, out) with feature order (c, ki, kj).
    return jnp.transpose(w, (1, 2, 3, 0)).reshape(-1, w.shape[0])


def _blockdiag_window_weights(wa, wc):
    # (out, in, k, k) x2 -> (k*k, in_a+in_c, out_a+out_c); block-diagonal per
    # window position so the stacked [actor|critic] channels stay independent.
    oa, ia, k, _ = wa.shape
    oc, ic = wc.shape[0], wc.shape[1]
    za = jnp.zeros((ia, oc), jnp.float32)
    zc = jnp.zeros((ic, oa), jnp.float32)
    blocks = []
    for i in range(k):
        for j in range(k):
            top = jnp.concatenate([jnp.transpose(wa[:, :, i, j]), za], axis=1)
            bot = jnp.concatenate([zc, jnp.transpose(wc[:, :, i, j])], axis=1)
            blocks.append(jnp.concatenate([top, bot], axis=0))
    return jnp.stack(blocks, axis=0)


def pack_params(actor, critic):
    """Fuse actor & critic into block-diagonal, lane-dense weights.

    bf16 for the bulk conv weights (w1..w4); biases & head weights stay f32.
    1/255 image normalisation folded into the conv-1 weights (bias untouched).
    """
    bf16, f32 = jnp.bfloat16, jnp.float32
    im = _CONV_CFG[-1][0]                       # per-branch image feature size (64)
    ha, hc = actor["h1w"].shape[0], critic["h1w"].shape[0]
    a_out = actor["h2w"].shape[0]               # action_size

    w1 = jnp.concatenate([_conv1_cols(actor["c1w"]),
                          _conv1_cols(critic["c1w"])], axis=1) / 255.0

    # head layer 1: block-diag over the stacked feat = [actor 64 | critic 64];
    # the torch cat([im_feature, low_dim]) becomes two dots (wh1f + wh1l).
    wh1f = jnp.zeros((2 * im, ha + hc), f32)
    wh1f = wh1f.at[:im, :ha].set(actor["h1w"][:, :im].T)
    wh1f = wh1f.at[im:, ha:].set(critic["h1w"][:, :im].T)
    wh1l = jnp.concatenate([actor["h1w"][:, im:].T,
                            critic["h1w"][:, im:].T], axis=1)
    bh1 = jnp.concatenate([actor["h1b"], critic["h1b"]])[None, :]

    # head layer 2: block-diag; output cols [0:A) = actor logits, col A = value.
    wh2 = jnp.zeros((ha + hc, a_out + 1), f32)
    wh2 = wh2.at[:ha, :a_out].set(actor["h2w"].T)
    wh2 = wh2.at[ha:, a_out:].set(critic["h2w"].T)
    bh2 = jnp.concatenate([actor["h2b"], critic["h2b"]])[None, :]

    return {
        "w1": w1.astype(bf16),
        "b1": jnp.concatenate([actor["c1b"], critic["c1b"]])[None, :],
        "w2": _blockdiag_window_weights(actor["c2w"], critic["c2w"]).astype(bf16),
        "b2": jnp.concatenate([actor["c2b"], critic["c2b"]])[None, :],
        "w3": _blockdiag_window_weights(actor["c3w"], critic["c3w"]).astype(bf16),
        "b3": jnp.concatenate([actor["c3b"], critic["c3b"]])[None, :],
        "w4": _blockdiag_window_weights(actor["c4w"], critic["c4w"]).astype(bf16),
        "b4": jnp.concatenate([actor["c4b"], critic["c4b"]])[None, :],
        "wh1f": wh1f, "wh1l": wh1l, "bh1": bh1, "wh2": wh2, "bh2": bh2,
    }


# ---------------------------------------------------------------------------
# The fused Pallas kernel.  grid = (batch_tiles, 16 conv2 window positions).
# ---------------------------------------------------------------------------
def _fused_ppo_kernel(p1_ref, low_ref,
                      w1_ref, b1_ref, w2_ref, b2_ref, w3_ref, b3_ref,
                      w4_ref, b4_ref,
                      wh1f_ref, wh1l_ref, bh1_ref, wh2_ref, bh2_ref,
                      out_ref, a2_ref):
    f32, bf16 = jnp.float32, jnp.bfloat16
    t = pl.program_id(1)
    bt = out_ref.shape[0]                          # batch tile (multiple of 8)
    n_act = wh2_ref.shape[1] - 1                   # action_size
    ow2 = math.isqrt(p1_ref.shape[2] // bt)        # conv2 output width (7)

    def dot(a, b):
        return jnp.dot(a, b, preferred_element_type=f32)

    def relu(v):
        return jnp.maximum(v, 0.0)

    # ---- conv1 + conv2 contribution of this window position (pipelined) ----
    a1 = relu(dot(p1_ref[0, 0], w1_ref[...]) + b1_ref[...])        # (49*bt, 64) f32
    contrib = dot(a1.astype(bf16), w2_ref[0])                      # (49*bt, 128) f32

    @pl.when(t == 0)
    def _():
        a2_ref[...] = contrib

    @pl.when(t > 0)
    def _():
        a2_ref[...] += contrib

    # ---- last window: finish conv2, run conv3/conv4 and both heads ----------
    @pl.when(t == pl.num_programs(1) - 1)
    def _():
        a2_ref[...] = relu(a2_ref[...] + b2_ref[...])              # conv2 activation

        # conv3: 9 kernel positions; a2 rows are (h2, w2, b)-ordered so each
        # (h3, w3) output block is a contiguous, 8-row-aligned slice of a2.
        acc3 = jnp.zeros((9 * bt, 128), f32)                       # rows (h3, w3, b)
        for i3 in range(3):
            for j3 in range(3):
                w3w = w3_ref[i3 * 3 + j3]
                blk = jnp.concatenate(
                    [a2_ref[pl.ds(((2 * h3 + i3) * ow2 + 2 * w3 + j3) * bt, bt), :]
                     for h3 in range(3) for w3 in range(3)], axis=0)
                acc3 = acc3 + dot(blk.astype(bf16), w3w)
        a3 = relu(acc3 + b3_ref[...])                              # (9*bt, 128)

        # conv4 (output spatial 1x1): 9 kernel positions, contiguous bt blocks.
        acc4 = jnp.zeros((bt, 128), f32)
        for k4 in range(9):
            acc4 = acc4 + dot(a3[k4 * bt:(k4 + 1) * bt, :].astype(bf16),
                              w4_ref[k4])
        feat = relu(acc4 + b4_ref[...])        # (bt, 128) = [actor 64 | critic 64]

        # heads: cat([im_feature, low_dim]) -> two dots; actor/critic fused via
        # block-diagonal weights: cols 0..A-1 = logits, col A = value.
        low = low_ref[...]
        h = relu(dot(feat, wh1f_ref[...]) + dot(low, wh1l_ref[...]) + bh1_ref[...])
        ho = dot(h, wh2_ref[...]) + bh2_ref[...]                   # (bt, A+1)
        logits = ho[:, :n_act]
        value = ho[:, n_act:n_act + 1]
        m = jnp.max(logits, axis=-1, keepdims=True)
        e = jnp.exp(logits - m)
        probs = e / jnp.sum(e, axis=-1, keepdims=True)             # exact softmax

        pad = jnp.zeros((bt, out_ref.shape[1] - n_act - 1), f32)
        out_ref[...] = jnp.concatenate([probs, value, pad], axis=1)


# ---------------------------------------------------------------------------
# Forward wrapper: gather-free, dedup'ed conv1 im2col + the fused pallas_call.
# ---------------------------------------------------------------------------
def image_ppo_network_forward(packed, image, low_dim, *, b_tile=8):
    f32, bf16 = jnp.float32, jnp.bfloat16
    b, c, h, w = image.shape
    _oc1, k1, s1 = _CONV_CFG[0]
    _oc2, k2, s2 = _CONV_CFG[1]
    oh1, ow1 = _conv_out(h, k1, s1), _conv_out(w, k1, s1)
    oh2, ow2 = _conv_out(oh1, k2, s2), _conv_out(ow1, k2, s2)
    oh3, ow3 = _conv_out(oh2, 3, 2), _conv_out(ow2, 3, 2)
    oh4, ow4 = _conv_out(oh3, 3, 2), _conv_out(ow3, 3, 2)
    assert oh2 == ow2 and (oh3, ow3) == (3, 3) and (oh4, ow4) == (1, 1), \
        "fused kernel assumes the 4-conv trunk reduces the image to 1x1"
    assert k1 <= s1 * s2

    n_bt = -(-b // b_tile)                          # batch tiles (cdiv)
    b_pad = n_bt * b_tile
    eff = s1 * s2                                   # image stride between conv2 cols
    hp = max(s1 * (k2 - 1) + oh2 * eff, h)
    wp = max(s1 * (k2 - 1) + ow2 * eff, w)

    img = jnp.zeros((b_pad, c, hp, wp), bf16)
    img = img.at[:b, :, :h, :w].set(image.astype(bf16))
    low_p = jnp.zeros((b_pad, low_dim.shape[1]), f32).at[:b].set(low_dim.astype(f32))

    rows_tile = oh2 * ow2 * b_tile                  # 49 * b_tile
    feats = c * k1 * k1                             # 192

    # conv1 im2col directly in the kernel's per-window, (h2, w2, b)-ordered
    # layout: 16 static slice/reshape/transpose blocks, no gather, no row dup.
    blocks = []
    for i2 in range(k2):
        for j2 in range(k2):
            sub = img[:, :, s1 * i2:s1 * i2 + oh2 * eff, s1 * j2:s1 * j2 + ow2 * eff]
            sub = sub.reshape(n_bt, b_tile, c, oh2, eff, ow2, eff)[..., :k1, :, :k1]
            sub = sub.transpose(0, 3, 5, 1, 2, 4, 6)   # (bt, h2, w2, b, c, ki, kj)
            blocks.append(sub.reshape(n_bt, rows_tile, feats))
    p1 = jnp.stack(blocks, axis=0)                  # (16, n_bt, rows_tile, 192) bf16

    n_act = packed["wh2"].shape[1] - 1
    out_lanes = 128

    def const(arr):
        shape = arr.shape
        return pl.BlockSpec(shape, lambda i, j: (0,) * len(shape))

    in_specs = [
        pl.BlockSpec((1, 1, rows_tile, feats), lambda i, j: (j, i, 0, 0)),    # p1
        pl.BlockSpec((b_tile, low_p.shape[1]), lambda i, j: (i, 0)),          # low_dim
        const(packed["w1"]), const(packed["b1"]),
        pl.BlockSpec((1,) + packed["w2"].shape[1:], lambda i, j: (j, 0, 0)),  # w2
        const(packed["b2"]),
        const(packed["w3"]), const(packed["b3"]),
        const(packed["w4"]), const(packed["b4"]),
        const(packed["wh1f"]), const(packed["wh1l"]), const(packed["bh1"]),
        const(packed["wh2"]), const(packed["bh2"]),
    ]
    grid_spec = pltpu.PrefetchScalarGridSpec(
        num_scalar_prefetch=0,
        grid=(n_bt, k2 * k2),
        in_specs=in_specs,
        out_specs=pl.BlockSpec((b_tile, out_lanes), lambda i, j: (i, 0)),
        scratch_shapes=[pltpu.VMEM((rows_tile, packed["b2"].shape[1]), f32)],
    )
    out = pl.pallas_call(
        _fused_ppo_kernel,
        out_shape=jax.ShapeDtypeStruct((b_pad, out_lanes), f32),
        grid_spec=grid_spec,
        compiler_params=pltpu.CompilerParams(
            dimension_semantics=("parallel", "arbitrary")),
    )(p1, low_p,
      packed["w1"], packed["b1"], packed["w2"], packed["b2"],
      packed["w3"], packed["b3"], packed["w4"], packed["b4"],
      packed["wh1f"], packed["wh1l"], packed["bh1"],
      packed["wh2"], packed["bh2"])

    return out[:b, :n_act], out[:b, n_act:n_act + 1]


# ---------------------------------------------------------------------------
# Plain-JAX reference of the PyTorch forward (numerical sanity check).
# ---------------------------------------------------------------------------
def reference_forward(actor, critic, image, low_dim):
    image = image.astype(jnp.float32) / 255.0
    low_dim = low_dim.astype(jnp.float32)

    def trunk(p):
        x = image
        for li, (_cout, _k, s) in enumerate(_CONV_CFG):
            wt, bb = p[f"c{li + 1}w"], p[f"c{li + 1}b"]
            x = jax.lax.conv_general_dilated(
                x, wt, window_strides=(s, s), padding="VALID",
                dimension_numbers=("NCHW", "OIHW", "NCHW"),
                precision=jax.lax.Precision.HIGHEST)
            x = jnp.maximum(x + bb[None, :, None, None], 0.0)
        return x.reshape(x.shape[0], -1)

    def head(p, feat):
        z = jnp.concatenate([feat, low_dim], axis=-1)
        hdd = jnp.maximum(z @ p["h1w"].T + p["h1b"], 0.0)
        return hdd @ p["h2w"].T + p["h2b"]

    probs = jax.nn.softmax(head(actor, trunk(actor)), axis=1)
    value = head(critic, trunk(critic))
    return probs, value


# ---------------------------------------------------------------------------
# main
# ---------------------------------------------------------------------------
if __name__ == "__main__":
    B = 2
    n_in_channels = 3
    image_dim = (116, 116)     # smallest spatial size the 4-conv stack accepts (1x1 output)
    state_size = 8
    action_size = 4
    hidden_units = 64

    root = jax.random.PRNGKey(0)
    k_img, k_low, k_actor, k_critic = jax.random.split(root, 4)
    image = jax.random.uniform(k_img, (B, n_in_channels) + image_dim,
                               jnp.float32, 0.0, 255.0)
    low_dim = jax.random.normal(k_low, (B, state_size), jnp.float32)

    actor = init_branch_params(k_actor, n_in_channels, state_size,
                               hidden_units, action_size)
    critic = init_branch_params(k_critic, n_in_channels, state_size,
                                hidden_units, 1)
    packed = pack_params(actor, critic)

    fwd = jax.jit(image_ppo_network_forward)
    action_probs, value = fwd(packed, image, low_dim)
    action_probs = jax.block_until_ready(action_probs)
    value = jax.block_until_ready(value)

    assert action_probs.shape == (B, action_size)
    assert value.shape == (B, 1)
    assert bool(jnp.all(jnp.abs(jnp.sum(action_probs, axis=-1) - 1.0) < 1e-3))

    # Numerical sanity check against the plain-JAX reference of the torch module.
    ref_probs, ref_value = reference_forward(actor, critic, image, low_dim)
    assert bool(jnp.max(jnp.abs(action_probs - ref_probs)) < 5e-2), \
        float(jnp.max(jnp.abs(action_probs - ref_probs)))
    assert bool(jnp.max(jnp.abs(value - ref_value)) < 5e-2), \
        float(jnp.max(jnp.abs(value - ref_value)))

    print("KERNEL_OK")
</pallas_src>

<mosaic_0001>
module attributes {stable_mosaic.version = 11 : i64} {
  func.func @_fused_ppo_kernel(%arg0: i32, %arg1: i32, %arg2: memref<1x1x392x192xbf16, #tpu.memory_space<vmem>>, %arg3: memref<8x8xf32, #tpu.memory_space<vmem>>, %arg4: memref<192x64xbf16, #tpu.memory_space<vmem>>, %arg5: memref<1x64xf32, #tpu.memory_space<vmem>>, %arg6: memref<1x64x128xbf16, #tpu.memory_space<vmem>>, %arg7: memref<1x128xf32, #tpu.memory_space<vmem>>, %arg8: memref<9x128x128xbf16, #tpu.memory_space<vmem>>, %arg9: memref<1x128xf32, #tpu.memory_space<vmem>>, %arg10: memref<9x128x128xbf16, #tpu.memory_space<vmem>>, %arg11: memref<1x128xf32, #tpu.memory_space<vmem>>, %arg12: memref<128x128xf32, #tpu.memory_space<vmem>>, %arg13: memref<8x128xf32, #tpu.memory_space<vmem>>, %arg14: memref<1x128xf32, #tpu.memory_space<vmem>>, %arg15: memref<128x5xf32, #tpu.memory_space<vmem>>, %arg16: memref<1x5xf32, #tpu.memory_space<vmem>>, %arg17: memref<8x128xf32, #tpu.memory_space<vmem>>, %arg18: memref<392x128xf32, #tpu.memory_space<vmem>>) attributes {dimension_semantics = [#tpu.dimension_semantics<parallel>, #tpu.dimension_semantics<arbitrary>], iteration_bounds = array<i64: 1, 16>, scalar_prefetch = 0 : i64, scratch_operands = 1 : i64, tpu.core_type = #tpu.core_type<tc>, window_params = [{transform_indices = @transform_0, window_bounds = array<i64: 1, 1, 392, 192>}, {transform_indices = @transform_1, window_bounds = array<i64: 8, 8>}, {pipeline_mode = #tpu.pipeline_mode<synchronous>, transform_indices = @transform_2, window_bounds = array<i64: 192, 64>}, {pipeline_mode = #tpu.pipeline_mode<synchronous>, transform_indices = @transform_3, window_bounds = array<i64: 1, 64>}, {transform_indices = @transform_4, window_bounds = array<i64: 1, 64, 128>}, {pipeline_mode = #tpu.pipeline_mode<synchronous>, transform_indices = @transform_5, window_bounds = array<i64: 1, 128>}, {pipeline_mode = #tpu.pipeline_mode<synchronous>, transform_indices = @transform_6, window_bounds = array<i64: 9, 128, 128>}, {pipeline_mode = #tpu.pipeline_mode<synchronous>, transform_indices = @transform_7, window_bounds = array<i64: 1, 128>}, {pipeline_mode = #tpu.pipeline_mode<synchronous>, transform_indices = @transform_8, window_bounds = array<i64: 9, 128, 128>}, {pipeline_mode = #tpu.pipeline_mode<synchronous>, transform_indices = @transform_9, window_bounds = array<i64: 1, 128>}, {pipeline_mode = #tpu.pipeline_mode<synchronous>, transform_indices = @transform_10, window_bounds = array<i64: 128, 128>}, {pipeline_mode = #tpu.pipeline_mode<synchronous>, transform_indices = @transform_11, window_bounds = array<i64: 8, 128>}, {pipeline_mode = #tpu.pipeline_mode<synchronous>, transform_indices = @transform_12, window_bounds = array<i64: 1, 128>}, {pipeline_mode = #tpu.pipeline_mode<synchronous>, transform_indices = @transform_13, window_bounds = array<i64: 128, 5>}, {pipeline_mode = #tpu.pipeline_mode<synchronous>, transform_indices = @transform_14, window_bounds = array<i64: 1, 5>}, {transform_indices = @transform_15, window_bounds = array<i64: 8, 128>}]} {
    %c0 = arith.constant 0 : index
    %c0_0 = arith.constant 0 : index
    %c0_1 = arith.constant 0 : index
    %c0_2 = arith.constant 0 : index
    %0 = vector.load %arg2[%c0, %c0_0, %c0_1, %c0_2] : memref<1x1x392x192xbf16, #tpu.memory_space<vmem>>, vector<1x1x392x192xbf16>
    %1 = vector.shape_cast %0 : vector<1x1x392x192xbf16> to vector<392x192xbf16>
    %c0_3 = arith.constant 0 : index
    %c0_4 = arith.constant 0 : index
    %2 = vector.load %arg4[%c0_3, %c0_4] : memref<192x64xbf16, #tpu.memory_space<vmem>>, vector<192x64xbf16>
    %cst = arith.constant dense<0.000000e+00> : vector<392x64xf32>
    %3 = tpu.matmul %1, %2, %cst {dimension_numbers = #tpu.dot_dimension_numbers<[1], [0], [0], [1], [0, 0, 1, 1], [], []>} : vector<392x192xbf16>, vector<192x64xbf16>, vector<392x64xf32> -> vector<392x64xf32>
    %c0_5 = arith.constant 0 : index
    %c0_6 = arith.constant 0 : index
    %4 = vector.load %arg5[%c0_5, %c0_6] : memref<1x64xf32, #tpu.memory_space<vmem>>, vector<1x64xf32>
    %5 = vector.broadcast %4 : vector<1x64xf32> to vector<392x64xf32>
    %6 = arith.addf %3, %5 : vector<392x64xf32>
    %cst_7 = arith.constant 0.000000e+00 : f32
    %7 = vector.broadcast %cst_7 : f32 to vector<392x64xf32>
    %8 = arith.maximumf %6, %7 : vector<392x64xf32>
    %9 = arith.truncf %8 : vector<392x64xf32> to vector<392x64xbf16>
    %c0_8 = arith.constant 0 : index
    %c0_9 = arith.constant 0 : index
    %c0_10 = arith.constant 0 : index
    %10 = vector.load %arg6[%c0_8, %c0_9, %c0_10] : memref<1x64x128xbf16, #tpu.memory_space<vmem>>, vector<1x64x128xbf16>
    %11 = vector.shape_cast %10 : vector<1x64x128xbf16> to vector<64x128xbf16>
    %cst_11 = arith.constant dense<0.000000e+00> : vector<392x128xf32>
    %12 = tpu.matmul %9, %11, %cst_11 {dimension_numbers = #tpu.dot_dimension_numbers<[1], [0], [0], [1], [0, 0, 1, 1], [], []>} : vector<392x64xbf16>, vector<64x128xbf16>, vector<392x128xf32> -> vector<392x128xf32>
    %c0_i32 = arith.constant 0 : i32
    %13 = arith.cmpi eq, %arg1, %c0_i32 : i32
    %14 = arith.extui %13 : i1 to i32
    %c0_i32_12 = arith.constant 0 : i32
    %15 = arith.cmpi ne, %14, %c0_i32_12 : i32
    scf.if %15 {
      %c0_16 = arith.constant 0 : index
      %c0_17 = arith.constant 0 : index
      %22 = vector.load %arg18[%c0_16, %c0_17] : memref<392x128xf32, #tpu.memory_space<vmem>>, vector<392x128xf32>
      tpu.vector_store %arg18[%c0_16, %c0_17], %12 {strides = array<i32>} : memref<392x128xf32, #tpu.memory_space<vmem>>, vector<392x128xf32>,
    } else {
    }
    %c0_i32_13 = arith.constant 0 : i32
    %16 = arith.cmpi sgt, %arg1, %c0_i32_13 : i32
    %17 = arith.extui %16 : i1 to i32
    %c0_i32_14 = arith.constant 0 : i32
    %18 = arith.cmpi ne, %17, %c0_i32_14 : i32
    scf.if %18 {
      %c0_16 = arith.constant 0 : index
      %c0_17 = arith.constant 0 : index
      %22 = vector.load %arg18[%c0_16, %c0_17] : memref<392x128xf32, #tpu.memory_space<vmem>>, vector<392x128xf32>
      %23 = arith.addf %22, %12 : vector<392x128xf32>
      %c0_18 = arith.constant 0 : index
      %c0_19 = arith.constant 0 : index
      %24 = vector.load %arg18[%c0_18, %c0_19] : memref<392x128xf32, #tpu.memory_space<vmem>>, vector<392x128xf32>
      tpu.vector_store %arg18[%c0_18, %c0_19], %23 {strides = array<i32>} : memref<392x128xf32, #tpu.memory_space<vmem>>, vector<392x128xf32>,
    } else {
    }
    %c15_i32 = arith.constant 15 : i32
    %19 = arith.cmpi eq, %arg1, %c15_i32 : i32
    %20 = arith.extui %19 : i1 to i32
    %c0_i32_15 = arith.constant 0 : i32
    %21 = arith.cmpi ne, %20, %c0_i32_15 : i32
    scf.if %21 {
      %c0_16 = arith.constant 0 : index
      %c0_17 = arith.constant 0 : index
      %22 = vector.load %arg18[%c0_16, %c0_17] : memref<392x128xf32, #tpu.memory_space<vmem>>, vector<392x128xf32>
      %c0_18 = arith.constant 0 : index
      %c0_19 = arith.constant 0 : index
      %23 = vector.load %arg7[%c0_18, %c0_19] : memref<1x128xf32, #tpu.memory_space<vmem>>, vector<1x128xf32>
      %24 = vector.broadcast %23 : vector<1x128xf32> to vector<392x128xf32>
      %25 = arith.addf %22, %24 : vector<392x128xf32>
      %cst_20 = arith.constant 0.000000e+00 : f32
      %26 = vector.broadcast %cst_20 : f32 to vector<392x128xf32>
      %27 = arith.maximumf %25, %26 : vector<392x128xf32>
      %c0_21 = arith.constant 0 : index
      %c0_22 = arith.constant 0 : index
      %28 = vector.load %arg18[%c0_21, %c0_22] : memref<392x128xf32, #tpu.memory_space<vmem>>, vector<392x128xf32>
      tpu.vector_store %arg18[%c0_21, %c0_22], %27 {strides = array<i32>} : memref<392x128xf32, #tpu.memory_space<vmem>>, vector<392x128xf32>,
      %cst_23 = arith.constant 0.000000e+00 : f32
      %29 = vector.broadcast %cst_23 : f32 to vector<72x128xf32>
      %c0_24 = arith.constant 0 : index
      %c0_25 = arith.constant 0 : index
      %c0_26 = arith.constant 0 : index
      %30 = vector.load %arg8[%c0_24, %c0_25, %c0_26] : memref<9x128x128xbf16, #tpu.memory_space<vmem>>, vector<1x128x128xbf16>
      %31 = vector.shape_cast %30 : vector<1x128x128xbf16> to vector<128x128xbf16>
      %c0_27 = arith.constant 0 : index
      %c0_28 = arith.constant 0 : index
      %32 = vector.load %arg18[%c0_27, %c0_28] : memref<392x128xf32, #tpu.memory_space<vmem>>, vector<8x128xf32>
      %c16 = arith.constant 16 : index
      %c0_29 = arith.constant 0 : index
      %33 = vector.load %arg18[%c16, %c0_29] : memref<392x128xf32, #tpu.memory_space<vmem>>, vector<8x128xf32>
      %c32 = arith.constant 32 : index
      %c0_30 = arith.constant 0 : index
      %34 = vector.load %arg18[%c32, %c0_30] : memref<392x128xf32, #tpu.memory_space<vmem>>, vector<8x128xf32>
      %c112 = arith.constant 112 : index
      %c0_31 = arith.constant 0 : index
      %35 = vector.load %arg18[%c112, %c0_31] : memref<392x128xf32, #tpu.memory_space<vmem>>, vector<8x128xf32>
      %c128 = arith.constant 128 : index
      %c0_32 = arith.constant 0 : index
      %36 = vector.load %arg18[%c128, %c0_32] : memref<392x128xf32, #tpu.memory_space<vmem>>, vector<8x128xf32>
      %c144 = arith.constant 144 : index
      %c0_33 = arith.constant 0 : index
      %37 = vector.load %arg18[%c144, %c0_33] : memref<392x128xf32, #tpu.memory_space<vmem>>, vector<8x128xf32>
      %c224 = arith.constant 224 : index
      %c0_34 = arith.constant 0 : index
      %38 = vector.load %arg18[%c224, %c0_34] : memref<392x128xf32, #tpu.memory_space<vmem>>, vector<8x128xf32>
      %c240 = arith.constant 240 : index
      %c0_35 = arith.constant 0 : index
      %39 = vector.load %arg18[%c240, %c0_35] : memref<392x128xf32, #tpu.memory_space<vmem>>, vector<8x128xf32>
      %c256 = arith.constant 256 : index
      %c0_36 = arith.constant 0 : index
      %40 = vector.load %arg18[%c256, %c0_36] : memref<392x128xf32, #tpu.memory_space<vmem>>, vector<8x128xf32>
      %41 = tpu.concatenate %32, %33, %34, %35, %36, %37, %38, %39, %40 in 0 : vector<8x128xf32>, vector<8x128xf32>, vector<8x128xf32>, vector<8x128xf32>, vector<8x128xf32>, vector<8x128xf32>, vector<8x128xf32>, vector<8x128xf32>, vector<8x128xf32> -> vector<72x128xf32>
      %42 = arith.truncf %41 : vector<72x128xf32> to vector<72x128xbf16>
      %cst_37 = arith.constant dense<0.000000e+00> : vector<72x128xf32>
      %43 = tpu.matmul %42, %31, %cst_37 {dimension_numbers = #tpu.dot_dimension_numbers<[1], [0], [0], [1], [0, 0, 1, 1], [], []>} : vector<72x128xbf16>, vector<128x128xbf16>, vector<72x128xf32> -> vector<72x128xf32>
      %44 = arith.addf %29, %43 : vector<72x128xf32>
      %c1 = arith.constant 1 : index
      %c0_38 = arith.constant 0 : index
      %c0_39 = arith.constant 0 : index
      %45 = vector.load %arg8[%c1, %c0_38, %c0_39] : memref<9x128x128xbf16, #tpu.memory_space<vmem>>, vector<1x128x128xbf16>
      %46 = vector.shape_cast %45 : vector<1x128x128xbf16> to vector<128x128xbf16>
      %c8 = arith.constant 8 : index
      %c0_40 = arith.constant 0 : index
      %47 = vector.load %arg18[%c8, %c0_40] : memref<392x128xf32, #tpu.memory_space<vmem>>, vector<8x128xf32>
      %c24 = arith.constant 24 : index
      %c0_41 = arith.constant 0 : index
      %48 = vector.load %arg18[%c24, %c0_41] : memref<392x128xf32, #tpu.memory_space<vmem>>, vector<8x128xf32>
      %c40 = arith.constant 40 : index
      %c0_42 = arith.constant 0 : index
      %49 = vector.load %arg18[%c40, %c0_42] : memref<392x128xf32, #tpu.memory_space<vmem>>, vector<8x128xf32>
      %c120 = arith.constant 120 : index
      %c0_43 = arith.constant 0 : index
      %50 = vector.load %arg18[%c120, %c0_43] : memref<392x128xf32, #tpu.memory_space<vmem>>, vector<8x128xf32>
      %c136 = arith.constant 136 : index
      %c0_44 = arith.constant 0 : index
      %51 = vector.load %arg18[%c136, %c0_44] : memref<392x128xf32, #tpu.memory_space<vmem>>, vector<8x128xf32>
      %c152 = arith.constant 152 : index
      %c0_45 = arith.constant 0 : index
      %52 = vector.load %arg18[%c152, %c0_45] : memref<392x128xf32, #tpu.memory_space<vmem>>, vector<8x128xf32>
      %c232 = arith.constant 232 : index
      %c0_46 = arith.constant 0 : index
      %53 = vector.load %arg18[%c232, %c0_46] : memref<392x128xf32, #tpu.memory_space<vmem>>, vector<8x128xf32>
      %c248 = arith.constant 248 : index
      %c0_47 = arith.constant 0 : index
      %54 = vector.load %arg18[%c248, %c0_47] : memref<392x128xf32, #tpu.memory_space<vmem>>, vector<8x128xf32>
      %c264 = arith.constant 264 : index
      %c0_48 = arith.constant 0 : index
      %55 = vector.load %arg18[%c264, %c0_48] : memref<392x128xf32, #tpu.memory_space<vmem>>, vector<8x128xf32>
      %56 = tpu.concatenate %47, %48, %49, %50, %51, %52, %53, %54, %55 in 0 : vector<8x128xf32>, vector<8x128xf32>, vector<8x128xf32>, vector<8x128xf32>, vector<8x128xf32>, vector<8x128xf32>, vector<8x128xf32>, vector<8x128xf32>, vector<8x128xf32> -> vector<72x128xf32>
      %57 = arith.truncf %56 : vector<72x128xf32> to vector<72x128xbf16>
      %cst_49 = arith.constant dense<0.000000e+00> : vector<72x128xf32>
      %58 = tpu.matmul %57, %46, %cst_49 {dimension_numbers = #tpu.dot_dimension_numbers<[1], [0], [0], [1], [0, 0, 1, 1], [], []>} : vector<72x128xbf16>, vector<128x128xbf16>, vector<72x128xf32> -> vector<72x128xf32>
      %59 = arith.addf %44, %58 : vector<72x128xf32>
      %c2 = arith.constant 2 : index
      %c0_50 = arith.constant 0 : index
      %c0_51 = arith.constant 0 : index
      %60 = vector.load %arg8[%c2, %c0_50, %c0_51] : memref<9x128x128xbf16, #tpu.memory_space<vmem>>, vector<1x128x128xbf16>
      %61 = vector.shape_cast %60 : vector<1x128x128xbf16> to vector<128x128xbf16>
      %c16_52 = arith.constant 16 : index
      %c0_53 = arith.constant 0 : index
      %62 = vector.load %arg18[%c16_52, %c0_53] : memref<392x128xf32, #tpu.memory_space<vmem>>, vector<8x128xf32>
      %c32_54 = arith.constant 32 : index
      %c0_55 = arith.constant 0 : index
      %63 = vector.load %arg18[%c32_54, %c0_55] : memref<392x128xf32, #tpu.memory_space<vmem>>, vector<8x128xf32>
      %c48 = arith.constant 48 : index
      %c0_56 = arith.constant 0 : index
      %64 = vector.load %arg18[%c48, %c0_56] : memref<392x128xf32, #tpu.memory_space<vmem>>, vector<8x128xf32>
      %c128_57 = arith.constant 128 : index
      %c0_58 = arith.constant 0 : index
      %65 = vector.load %arg18[%c128_57, %c0_58] : memref<392x128xf32, #tpu.memory_space<vmem>>, vector<8x128xf32>
      %c144_59 = arith.constant 144 : index
      %c0_60 = arith.constant 0 : index
      %66 = vector.load %arg18[%c144_59, %c0_60] : memref<392x128xf32, #tpu.memory_space<vmem>>, vector<8x128xf32>
      %c160 = arith.constant 160 : index
      %c0_61 = arith.constant 0 : index
      %67 = vector.load %arg18[%c160, %c0_61] : memref<392x128xf32, #tpu.memory_space<vmem>>, vector<8x128xf32>
      %c240_62 = arith.constant 240 : index
      %c0_63 = arith.constant 0 : index
      %68 = vector.load %arg18[%c240_62, %c0_63] : memref<392x128xf32, #tpu.memory_space<vmem>>, vector<8x128xf32>
      %c256_64 = arith.constant 256 : index
      %c0_65 = arith.constant 0 : index
      %69 = vector.load %arg18[%c256_64, %c0_65] : memref<392x128xf32, #tpu.memory_space<vmem>>, vector<8x128xf32>
      %c272 = arith.constant 272 : index
      %c0_66 = arith.constant 0 : index
      %70 = vector.load %arg18[%c272, %c0_66] : memref<392x128xf32, #tpu.memory_space<vmem>>, vector<8x128xf32>
      %71 = tpu.concatenate %62, %63, %64, %65, %66, %67, %68, %69, %70 in 0 : vector<8x128xf32>, vector<8x128xf32>, vector<8x128xf32>, vector<8x128xf32>, vector<8x128xf32>, vector<8x128xf32>, vector<8x128xf32>, vector<8x128xf32>, vector<8x128xf32> -> vector<72x128xf32>
      %72 = arith.truncf %71 : vector<72x128xf32> to vector<72x128xbf16>
      %cst_67 = arith.constant dense<0.000000e+00> : vector<72x128xf32>
      %73 = tpu.matmul %72, %61, %cst_67 {dimension_numbers = #tpu.dot_dimension_numbers<[1], [0], [0], [1], [0, 0, 1, 1], [], []>} : vector<72x128xbf16>, vector<128x128xbf16>, vector<72x128xf32> -> vector<72x128xf32>
      %74 = arith.addf %59, %73 : vector<72x128xf32>
      %c3 = arith.constant 3 : index
      %c0_68 = arith.constant 0 : index
      %c0_69 = arith.constant 0 : index
      %75 = vector.load %arg8[%c3, %c0_68, %c0_69] : memref<9x128x128xbf16, #tpu.memory_space<vmem>>, vector<1x128x128xbf16>
      %76 = vector.shape_cast %75 : vector<1x128x128xbf16> to vector<128x128xbf16>
      %c56 = arith.constant 56 : index
      %c0_70 = arith.constant 0 : index
      %77 = vector.load %arg18[%c56, %c0_70] : memref<392x128xf32, #tpu.memory_space<vmem>>, vector<8x128xf32>
      %c72 = arith.constant 72 : index
      %c0_71 = arith.constant 0 : index
      %78 = vector.load %arg18[%c72, %c0_71] : memref<392x128xf32, #tpu.memory_space<vmem>>, vector<8x128xf32>
      %c88 = arith.constant 88 : index
      %c0_72 = arith.constant 0 : index
      %79 = vector.load %arg18[%c88, %c0_72] : memref<392x128xf32, #tpu.memory_space<vmem>>, vector<8x128xf32>
      %c168 = arith.constant 168 : index
      %c0_73 = arith.constant 0 : index
      %80 = vector.load %arg18[%c168, %c0_73] : memref<392x128xf32, #tpu.memory_space<vmem>>, vector<8x128xf32>
      %c184 = arith.constant 184 : index
      %c0_74 = arith.constant 0 : index
      %81 = vector.load %arg18[%c184, %c0_74] : memref<392x128xf32, #tpu.memory_space<vmem>>, vector<8x128xf32>
      %c200 = arith.constant 200 : index
      %c0_75 = arith.constant 0 : index
      %82 = vector.load %arg18[%c200, %c0_75] : memref<392x128xf32, #tpu.memory_space<vmem>>, vector<8x128xf32>
      %c280 = arith.constant 280 : index
      %c0_76 = arith.constant 0 : index
      %83 = vector.load %arg18[%c280, %c0_76] : memref<392x128xf32, #tpu.memory_space<vmem>>, vector<8x128xf32>
      %c296 = arith.constant 296 : index
      %c0_77 = arith.constant 0 : index
      %84 = vector.load %arg18[%c296, %c0_77] : memref<392x128xf32, #tpu.memory_space<vmem>>, vector<8x128xf32>
      %c312 = arith.constant 312 : index
      %c0_78 = arith.constant 0 : index
      %85 = vector.load %arg18[%c312, %c0_78] : memref<392x128xf32, #tpu.memory_space<vmem>>, vector<8x128xf32>
      %86 = tpu.concatenate %77, %78, %79, %80, %81, %82, %83, %84, %85 in 0 : vector<8x128xf32>, vector<8x128xf32>, vector<8x128xf32>, vector<8x128xf32>, vector<8x128xf32>, vector<8x128xf32>, vector<8x128xf32>, vector<8x128xf32>, vector<8x128xf32> -> vector<72x128xf32>
      %87 = arith.truncf %86 : vector<72x128xf32> to vector<72x128xbf16>
      %cst_79 = arith.constant dense<0.000000e+00> : vector<72x128xf32>
      %88 = tpu.matmul %87, %76, %cst_79 {dimension_numbers = #tpu.dot_dimension_numbers<[1], [0], [0], [1], [0, 0, 1, 1], [], []>} : vector<72x128xbf16>, vector<128x128xbf16>, vector<72x128xf32> -> vector<72x128xf32>
      %89 = arith.addf %74, %88 : vector<72x128xf32>
      %c4 = arith.constant 4 : index
      %c0_80 = arith.constant 0 : index
      %c0_81 = arith.constant 0 : index
      %90 = vector.load %arg8[%c4, %c0_80, %c0_81] : memref<9x128x128xbf16, #tpu.memory_space<vmem>>, vector<1x128x128xbf16>
      %91 = vector.shape_cast %90 : vector<1x128x128xbf16> to vector<128x128xbf16>
      %c64 = arith.constant 64 : index
      %c0_82 = arith.constant 0 : index
      %92 = vector.load %arg18[%c64, %c0_82] : memref<392x128xf32, #tpu.memory_space<vmem>>, vector<8x128xf32>
      %c80 = arith.constant 80 : index
      %c0_83 = arith.constant 0 : index
      %93 = vector.load %arg18[%c80, %c0_83] : memref<392x128xf32, #tpu.memory_space<vmem>>, vector<8x128xf32>
      %c96 = arith.constant 96 : index
      %c0_84 = arith.constant 0 : index
      %94 = vector.load %arg18[%c96, %c0_84] : memref<392x128xf32, #tpu.memory_space<vmem>>, vector<8x128xf32>
      %c176 = arith.constant 176 : index
      %c0_85 = arith.constant 0 : index
      %95 = vector.load %arg18[%c176, %c0_85] : memref<392x128xf32, #tpu.memory_space<vmem>>, vector<8x128xf32>
      %c192 = arith.constant 192 : index
      %c0_86 = arith.constant 0 : index
      %96 = vector.load %arg18[%c192, %c0_86] : memref<392x128xf32, #tpu.memory_space<vmem>>, vector<8x128xf32>
      %c208 = arith.constant 208 : index
      %c0_87 = arith.constant 0 : index
      %97 = vector.load %arg18[%c208, %c0_87] : memref<392x128xf32, #tpu.memory_space<vmem>>, vector<8x128xf32>
      %c288 = arith.constant 288 : index
      %c0_88 = arith.constant 0 : index
      %98 = vector.load %arg18[%c288, %c0_88] : memref<392x128xf32, #tpu.memory_space<vmem>>, vector<8x128xf32>
      %c304 = arith.constant 304 : index
      %c0_89 = arith.constant 0 : index
      %99 = vector.load %arg18[%c304, %c0_89] : memref<392x128xf32, #tpu.memory_space<vmem>>, vector<8x128xf32>
      %c320 = arith.constant 320 : index
      %c0_90 = arith.constant 0 : index
      %100 = vector.load %arg18[%c320, %c0_90] : memref<392x128xf32, #tpu.memory_space<vmem>>, vector<8x128xf32>
      %101 = tpu.concatenate %92, %93, %94, %95, %96, %97, %98, %99, %100 in 0 : vector<8x128xf32>, vector<8x128xf32>, vector<8x128xf32>, vector<8x128xf32>, vector<8x128xf32>, vector<8x128xf32>, vector<8x128xf32>, vector<8x128xf32>, vector<8x128xf32> -> vector<72x128xf32>
      %102 = arith.truncf %101 : vector<72x128xf32> to vector<72x128xbf16>
      %cst_91 = arith.constant dense<0.000000e+00> : vector<72x128xf32>
      %103 = tpu.matmul %102, %91, %cst_91 {dimension_numbers = #tpu.dot_dimension_numbers<[1], [0], [0], [1], [0, 0, 1, 1], [], []>} : vector<72x128xbf16>, vector<128x128xbf16>, vector<72x128xf32> -> vector<72x128xf32>
      %104 = arith.addf %89, %103 : vector<72x128xf32>
      %c5 = arith.constant 5 : index
      %c0_92 = arith.constant 0 : index
      %c0_93 = arith.constant 0 : index
      %105 = vector.load %arg8[%c5, %c0_92, %c0_93] : memref<9x128x128xbf16, #tpu.memory_space<vmem>>, vector<1x128x128xbf16>
      %106 = vector.shape_cast %105 : vector<1x128x128xbf16> to vector<128x128xbf16>
      %c72_94 = arith.constant 72 : index
      %c0_95 = arith.constant 0 : index
      %107 = vector.load %arg18[%c72_94, %c0_95] : memref<392x128xf32, #tpu.memory_space<vmem>>, vector<8x128xf32>
      %c88_96 = arith.constant 88 : index
      %c0_97 = arith.constant 0 : index
      %108 = vector.load %arg18[%c88_96, %c0_97] : memref<392x128xf32, #tpu.memory_space<vmem>>, vector<8x128xf32>
      %c104 = arith.constant 104 : index
      %c0_98 = arith.constant 0 : index
      %109 = vector.load %arg18[%c104, %c0_98] : memref<392x128xf32, #tpu.memory_space<vmem>>, vector<8x128xf32>
      %c184_99 = arith.constant 184 : index
      %c0_100 = arith.constant 0 : index
      %110 = vector.load %arg18[%c184_99, %c0_100] : memref<392x128xf32, #tpu.memory_space<vmem>>, vector<8x128xf32>
      %c200_101 = arith.constant 200 : index
      %c0_102 = arith.constant 0 : index
      %111 = vector.load %arg18[%c200_101, %c0_102] : memref<392x128xf32, #tpu.memory_space<vmem>>, vector<8x128xf32>
      %c216 = arith.constant 216 : index
      %c0_103 = arith.constant 0 : index
      %112 = vector.load %arg18[%c216, %c0_103] : memref<392x128xf32, #tpu.memory_space<vmem>>, vector<8x128xf32>
      %c296_104 = arith.constant 296 : index
      %c0_105 = arith.constant 0 : index
      %113 = vector.load %arg18[%c296_104, %c0_105] : memref<392x128xf32, #tpu.memory_space<vmem>>, vector<8x128xf32>
      %c312_106 = arith.constant 312 : index
      %c0_107 = arith.constant 0 : index
      %114 = vector.load %arg18[%c312_106, %c0_107] : memref<392x128xf32, #tpu.memory_space<vmem>>, vector<8x128xf32>
      %c328 = arith.constant 328 : index
      %c0_108 = arith.constant 0 : index
      %115 = vector.load %arg18[%c328, %c0_108] : memref<392x128xf32, #tpu.memory_space<vmem>>, vector<8x128xf32>
      %116 = tpu.concatenate %107, %108, %109, %110, %111, %112, %113, %114, %115 in 0 : vector<8x128xf32>, vector<8x128xf32>, vector<8x128xf32>, vector<8x128xf32>, vector<8x128xf32>, vector<8x128xf32>, vector<8x128xf32>, vector<8x128xf32>, vector<8x128xf32> -> vector<72x128xf32>
      %117 = arith.truncf %116 : vector<72x128xf32> to vector<72x128xbf16>
      %cst_109 = arith.constant dense<0.000000e+00> : vector<72x128xf32>
      %118 = tpu.matmul %117, %106, %cst_109 {dimension_numbers = #tpu.dot_dimension_numbers<[1], [0], [0], [1], [0, 0, 1, 1], [], []>} : vector<72x128xbf16>, vector<128x128xbf16>, vector<72x128xf32> -> vector<72x128xf32>
      %119 = arith.addf %104, %118 : vector<72x128xf32>
      %c6 = arith.constant 6 : index
      %c0_110 = arith.constant 0 : index
      %c0_111 = arith.constant 0 : index
      %120 = vector.load %arg8[%c6, %c0_110, %c0_111] : memref<9x128x128xbf16, #tpu.memory_space<vmem>>, vector<1x128x128xbf16>
      %121 = vector.shape_cast %120 : vector<1x128x128xbf16> to vector<128x128xbf16>
      %c112_112 = arith.constant 112 : index
      %c0_113 = arith.constant 0 : index
      %122 = vector.load %arg18[%c112_112, %c0_113] : memref<392x128xf32, #tpu.memory_space<vmem>>, vector<8x128xf32>
      %c128_114 = arith.constant 128 : index
      %c0_115 = arith.constant 0 : index
      %123 = vector.load %arg18[%c128_114, %c0_115] : memref<392x128xf32, #tpu.memory_space<vmem>>, vector<8x128xf32>
      %c144_116 = arith.constant 144 : index
      %c0_117 = arith.constant 0 : index
      %124 = vector.load %arg18[%c144_116, %c0_117] : memref<392x128xf32, #tpu.memory_space<vmem>>, vector<8x128xf32>
      %c224_118 = arith.constant 224 : index
      %c0_119 = arith.constant 0 : index
      %125 = vector.load %arg18[%c224_118, %c0_119] : memref<392x128xf32, #tpu.memory_space<vmem>>, vector<8x128xf32>
      %c240_120 = arith.constant 240 : index
      %c0_121 = arith.constant 0 : index
      %126 = vector.load %arg18[%c240_120, %c0_121] : memref<392x128xf32, #tpu.memory_space<vmem>>, vector<8x128xf32>
      %c256_122 = arith.constant 256 : index
      %c0_123 = arith.constant 0 : index
      %127 = vector.load %arg18[%c256_122, %c0_123] : memref<392x128xf32, #tpu.memory_space<vmem>>, vector<8x128xf32>
      %c336 = arith.constant 336 : index
      %c0_124 = arith.constant 0 : index
      %128 = vector.load %arg18[%c336, %c0_124] : memref<392x128xf32, #tpu.memory_space<vmem>>, vector<8x128xf32>
      %c352 = arith.constant 352 : index
      %c0_125 = arith.constant 0 : index
      %129 = vector.load %arg18[%c352, %c0_125] : memref<392x128xf32, #tpu.memory_space<vmem>>, vector<8x128xf32>
      %c368 = arith.constant 368 : index
      %c0_126 = arith.constant 0 : index
      %130 = vector.load %arg18[%c368, %c0_126] : memref<392x128xf32, #tpu.memory_space<vmem>>, vector<8x128xf32>
      %131 = tpu.concatenate %122, %123, %124, %125, %126, %127, %128, %129, %130 in 0 : vector<8x128xf32>, vector<8x128xf32>, vector<8x128xf32>, vector<8x128xf32>, vector<8x128xf32>, vector<8x128xf32>, vector<8x128xf32>, vector<8x128xf32>, vector<8x128xf32> -> vector<72x128xf32>
      %132 = arith.truncf %131 : vector<72x128xf32> to vector<72x128xbf16>
      %cst_127 = arith.constant dense<0.000000e+00> : vector<72x128xf32>
      %133 = tpu.matmul %132, %121, %cst_127 {dimension_numbers = #tpu.dot_dimension_numbers<[1], [0], [0], [1], [0, 0, 1, 1], [], []>} : vector<72x128xbf16>, vector<128x128xbf16>, vector<72x128xf32> -> vector<72x128xf32>
      %134 = arith.addf %119, %133 : vector<72x128xf32>
      %c7 = arith.constant 7 : index
      %c0_128 = arith.constant 0 : index
      %c0_129 = arith.constant 0 : index
      %135 = vector.load %arg8[%c7, %c0_128, %c0_129] : memref<9x128x128xbf16, #tpu.memory_space<vmem>>, vector<1x128x128xbf16>
      %136 = vector.shape_cast %135 : vector<1x128x128xbf16> to vector<128x128xbf16>
      %c120_130 = arith.constant 120 : index
      %c0_131 = arith.constant 0 : index
      %137 = vector.load %arg18[%c120_130, %c0_131] : memref<392x128xf32, #tpu.memory_space<vmem>>, vector<8x128xf32>
      %c136_132 = arith.constant 136 : index
      %c0_133 = arith.constant 0 : index
      %138 = vector.load %arg18[%c136_132, %c0_133] : memref<392x128xf32, #tpu.memory_space<vmem>>, vector<8x128xf32>
      %c152_134 = arith.constant 152 : index
      %c0_135 = arith.constant 0 : index
      %139 = vector.load %arg18[%c152_134, %c0_135] : memref<392x128xf32, #tpu.memory_space<vmem>>, vector<8x128xf32>
      %c232_136 = arith.constant 232 : index
      %c0_137 = arith.constant 0 : index
      %140 = vector.load %arg18[%c232_136, %c0_137] : memref<392x128xf32, #tpu.memory_space<vmem>>, vector<8x128xf32>
      %c248_138 = arith.constant 248 : index
      %c0_139 = arith.constant 0 : index
      %141 = vector.load %arg18[%c248_138, %c0_139] : memref<392x128xf32, #tpu.memory_space<vmem>>, vector<8x128xf32>
      %c264_140 = arith.constant 264 : index
      %c0_141 = arith.constant 0 : index
      %142 = vector.load %arg18[%c264_140, %c0_141] : memref<392x128xf32, #tpu.memory_space<vmem>>, vector<8x128xf32>
      %c344 = arith.constant 344 : index
      %c0_142 = arith.constant 0 : index
      %143 = vector.load %arg18[%c344, %c0_142] : memref<392x128xf32, #tpu.memory_space<vmem>>, vector<8x128xf32>
      %c360 = arith.constant 360 : index
      %c0_143 = arith.constant 0 : index
      %144 = vector.load %arg18[%c360, %c0_143] : memref<392x128xf32, #tpu.memory_space<vmem>>, vector<8x128xf32>
      %c376 = arith.constant 376 : index
      %c0_144 = arith.constant 0 : index
      %145 = vector.load %arg18[%c376, %c0_144] : memref<392x128xf32, #tpu.memory_space<vmem>>, vector<8x128xf32>
      %146 = tpu.concatenate %137, %138, %139, %140, %141, %142, %143, %144, %145 in 0 : vector<8x128xf32>, vector<8x128xf32>, vector<8x128xf32>, vector<8x128xf32>, vector<8x128xf32>, vector<8x128xf32>, vector<8x128xf32>, vector<8x128xf32>, vector<8x128xf32> -> vector<72x128xf32>
      %147 = arith.truncf %146 : vector<72x128xf32> to vector<72x128xbf16>
      %cst_145 = arith.constant dense<0.000000e+00> : vector<72x128xf32>
      %148 = tpu.matmul %147, %136, %cst_145 {dimension_numbers = #tpu.dot_dimension_numbers<[1], [0], [0], [1], [0, 0, 1, 1], [], []>} : vector<72x128xbf16>, vector<128x128xbf16>, vector<72x128xf32> -> vector<72x128xf32>
      %149 = arith.addf %134, %148 : vector<72x128xf32>
      %c8_146 = arith.constant 8 : index
      %c0_147 = arith.constant 0 : index
      %c0_148 = arith.constant 0 : index
      %150 = vector.load %arg8[%c8_146, %c0_147, %c0_148] : memref<9x128x128xbf16, #tpu.memory_space<vmem>>, vector<1x128x128xbf16>
      %151 = vector.shape_cast %150 : vector<1x128x128xbf16> to vector<128x128xbf16>
      %c128_149 = arith.constant 128 : index
      %c0_150 = arith.constant 0 : index
      %152 = vector.load %arg18[%c128_149, %c0_150] : memref<392x128xf32, #tpu.memory_space<vmem>>, vector<8x128xf32>
      %c144_151 = arith.constant 144 : index
      %c0_152 = arith.constant 0 : index
      %153 = vector.load %arg18[%c144_151, %c0_152] : memref<392x128xf32, #tpu.memory_space<vmem>>, vector<8x128xf32>
      %c160_153 = arith.constant 160 : index
      %c0_154 = arith.constant 0 : index
      %154 = vector.load %arg18[%c160_153, %c0_154] : memref<392x128xf32, #tpu.memory_space<vmem>>, vector<8x128xf32>
      %c240_155 = arith.constant 240 : index
      %c0_156 = arith.constant 0 : index
      %155 = vector.load %arg18[%c240_155, %c0_156] : memref<392x128xf32, #tpu.memory_space<vmem>>, vector<8x128xf32>
      %c256_157 = arith.constant 256 : index
      %c0_158 = arith.constant 0 : index
      %156 = vector.load %arg18[%c256_157, %c0_158] : memref<392x128xf32, #tpu.memory_space<vmem>>, vector<8x128xf32>
      %c272_159 = arith.constant 272 : index
      %c0_160 = arith.constant 0 : index
      %157 = vector.load %arg18[%c272_159, %c0_160] : memref<392x128xf32, #tpu.memory_space<vmem>>, vector<8x128xf32>
      %c352_161 = arith.constant 352 : index
      %c0_162 = arith.constant 0 : index
      %158 = vector.load %arg18[%c352_161, %c0_162] : memref<392x128xf32, #tpu.memory_space<vmem>>, vector<8x128xf32>
      %c368_163 = arith.constant 368 : index
      %c0_164 = arith.constant 0 : index
      %159 = vector.load %arg18[%c368_163, %c0_164] : memref<392x128xf32, #tpu.memory_space<vmem>>, vector<8x128xf32>
      %c384 = arith.constant 384 : index
      %c0_165 = arith.constant 0 : index
      %160 = vector.load %arg18[%c384, %c0_165] : memref<392x128xf32, #tpu.memory_space<vmem>>, vector<8x128xf32>
      %161 = tpu.concatenate %152, %153, %154, %155, %156, %157, %158, %159, %160 in 0 : vector<8x128xf32>, vector<8x128xf32>, vector<8x128xf32>, vector<8x128xf32>, vector<8x128xf32>, vector<8x128xf32>, vector<8x128xf32>, vector<8x128xf32>, vector<8x128xf32> -> vector<72x128xf32>
      %162 = arith.truncf %161 : vector<72x128xf32> to vector<72x128xbf16>
      %cst_166 = arith.constant dense<0.000000e+00> : vector<72x128xf32>
      %163 = tpu.matmul %162, %151, %cst_166 {dimension_numbers = #tpu.dot_dimension_numbers<[1], [0], [0], [1], [0, 0, 1, 1], [], []>} : vector<72x128xbf16>, vector<128x128xbf16>, vector<72x128xf32> -> vector<72x128xf32>
      %164 = arith.addf %149, %163 : vector<72x128xf32>
      %c0_167 = arith.constant 0 : index
      %c0_168 = arith.constant 0 : index
      %165 = vector.load %arg9[%c0_167, %c0_168] : memref<1x128xf32, #tpu.memory_space<vmem>>, vector<1x128xf32>
      %166 = vector.broadcast %165 : vector<1x128xf32> to vector<72x128xf32>
      %167 = arith.addf %164, %166 : vector<72x128xf32>
      %cst_169 = arith.constant 0.000000e+00 : f32
      %168 = vector.broadcast %cst_169 : f32 to vector<72x128xf32>
      %169 = arith.maximumf %167, %168 : vector<72x128xf32>
      %cst_170 = arith.constant 0.000000e+00 : f32
      %170 = vector.broadcast %cst_170 : f32 to vector<8x128xf32>
      %171 = vector.extract_strided_slice %169 {offsets = [0, 0], sizes = [8, 128], strides = [1, 1]} : vector<72x128xf32> to vector<8x128xf32>
      %172 = arith.truncf %171 : vector<8x128xf32> to vector<8x128xbf16>
      %c0_171 = arith.constant 0 : index
      %c0_172 = arith.constant 0 : index
      %c0_173 = arith.constant 0 : index
      %173 = vector.load %arg10[%c0_171, %c0_172, %c0_173] : memref<9x128x128xbf16, #tpu.memory_space<vmem>>, vector<1x128x128xbf16>
      %174 = vector.shape_cast %173 : vector<1x128x128xbf16> to vector<128x128xbf16>
      %cst_174 = arith.constant dense<0.000000e+00> : vector<8x128xf32>
      %175 = tpu.matmul %172, %174, %cst_174 {dimension_numbers = #tpu.dot_dimension_numbers<[1], [0], [0], [1], [0, 0, 1, 1], [], []>} : vector<8x128xbf16>, vector<128x128xbf16>, vector<8x128xf32> -> vector<8x128xf32>
      %176 = arith.addf %170, %175 : vector<8x128xf32>
      %177 = vector.extract_strided_slice %169 {offsets = [8, 0], sizes = [8, 128], strides = [1, 1]} : vector<72x128xf32> to vector<8x128xf32>
      %178 = arith.truncf %177 : vector<8x128xf32> to vector<8x128xbf16>
      %c1_175 = arith.constant 1 : index
      %c0_176 = arith.constant 0 : index
      %c0_177 = arith.constant 0 : index
      %179 = vector.load %arg10[%c1_175, %c0_176, %c0_177] : memref<9x128x128xbf16, #tpu.memory_space<vmem>>, vector<1x128x128xbf16>
      %180 = vector.shape_cast %179 : vector<1x128x128xbf16> to vector<128x128xbf16>
      %cst_178 = arith.constant dense<0.000000e+00> : vector<8x128xf32>
      %181 = tpu.matmul %178, %180, %cst_178 {dimension_numbers = #tpu.dot_dimension_numbers<[1], [0], [0], [1], [0, 0, 1, 1], [], []>} : vector<8x128xbf16>, vector<128x128xbf16>, vector<8x128xf32> -> vector<8x128xf32>
      %182 = arith.addf %176, %181 : vector<8x128xf32>
      %183 = vector.extract_strided_slice %169 {offsets = [16, 0], sizes = [8, 128], strides = [1, 1]} : vector<72x128xf32> to vector<8x128xf32>
      %184 = arith.truncf %183 : vector<8x128xf32> to vector<8x128xbf16>
      %c2_179 = arith.constant 2 : index
      %c0_180 = arith.constant 0 : index
      %c0_181 = arith.constant 0 : index
      %185 = vector.load %arg10[%c2_179, %c0_180, %c0_181] : memref<9x128x128xbf16, #tpu.memory_space<vmem>>, vector<1x128x128xbf16>
      %186 = vector.shape_cast %185 : vector<1x128x128xbf16> to vector<128x128xbf16>
      %cst_182 = arith.constant dense<0.000000e+00> : vector<8x128xf32>
      %187 = tpu.matmul %184, %186, %cst_182 {dimension_numbers = #tpu.dot_dimension_numbers<[1], [0], [0], [1], [0, 0, 1, 1], [], []>} : vector<8x128xbf16>, vector<128x128xbf16>, vector<8x128xf32> -> vector<8x128xf32>
      %188 = arith.addf %182, %187 : vector<8x128xf32>
      %189 = vector.extract_strided_slice %169 {offsets = [24, 0], sizes = [8, 128], strides = [1, 1]} : vector<72x128xf32> to vector<8x128xf32>
      %190 = arith.truncf %189 : vector<8x128xf32> to vector<8x128xbf16>
      %c3_183 = arith.constant 3 : index
      %c0_184 = arith.constant 0 : index
      %c0_185 = arith.constant 0 : index
      %191 = vector.load %arg10[%c3_183, %c0_184, %c0_185] : memref<9x128x128xbf16, #tpu.memory_space<vmem>>, vector<1x128x128xbf16>
      %192 = vector.shape_cast %191 : vector<1x128x128xbf16> to vector<128x128xbf16>
      %cst_186 = arith.constant dense<0.000000e+00> : vector<8x128xf32>
      %193 = tpu.matmul %190, %192, %cst_186 {dimension_numbers = #tpu.dot_dimension_numbers<[1], [0], [0], [1], [0, 0, 1, 1], [], []>} : vector<8x128xbf16>, vector<128x128xbf16>, vector<8x128xf32> -> vector<8x128xf32>
      %194 = arith.addf %188, %193 : vector<8x128xf32>
      %195 = vector.extract_strided_slice %169 {offsets = [32, 0], sizes = [8, 128], strides = [1, 1]} : vector<72x128xf32> to vector<8x128xf32>
      %196 = arith.truncf %195 : vector<8x128xf32> to vector<8x128xbf16>
      %c4_187 = arith.constant 4 : index
      %c0_188 = arith.constant 0 : index
      %c0_189 = arith.constant 0 : index
      %197 = vector.load %arg10[%c4_187, %c0_188, %c0_189] : memref<9x128x128xbf16, #tpu.memory_space<vmem>>, vector<1x128x128xbf16>
      %198 = vector.shape_cast %197 : vector<1x128x128xbf16> to vector<128x128xbf16>
      %cst_190 = arith.constant dense<0.000000e+00> : vector<8x128xf32>
      %199 = tpu.matmul %196, %198, %cst_190 {dimension_numbers = #tpu.dot_dimension_numbers<[1], [0], [0], [1], [0, 0, 1, 1], [], []>} : vector<8x128xbf16>, vector<128x128xbf16>, vector<8x128xf32> -> vector<8x128xf32>
      %200 = arith.addf %194, %199 : vector<8x128xf32>
      %201 = vector.extract_strided_slice %169 {offsets = [40, 0], sizes = [8, 128], strides = [1, 1]} : vector<72x128xf32> to vector<8x128xf32>
      %202 = arith.truncf %201 : vector<8x128xf32> to vector<8x128xbf16>
      %c5_191 = arith.constant 5 : index
      %c0_192 = arith.constant 0 : index
      %c0_193 = arith.constant 0 : index
      %203 = vector.load %arg10[%c5_191, %c0_192, %c0_193] : memref<9x128x128xbf16, #tpu.memory_space<vmem>>, vector<1x128x128xbf16>
      %204 = vector.shape_cast %203 : vector<1x128x128xbf16> to vector<128x128xbf16>
      %cst_194 = arith.constant dense<0.000000e+00> : vector<8x128xf32>
      %205 = tpu.matmul %202, %204, %cst_194 {dimension_numbers = #tpu.dot_dimension_numbers<[1], [0], [0], [1], [0, 0, 1, 1], [], []>} : vector<8x128xbf16>, vector<128x128xbf16>, vector<8x128xf32> -> vector<8x128xf32>
      %206 = arith.addf %200, %205 : vector<8x128xf32>
      %207 = vector.extract_strided_slice %169 {offsets = [48, 0], sizes = [8, 128], strides = [1, 1]} : vector<72x128xf32> to vector<8x128xf32>
      %208 = arith.truncf %207 : vector<8x128xf32> to vector<8x128xbf16>
      %c6_195 = arith.constant 6 : index
      %c0_196 = arith.constant 0 : index
      %c0_197 = arith.constant 0 : index
      %209 = vector.load %arg10[%c6_195, %c0_196, %c0_197] : memref<9x128x128xbf16, #tpu.memory_space<vmem>>, vector<1x128x128xbf16>
      %210 = vector.shape_cast %209 : vector<1x128x128xbf16> to vector<128x128xbf16>
      %cst_198 = arith.constant dense<0.000000e+00> : vector<8x128xf32>
      %211 = tpu.matmul %208, %210, %cst_198 {dimension_numbers = #tpu.dot_dimension_numbers<[1], [0], [0], [1], [0, 0, 1, 1], [], []>} : vector<8x128xbf16>, vector<128x128xbf16>, vector<8x128xf32> -> vector<8x128xf32>
      %212 = arith.addf %206, %211 : vector<8x128xf32>
      %213 = vector.extract_strided_slice %169 {offsets = [56, 0], sizes = [8, 128], strides = [1, 1]} : vector<72x128xf32> to vector<8x128xf32>
      %214 = arith.truncf %213 : vector<8x128xf32> to vector<8x128xbf16>
      %c7_199 = arith.constant 7 : index
      %c0_200 = arith.constant 0 : index
      %c0_201 = arith.constant 0 : index
      %215 = vector.load %arg10[%c7_199, %c0_200, %c0_201] : memref<9x128x128xbf16, #tpu.memory_space<vmem>>, vector<1x128x128xbf16>
      %216 = vector.shape_cast %215 : vector<1x128x128xbf16> to vector<128x128xbf16>
      %cst_202 = arith.constant dense<0.000000e+00> : vector<8x128xf32>
      %217 = tpu.matmul %214, %216, %cst_202 {dimension_numbers = #tpu.dot_dimension_numbers<[1], [0], [0], [1], [0, 0, 1, 1], [], []>} : vector<8x128xbf16>, vector<128x128xbf16>, vector<8x128xf32> -> vector<8x128xf32>
      %218 = arith.addf %212, %217 : vector<8x128xf32>
      %219 = vector.extract_strided_slice %169 {offsets = [64, 0], sizes = [8, 128], strides = [1, 1]} : vector<72x128xf32> to vector<8x128xf32>
      %220 = arith.truncf %219 : vector<8x128xf32> to vector<8x128xbf16>
      %c8_203 = arith.constant 8 : index
      %c0_204 = arith.constant 0 : index
      %c0_205 = arith.constant 0 : index
      %221 = vector.load %arg10[%c8_203, %c0_204, %c0_205] : memref<9x128x128xbf16, #tpu.memory_space<vmem>>, vector<1x128x128xbf16>
      %222 = vector.shape_cast %221 : vector<1x128x128xbf16> to vector<128x128xbf16>
      %cst_206 = arith.constant dense<0.000000e+00> : vector<8x128xf32>
      %223 = tpu.matmul %220, %222, %cst_206 {dimension_numbers = #tpu.dot_dimension_numbers<[1], [0], [0], [1], [0, 0, 1, 1], [], []>} : vector<8x128xbf16>, vector<128x128xbf16>, vector<8x128xf32> -> vector<8x128xf32>
      %224 = arith.addf %218, %223 : vector<8x128xf32>
      %c0_207 = arith.constant 0 : index
      %c0_208 = arith.constant 0 : index
      %225 = vector.load %arg11[%c0_207, %c0_208] : memref<1x128xf32, #tpu.memory_space<vmem>>, vector<1x128xf32>
      %226 = vector.broadcast %225 : vector<1x128xf32> to vector<8x128xf32>
      %227 = arith.addf %224, %226 : vector<8x128xf32>
      %cst_209 = arith.constant 0.000000e+00 : f32
      %228 = vector.broadcast %cst_209 : f32 to vector<8x128xf32>
      %229 = arith.maximumf %227, %228 : vector<8x128xf32>
      %c0_210 = arith.constant 0 : index
      %c0_211 = arith.constant 0 : index
      %230 = vector.load %arg3[%c0_210, %c0_211] : memref<8x8xf32, #tpu.memory_space<vmem>>, vector<8x8xf32>
      %c0_212 = arith.constant 0 : index
      %c0_213 = arith.constant 0 : index
      %231 = vector.load %arg12[%c0_212, %c0_213] : memref<128x128xf32, #tpu.memory_space<vmem>>, vector<128x128xf32>
      %cst_214 = arith.constant dense<0.000000e+00> : vector<8x128xf32>
      %232 = tpu.matmul %229, %231, %cst_214 {dimension_numbers = #tpu.dot_dimension_numbers<[1], [0], [0], [1], [0, 0, 1, 1], [], []>} : vector<8x128xf32>, vector<128x128xf32>, vector<8x128xf32> -> vector<8x128xf32>
      %c0_215 = arith.constant 0 : index
      %c0_216 = arith.constant 0 : index
      %233 = vector.load %arg13[%c0_215, %c0_216] : memref<8x128xf32, #tpu.memory_space<vmem>>, vector<8x128xf32>
      %cst_217 = arith.constant dense<0.000000e+00> : vector<8x128xf32>
      %234 = tpu.matmul %230, %233, %cst_217 {dimension_numbers = #tpu.dot_dimension_numbers<[1], [0], [0], [1], [0, 0, 1, 1], [], []>} : vector<8x8xf32>, vector<8x128xf32>, vector<8x128xf32> -> vector<8x128xf32>
      %235 = arith.addf %232, %234 : vector<8x128xf32>
      %c0_218 = arith.constant 0 : index
      %c0_219 = arith.constant 0 : index
      %236 = vector.load %arg14[%c0_218, %c0_219] : memref<1x128xf32, #tpu.memory_space<vmem>>, vector<1x128xf32>
      %237 = vector.broadcast %236 : vector<1x128xf32> to vector<8x128xf32>
      %238 = arith.addf %235, %237 : vector<8x128xf32>
      %cst_220 = arith.constant 0.000000e+00 : f32
      %239 = vector.broadcast %cst_220 : f32 to vector<8x128xf32>
      %240 = arith.maximumf %238, %239 : vector<8x128xf32>
      %c0_221 = arith.constant 0 : index
      %c0_222 = arith.constant 0 : index
      %241 = vector.load %arg15[%c0_221, %c0_222] : memref<128x5xf32, #tpu.memory_space<vmem>>, vector<128x5xf32>
      %cst_223 = arith.constant dense<0.000000e+00> : vector<8x5xf32>
      %242 = tpu.matmul %240, %241, %cst_223 {dimension_numbers = #tpu.dot_dimension_numbers<[1], [0], [0], [1], [0, 0, 1, 1], [], []>} : vector<8x128xf32>, vector<128x5xf32>, vector<8x5xf32> -> vector<8x5xf32>
      %c0_224 = arith.constant 0 : index
      %c0_225 = arith.constant 0 : index
      %243 = vector.load %arg16[%c0_224, %c0_225] : memref<1x5xf32, #tpu.memory_space<vmem>>, vector<1x5xf32>
      %244 = vector.broadcast %243 : vector<1x5xf32> to vector<8x5xf32>
      %245 = arith.addf %242, %244 : vector<8x5xf32>
      %246 = vector.extract_strided_slice %245 {offsets = [0, 0], sizes = [8, 4], strides = [1, 1]} : vector<8x5xf32> to vector<8x4xf32>
      %247 = vector.extract_strided_slice %245 {offsets = [0, 4], sizes = [8, 1], strides = [1, 1]} : vector<8x5xf32> to vector<8x1xf32>
      %cst_226 = arith.constant dense<0xFF800000> : vector<8xf32>
      %248 = vector.multi_reduction <maximumf>, %246, %cst_226 [1] : vector<8x4xf32> to vector<8xf32>
      %249 = vector.shape_cast %248 : vector<8xf32> to vector<8x1xf32>
      %250 = vector.broadcast %249 : vector<8x1xf32> to vector<8x4xf32>
      %251 = arith.subf %246, %250 : vector<8x4xf32>
      %252 = math.exp %251 : vector<8x4xf32>
      %cst_227 = arith.constant dense<0.000000e+00> : vector<8xf32>
      %253 = vector.multi_reduction <add>, %252, %cst_227 [1] : vector<8x4xf32> to vector<8xf32>
      %254 = vector.shape_cast %253 : vector<8xf32> to vector<8x1xf32>
      %255 = vector.broadcast %254 : vector<8x1xf32> to vector<8x4xf32>
      %256 = arith.divf %252, %255 : vector<8x4xf32>
      %cst_228 = arith.constant 0.000000e+00 : f32
      %257 = vector.broadcast %cst_228 : f32 to vector<8x123xf32>
      %258 = tpu.concatenate %256, %247, %257 in 1 : vector<8x4xf32>, vector<8x1xf32>, vector<8x123xf32> -> vector<8x128xf32>
      %c0_229 = arith.constant 0 : index
      %c0_230 = arith.constant 0 : index
      %259 = vector.load %arg17[%c0_229, %c0_230] : memref<8x128xf32, #tpu.memory_space<vmem>>, vector<8x128xf32>
      tpu.vector_store %arg17[%c0_229, %c0_230], %258 {strides = array<i32>} : memref<8x128xf32, #tpu.memory_space<vmem>>, vector<8x128xf32>,
    } else {
    }
    return
  }
  func.func @transform_0(%arg0: i32, %arg1: i32) -> (i32, i32, i32, i32) {
    %c0_i32 = arith.constant 0 : i32
    %c0_i32_0 = arith.constant 0 : i32
    %c0_i32_1 = arith.constant 0 : i32
    return %arg1, %arg0, %c0_i32, %c0_i32_0 : i32, i32, i32, i32
  }
  func.func @transform_1(%arg0: i32, %arg1: i32) -> (i32, i32) {
    %c0_i32 = arith.constant 0 : i32
    %c0_i32_0 = arith.constant 0 : i32
    return %arg0, %c0_i32 : i32, i32
  }
  func.func @transform_2(%arg0: i32, %arg1: i32) -> (i32, i32) {
    %c0_i32 = arith.constant 0 : i32
    %c0_i32_0 = arith.constant 0 : i32
    %c0_i32_1 = arith.constant 0 : i32
    return %c0_i32, %c0_i32_0 : i32, i32
  }
  func.func @transform_3(%arg0: i32, %arg1: i32) -> (i32, i32) {
    %c0_i32 = arith.constant 0 : i32
    %c0_i32_0 = arith.constant 0 : i32
    %c0_i32_1 = arith.constant 0 : i32
    return %c0_i32, %c0_i32_0 : i32, i32
  }
  func.func @transform_4(%arg0: i32, %arg1: i32) -> (i32, i32, i32) {
    %c0_i32 = arith.constant 0 : i32
    %c0_i32_0 = arith.constant 0 : i32
    %c0_i32_1 = arith.constant 0 : i32
    return %arg1, %c0_i32, %c0_i32_0 : i32, i32, i32
  }
  func.func @transform_5(%arg0: i32, %arg1: i32) -> (i32, i32) {
    %c0_i32 = arith.constant 0 : i32
    %c0_i32_0 = arith.constant 0 : i32
    %c0_i32_1 = arith.constant 0 : i32
    return %c0_i32, %c0_i32_0 : i32, i32
  }
  func.func @transform_6(%arg0: i32, %arg1: i32) -> (i32, i32, i32) {
    %c0_i32 = arith.constant 0 : i32
    %c0_i32_0 = arith.constant 0 : i32
    %c0_i32_1 = arith.constant 0 : i32
    %c0_i32_2 = arith.constant 0 : i32
    return %c0_i32, %c0_i32_0, %c0_i32_1 : i32, i32, i32
  }
  func.func @transform_7(%arg0: i32, %arg1: i32) -> (i32, i32) {
    %c0_i32 = arith.constant 0 : i32
    %c0_i32_0 = arith.constant 0 : i32
    %c0_i32_1 = arith.constant 0 : i32
    return %c0_i32, %c0_i32_0 : i32, i32
  }
  func.func @transform_8(%arg0: i32, %arg1: i32) -> (i32, i32, i32) {
    %c0_i32 = arith.constant 0 : i32
    %c0_i32_0 = arith.constant 0 : i32
    %c0_i32_1 = arith.constant 0 : i32
    %c0_i32_2 = arith.constant 0 : i32
    return %c0_i32, %c0_i32_0, %c0_i32_1 : i32, i32, i32
  }
  func.func @transform_9(%arg0: i32, %arg1: i32) -> (i32, i32) {
    %c0_i32 = arith.constant 0 : i32
    %c0_i32_0 = arith.constant 0 : i32
    %c0_i32_1 = arith.constant 0 : i32
    return %c0_i32, %c0_i32_0 : i32, i32
  }
  func.func @transform_10(%arg0: i32, %arg1: i32) -> (i32, i32) {
    %c0_i32 = arith.constant 0 : i32
    %c0_i32_0 = arith.constant 0 : i32
    %c0_i32_1 = arith.constant 0 : i32
    return %c0_i32, %c0_i32_0 : i32, i32
  }
  func.func @transform_11(%arg0: i32, %arg1: i32) -> (i32, i32) {
    %c0_i32 = arith.constant 0 : i32
    %c0_i32_0 = arith.constant 0 : i32
    %c0_i32_1 = arith.constant 0 : i32
    return %c0_i32, %c0_i32_0 : i32, i32
  }
  func.func @transform_12(%arg0: i32, %arg1: i32) -> (i32, i32) {
    %c0_i32 = arith.constant 0 : i32
    %c0_i32_0 = arith.constant 0 : i32
    %c0_i32_1 = arith.constant 0 : i32
    return %c0_i32, %c0_i32_0 : i32, i32
  }
  func.func @transform_13(%arg0: i32, %arg1: i32) -> (i32, i32) {
    %c0_i32 = arith.constant 0 : i32
    %c0_i32_0 = arith.constant 0 : i32
    %c0_i32_1 = arith.constant 0 : i32
    return %c0_i32, %c0_i32_0 : i32, i32
  }
  func.func @transform_14(%arg0: i32, %arg1: i32) -> (i32, i32) {
    %c0_i32 = arith.constant 0 : i32
    %c0_i32_0 = arith.constant 0 : i32
    %c0_i32_1 = arith.constant 0 : i32
    return %c0_i32, %c0_i32_0 : i32, i32
  }
  func.func @transform_15(%arg0: i32, %arg1: i32) -> (i32, i32) {
    %c0_i32 = arith.constant 0 : i32
    %c0_i32_0 = arith.constant 0 : i32
    return %arg0, %c0_i32 : i32, i32
  }
}

</mosaic_0001>

<llo_original>
// kernel: image_ppo_network_forward.1
$region0: #{image_ppo_network_forward.1}
  #allocation0 [shape = 'u32[]', space=smem, size = 0x4, offset = 0x4, fixed_abs, tag = 'smem constant byte address 0x4 - core index']
  #allocation1 [shape = 'u32[144,128]{1,0:T(1,128)}', space=vmem, size = 0x12000, scoped, tag = 'internal scratch']
  #allocation2 [shape = 'f32[392,128]{1,0:T(8,128)}', space=vmem, size = 0x31000, scoped, tag = 'scratch operand']
  %s0 = inlined_call_operand.vmem [shape: bf16[16,1,392,192], index: 0, kind: input, shape index: {}]
  %s1 = inlined_call_operand.vmem [shape: f32[8,8], index: 1, kind: input, shape index: {}]
  %s2 = inlined_call_operand.vmem [shape: bf16[192,64], index: 2, kind: input, shape index: {}]
  %s3 = inlined_call_operand.vmem [shape: f32[1,64], index: 3, kind: input, shape index: {}]
  %s4 = inlined_call_operand.vmem [shape: bf16[16,64,128], index: 4, kind: input, shape index: {}]
  %s5 = inlined_call_operand.vmem [shape: f32[1,128], index: 5, kind: input, shape index: {}]
  %s6 = inlined_call_operand.vmem [shape: bf16[9,128,128], index: 6, kind: input, shape index: {}]
  %s7 = inlined_call_operand.vmem [shape: f32[1,128], index: 7, kind: input, shape index: {}]
  %s8 = inlined_call_operand.vmem [shape: bf16[9,128,128], index: 8, kind: input, shape index: {}]
  %s9 = inlined_call_operand.vmem [shape: f32[1,128], index: 9, kind: input, shape index: {}]
  %s10 = inlined_call_operand.vmem [shape: f32[128,128], index: 10, kind: input, shape index: {}]
  %s11 = inlined_call_operand.vmem [shape: f32[8,128], index: 11, kind: input, shape index: {}]
  %s12 = inlined_call_operand.vmem [shape: f32[1,128], index: 12, kind: input, shape index: {}]
  %s13 = inlined_call_operand.vmem [shape: f32[128,5], index: 13, kind: input, shape index: {}]
  %s14 = inlined_call_operand.vmem [shape: f32[1,5], index: 14, kind: input, shape index: {}]
  %s15 = inlined_call_operand.vmem [shape: f32[8,128], index: 15, kind: output, shape index: {}]
  %s16 = sld [smem:[#allocation0]]
  $region105: #{image_ppo_network_forward.1} parent=0
    _
  %s18 = ssub.s32 1, %s16
  %s19 = scalar_select 0, %s18, %s16
  loop: start=0, step=1, limit=18
  $region2: #{image_ppo_network_forward.1} parent=0 // loop_pre_header
    _
  $region3: #{image_ppo_network_forward.1} parent=0 // loop_header
    %s21 = sphi 0, %s25
    %p22 = scmp.ge.s32.totalorder %s21, 18
    %s28 = sphi 0, %s40
    %s29 = sphi 0, %s36
    %s30 = sphi 0, %s28
    %s31 = sphi 0, %s29
    %s32 = sphi 0, %s30
    %s33 = sphi 0, %s31
    %s45 = sphi 0, %s47
    %s48 = sphi 0, %s45
    %s49 = sphi 0, %s48
    %s65 = sphi 0, %s49
    %s71 = sphi 0, %s73
    %s74 = sphi 0, %s71
    %s75 = sphi 0, %s74
    %s91 = sphi 0, %s75
    %s95 = sphi 0, %s95
    %s97 = sphi 0, %s95
    %s98 = sphi 0, %s97
    %s112 = sphi 0, %s98
    %s116 = sphi 0, %s116
    %s118 = sphi 0, %s116
    %s119 = sphi 0, %s118
    %s133 = sphi 0, %s119
    %s139 = sphi 0, %s141
    %s142 = sphi 0, %s139
    %s143 = sphi 0, %s142
    %s159 = sphi 0, %s143
    %s163 = sphi 0, %s163
    %s165 = sphi 0, %s163
    %s166 = sphi 0, %s165
    %s180 = sphi 0, %s166
    %s184 = sphi 0, %s184
    %s186 = sphi 0, %s184
    %s187 = sphi 0, %s186
    %s201 = sphi 0, %s187
    %s205 = sphi 0, %s205
    %s207 = sphi 0, %s205
    %s208 = sphi 0, %s207
    %s222 = sphi 0, %s208
    %s226 = sphi 0, %s226
    %s228 = sphi 0, %s226
    %s229 = sphi 0, %s228
    %s243 = sphi 0, %s229
    %s247 = sphi 0, %s247
    %s249 = sphi 0, %s247
    %s250 = sphi 0, %s249
    %s264 = sphi 0, %s250
    %s268 = sphi 0, %s268
    %s270 = sphi 0, %s268
    %s271 = sphi 0, %s270
    %s285 = sphi 0, %s271
    %s289 = sphi 0, %s289
    %s291 = sphi 0, %s289
    %s292 = sphi 0, %s291
    %s306 = sphi 0, %s292
    %s310 = sphi 0, %s310
    %s312 = sphi 0, %s310
    %s313 = sphi 0, %s312
    %s327 = sphi 0, %s313
    %s331 = sphi 0, %s331
    %s333 = sphi 0, %s331
    %s334 = sphi 0, %s333
    %s348 = sphi 0, %s334
    %s352 = sphi 0, %s352
    %s354 = sphi 0, %s352
    %s355 = sphi 0, %s354
    %s369 = sphi 0, %s355
    %s375 = sphi 0, %s377
    %s378 = sphi 0, %s375
    %s379 = sphi 0, %s378
    %s395 = sphi 0, %s379
  $region4: #{image_ppo_network_forward.1} parent=0 // loop_header_branch
    %24 = sbr.rel (%p22) target = $region8
  $region5: #{image_ppo_network_forward.1} parent=0 // loop_body
    %s26 = ssub.s32 %s21, 1
    %s27 = ssub.s32 %s21, 2
    %s34 = sadd.s32 1, %s29
    %p35 = scmp.ge.s32.totalorder %s34, 16
    %s36 = scalar_select %p35, 0, %s34
    %s37 = sadd.s32 1, %s28
    %s38 = scalar_select %p35, %s37, %s28
    %p39 = scmp.ge.s32.totalorder %s38, 1
    %s40 = scalar_select %p39, 0, %s38
    %s41 = ssub.s32 %s29, %s36
    %s42 = ssub.s32 %s28, %s40
    %s43 = sor.u32 %s41, %s42
    %p44 = scmp.eq.s32.totalorder %s43, 0
    %s46 = sadd.s32 %s45, 1
    %s47 = scalar_select %p44, %s45, %s46
    %p50 = pneg %p44
    %p51 = scmp.eq.s32.totalorder %s21, 15
    %p52 = por %p50, %p51
    %p53 = scmp.ne.s32.totalorder %s45, %s48
    %p54 = scmp.eq.s32.totalorder %s21, 0
    %p55 = por %p53, %p54
    %p56 = scmp.ne.s32.totalorder %s45, %s48
    %p57 = scmp.eq.s32.totalorder %s26, 15
    %p58 = por %p56, %p57
    %p59 = scmp.ne.s32.totalorder %s48, %s49
    %p60 = scmp.eq.s32.totalorder %s26, 0
    %p61 = por %p59, %p60
    %p62 = scmp.ne.s32.totalorder %s48, %s49
    %p63 = scmp.eq.s32.totalorder %s27, 15
    %p64 = por %p62, %p63
    %p66 = scmp.ne.s32.totalorder %s49, %s65
    %p67 = scmp.eq.s32.totalorder %s27, 0
    %p68 = por %p66, %p67
    %s69 = ssub.s32 %s28, %s40
    %p70 = scmp.eq.s32.totalorder %s69, 0
    %s72 = sadd.s32 %s71, 1
    %s73 = scalar_select %p70, %s71, %s72
    %p76 = pneg %p70
    %p77 = scmp.eq.s32.totalorder %s21, 15
    %p78 = por %p76, %p77
    %p79 = scmp.ne.s32.totalorder %s71, %s74
    %p80 = scmp.eq.s32.totalorder %s21, 0
    %p81 = por %p79, %p80
    %p82 = scmp.ne.s32.totalorder %s71, %s74
    %p83 = scmp.eq.s32.totalorder %s26, 15
    %p84 = por %p82, %p83
    %p85 = scmp.ne.s32.totalorder %s74, %s75
    %p86 = scmp.eq.s32.totalorder %s26, 0
    %p87 = por %p85, %p86
    %p88 = scmp.ne.s32.totalorder %s74, %s75
    %p89 = scmp.eq.s32.totalorder %s27, 15
    %p90 = por %p88, %p89
    %p92 = scmp.ne.s32.totalorder %s75, %s91
    %p93 = scmp.eq.s32.totalorder %s27, 0
    %p94 = por %p92, %p93
    %s96 = sadd.s32 %s95, 1
    %p99 = scmp.eq.s32.totalorder %s21, 15
    %p100 = scmp.ne.s32.totalorder %s95, %s97
    %p101 = scmp.eq.s32.totalorder %s21, 0
    %p102 = por %p100, %p101
    %p103 = scmp.ne.s32.totalorder %s95, %s97
    %p104 = scmp.eq.s32.totalorder %s26, 15
    %p105 = por %p103, %p104
    %p106 = scmp.ne.s32.totalorder %s97, %s98
    %p107 = scmp.eq.s32.totalorder %s26, 0
    %p108 = por %p106, %p107
    %p109 = scmp.ne.s32.totalorder %s97, %s98
    %p110 = scmp.eq.s32.totalorder %s27, 15
    %p111 = por %p109, %p110
    %p113 = scmp.ne.s32.totalorder %s98, %s112
    %p114 = scmp.eq.s32.totalorder %s27, 0
    %p115 = por %p113, %p114
    %s117 = sadd.s32 %s116, 1
    %p120 = scmp.eq.s32.totalorder %s21, 15
    %p121 = scmp.ne.s32.totalorder %s116, %s118
    %p122 = scmp.eq.s32.totalorder %s21, 0
    %p123 = por %p121, %p122
    %p124 = scmp.ne.s32.totalorder %s116, %s118
    %p125 = scmp.eq.s32.totalorder %s26, 15
    %p126 = por %p124, %p125
    %p127 = scmp.ne.s32.totalorder %s118, %s119
    %p128 = scmp.eq.s32.totalorder %s26, 0
    %p129 = por %p127, %p128
    %p130 = scmp.ne.s32.totalorder %s118, %s119
    %p131 = scmp.eq.s32.totalorder %s27, 15
    %p132 = por %p130, %p131
    %p134 = scmp.ne.s32.totalorder %s119, %s133
    %p135 = scmp.eq.s32.totalorder %s27, 0
    %p136 = por %p134, %p135
    %s137 = ssub.s32 %s29, %s36
    %p138 = scmp.eq.s32.totalorder %s137, 0
    %s140 = sadd.s32 %s139, 1
    %s141 = scalar_select %p138, %s139, %s140
    %p144 = pneg %p138
    %p145 = scmp.eq.s32.totalorder %s21, 15
    %p146 = por %p144, %p145
    %p147 = scmp.ne.s32.totalorder %s139, %s142
    %p148 = scmp.eq.s32.totalorder %s21, 0
    %p149 = por %p147, %p148
    %p150 = scmp.ne.s32.totalorder %s139, %s142
    %p151 = scmp.eq.s32.totalorder %s26, 15
    %p152 = por %p150, %p151
    %p153 = scmp.ne.s32.totalorder %s142, %s143
    %p154 = scmp.eq.s32.totalorder %s26, 0
    %p155 = por %p153, %p154
    %p156 = scmp.ne.s32.totalorder %s142, %s143
    %p157 = scmp.eq.s32.totalorder %s27, 15
    %p158 = por %p156, %p157
    %p160 = scmp.ne.s32.totalorder %s143, %s159
    %p161 = scmp.eq.s32.totalorder %s27, 0
    %p162 = por %p160, %p161
    %s164 = sadd.s32 %s163, 1
    %p167 = scmp.eq.s32.totalorder %s21, 15
    %p168 = scmp.ne.s32.totalorder %s163, %s165
    %p169 = scmp.eq.s32.totalorder %s21, 0
    %p170 = por %p168, %p169
    %p171 = scmp.ne.s32.totalorder %s163, %s165
    %p172 = scmp.eq.s32.totalorder %s26, 15
    %p173 = por %p171, %p172
    %p174 = scmp.ne.s32.totalorder %s165, %s166
    %p175 = scmp.eq.s32.totalorder %s26, 0
    %p176 = por %p174, %p175
    %p177 = scmp.ne.s32.totalorder %s165, %s166
    %p178 = scmp.eq.s32.totalorder %s27, 15
    %p179 = por %p177, %p178
    %p181 = scmp.ne.s32.totalorder %s166, %s180
    %p182 = scmp.eq.s32.totalorder %s27, 0
    %p183 = por %p181, %p182
    %s185 = sadd.s32 %s184, 1
    %p188 = scmp.eq.s32.totalorder %s21, 15
    %p189 = scmp.ne.s32.totalorder %s184, %s186
    %p190 = scmp.eq.s32.totalorder %s21, 0
    %p191 = por %p189, %p190
    %p192 = scmp.ne.s32.totalorder %s184, %s186
    %p193 = scmp.eq.s32.totalorder %s26, 15
    %p194 = por %p192, %p193
    %p195 = scmp.ne.s32.totalorder %s186, %s187
    %p196 = scmp.eq.s32.totalorder %s26, 0
    %p197 = por %p195, %p196
    %p198 = scmp.ne.s32.totalorder %s186, %s187
    %p199 = scmp.eq.s32.totalorder %s27, 15
    %p200 = por %p198, %p199
    %p202 = scmp.ne.s32.totalorder %s187, %s201
    %p203 = scmp.eq.s32.totalorder %s27, 0
    %p204 = por %p202, %p203
    %s206 = sadd.s32 %s205, 1
    %p209 = scmp.eq.s32.totalorder %s21, 15
    %p210 = scmp.ne.s32.totalorder %s205, %s207
    %p211 = scmp.eq.s32.totalorder %s21, 0
    %p212 = por %p210, %p211
    %p213 = scmp.ne.s32.totalorder %s205, %s207
    %p214 = scmp.eq.s32.totalorder %s26, 15
    %p215 = por %p213, %p214
    %p216 = scmp.ne.s32.totalorder %s207, %s208
    %p217 = scmp.eq.s32.totalorder %s26, 0
    %p218 = por %p216, %p217
    %p219 = scmp.ne.s32.totalorder %s207, %s208
    %p220 = scmp.eq.s32.totalorder %s27, 15
    %p221 = por %p219, %p220
    %p223 = scmp.ne.s32.totalorder %s208, %s222
    %p224 = scmp.eq.s32.totalorder %s27, 0
    %p225 = por %p223, %p224
    %s227 = sadd.s32 %s226, 1
    %p230 = scmp.eq.s32.totalorder %s21, 15
    %p231 = scmp.ne.s32.totalorder %s226, %s228
    %p232 = scmp.eq.s32.totalorder %s21, 0
    %p233 = por %p231, %p232
    %p234 = scmp.ne.s32.totalorder %s226, %s228
    %p235 = scmp.eq.s32.totalorder %s26, 15
    %p236 = por %p234, %p235
    %p237 = scmp.ne.s32.totalorder %s228, %s229
    %p238 = scmp.eq.s32.totalorder %s26, 0
    %p239 = por %p237, %p238
    %p240 = scmp.ne.s32.totalorder %s228, %s229
    %p241 = scmp.eq.s32.totalorder %s27, 15
    %p242 = por %p240, %p241
    %p244 = scmp.ne.s32.totalorder %s229, %s243
    %p245 = scmp.eq.s32.totalorder %s27, 0
    %p246 = por %p244, %p245
    %s248 = sadd.s32 %s247, 1
    %p251 = scmp.eq.s32.totalorder %s21, 15
    %p252 = scmp.ne.s32.totalorder %s247, %s249
    %p253 = scmp.eq.s32.totalorder %s21, 0
    %p254 = por %p252, %p253
    %p255 = scmp.ne.s32.totalorder %s247, %s249
    %p256 = scmp.eq.s32.totalorder %s26, 15
    %p257 = por %p255, %p256
    %p258 = scmp.ne.s32.totalorder %s249, %s250
    %p259 = scmp.eq.s32.totalorder %s26, 0
    %p260 = por %p258, %p259
    %p261 = scmp.ne.s32.totalorder %s249, %s250
    %p262 = scmp.eq.s32.totalorder %s27, 15
    %p263 = por %p261, %p262
    %p265 = scmp.ne.s32.totalorder %s250, %s264
    %p266 = scmp.eq.s32.totalorder %s27, 0
    %p267 = por %p265, %p266
    %s269 = sadd.s32 %s268, 1
    %p272 = scmp.eq.s32.totalorder %s21, 15
    %p273 = scmp.ne.s32.totalorder %s268, %s270
    %p274 = scmp.eq.s32.totalorder %s21, 0
    %p275 = por %p273, %p274
    %p276 = scmp.ne.s32.totalorder %s268, %s270
    %p277 = scmp.eq.s32.totalorder %s26, 15
    %p278 = por %p276, %p277
    %p279 = scmp.ne.s32.totalorder %s270, %s271
    %p280 = scmp.eq.s32.totalorder %s26, 0
    %p281 = por %p279, %p280
    %p282 = scmp.ne.s32.totalorder %s270, %s271
    %p283 = scmp.eq.s32.totalorder %s27, 15
    %p284 = por %p282, %p283
    %p286 = scmp.ne.s32.totalorder %s271, %s285
    %p287 = scmp.eq.s32.totalorder %s27, 0
    %p288 = por %p286, %p287
    %s290 = sadd.s32 %s289, 1
    %p293 = scmp.eq.s32.totalorder %s21, 15
    %p294 = scmp.ne.s32.totalorder %s289, %s291
    %p295 = scmp.eq.s32.totalorder %s21, 0
    %p296 = por %p294, %p295
    %p297 = scmp.ne.s32.totalorder %s289, %s291
    %p298 = scmp.eq.s32.totalorder %s26, 15
    %p299 = por %p297, %p298
    %p300 = scmp.ne.s32.totalorder %s291, %s292
    %p301 = scmp.eq.s32.totalorder %s26, 0
    %p302 = por %p300, %p301
    %p303 = scmp.ne.s32.totalorder %s291, %s292
    %p304 = scmp.eq.s32.totalorder %s27, 15
    %p305 = por %p303, %p304
    %p307 = scmp.ne.s32.totalorder %s292, %s306
    %p308 = scmp.eq.s32.totalorder %s27, 0
    %p309 = por %p307, %p308
    %s311 = sadd.s32 %s310, 1
    %p314 = scmp.eq.s32.totalorder %s21, 15
    %p315 = scmp.ne.s32.totalorder %s310, %s312
    %p316 = scmp.eq.s32.totalorder %s21, 0
    %p317 = por %p315, %p316
    %p318 = scmp.ne.s32.totalorder %s310, %s312
    %p319 = scmp.eq.s32.totalorder %s26, 15
    %p320 = por %p318, %p319
    %p321 = scmp.ne.s32.totalorder %s312, %s313
    %p322 = scmp.eq.s32.totalorder %s26, 0
    %p323 = por %p321, %p322
    %p324 = scmp.ne.s32.totalorder %s312, %s313
    %p325 = scmp.eq.s32.totalorder %s27, 15
    %p326 = por %p324, %p325
    %p328 = scmp.ne.s32.totalorder %s313, %s327
    %p329 = scmp.eq.s32.totalorder %s27, 0
    %p330 = por %p328, %p329
    %s332 = sadd.s32 %s331, 1
    %p335 = scmp.eq.s32.totalorder %s21, 15
    %p336 = scmp.ne.s32.totalorder %s331, %s333
    %p337 = scmp.eq.s32.totalorder %s21, 0
    %p338 = por %p336, %p337
    %p339 = scmp.ne.s32.totalorder %s331, %s333
    %p340 = scmp.eq.s32.totalorder %s26, 15
    %p341 = por %p339, %p340
    %p342 = scmp.ne.s32.totalorder %s333, %s334
    %p343 = scmp.eq.s32.totalorder %s26, 0
    %p344 = por %p342, %p343
    %p345 = scmp.ne.s32.totalorder %s333, %s334
    %p346 = scmp.eq.s32.totalorder %s27, 15
    %p347 = por %p345, %p346
    %p349 = scmp.ne.s32.totalorder %s334, %s348
    %p350 = scmp.eq.s32.totalorder %s27, 0
    %p351 = por %p349, %p350
    %s353 = sadd.s32 %s352, 1
    %p356 = scmp.eq.s32.totalorder %s21, 15
    %p357 = scmp.ne.s32.totalorder %s352, %s354
    %p358 = scmp.eq.s32.totalorder %s21, 0
    %p359 = por %p357, %p358
    %p360 = scmp.ne.s32.totalorder %s352, %s354
    %p361 = scmp.eq.s32.totalorder %s26, 15
    %p362 = por %p360, %p361
    %p363 = scmp.ne.s32.totalorder %s354, %s355
    %p364 = scmp.eq.s32.totalorder %s26, 0
    %p365 = por %p363, %p364
    %p366 = scmp.ne.s32.totalorder %s354, %s355
    %p367 = scmp.eq.s32.totalorder %s27, 15
    %p368 = por %p366, %p367
    %p370 = scmp.ne.s32.totalorder %s355, %s369
    %p371 = scmp.eq.s32.totalorder %s27, 0
    %p372 = por %p370, %p371
    %s373 = ssub.s32 %s28, %s40
    %p374 = scmp.eq.s32.totalorder %s373, 0
    %s376 = sadd.s32 %s375, 1
    %s377 = scalar_select %p374, %s375, %s376
    %p380 = pneg %p374
    %p381 = scmp.eq.s32.totalorder %s21, 15
    %p382 = por %p380, %p381
    %p383 = scmp.ne.s32.totalorder %s375, %s378
    %p384 = scmp.eq.s32.totalorder %s21, 0
    %p385 = por %p383, %p384
    %p386 = scmp.ne.s32.totalorder %s375, %s378
    %p387 = scmp.eq.s32.totalorder %s26, 15
    %p388 = por %p386, %p387
    %p389 = scmp.ne.s32.totalorder %s378, %s379
    %p390 = scmp.eq.s32.totalorder %s26, 0
    %p391 = por %p389, %p390
    %p392 = scmp.ne.s32.totalorder %s378, %s379
    %p393 = scmp.eq.s32.totalorder %s27, 15
    %p394 = por %p392, %p393
    %p396 = scmp.ne.s32.totalorder %s379, %s395
    %p397 = scmp.eq.s32.totalorder %s27, 0
    %p398 = por %p396, %p397
    %p399 = scmp.le.s32.totalorder 1, %s21
    %p400 = scmp.lt.s32.totalorder %s21, 17
    %p401 = pnand %p399, %p400
    %p402 = pneg %p401
    // Predicated region
    $region9: #{image_ppo_network_forward.1} parent=5 // pred_check
      _
    $region10: #{image_ppo_network_forward.1} parent=5 // pred_check_branch
      %404 = sbr.rel (%p401) target = $region12
    $region11: #{image_ppo_network_forward.1} parent=5 // pred_region
      %s405 = ssub.s32 %s21, 1
      // Predicated region
      $region13: #{image_ppo_network_forward.1} parent=11 // pred_check
        %p406 = pneg %p87
      $region14: #{image_ppo_network_forward.1} parent=11 // pred_check_branch
        %408 = sbr.rel (%p406) target = $region16
      $region15: #{image_ppo_network_forward.1} parent=11 // pred_region
        %p409 = scmp.lt.s32.totalorder %s30, 0
        %s410 = scalar_select %p409, %s30, 0
        %s411 = smul.addr %s410, 8
        %s412 = scalar_lea.vmem %s1, %s411
      $region16: #{image_ppo_network_forward.1} parent=11 // pred_fallthru
        _
      // Predicated region
      $region17: #{image_ppo_network_forward.1} parent=11 // pred_check
        %p413 = pneg %p108
      $region18: #{image_ppo_network_forward.1} parent=11 // pred_check_branch
        %415 = sbr.rel (%p413) target = $region20
      $region19: #{image_ppo_network_forward.1} parent=11 // pred_region
        _
      $region20: #{image_ppo_network_forward.1} parent=11 // pred_fallthru
        _
      // Predicated region
      $region21: #{image_ppo_network_forward.1} parent=11 // pred_check
        %p416 = pneg %p129
      $region22: #{image_ppo_network_forward.1} parent=11 // pred_check_branch
        %418 = sbr.rel (%p416) target = $region24
      $region23: #{image_ppo_network_forward.1} parent=11 // pred_region
        _
      $region24: #{image_ppo_network_forward.1} parent=11 // pred_fallthru
        _
      // Predicated region
      $region25: #{image_ppo_network_forward.1} parent=11 // pred_check
        %p419 = pneg %p176
      $region26: #{image_ppo_network_forward.1} parent=11 // pred_check_branch
        %421 = sbr.rel (%p419) target = $region28
      $region27: #{image_ppo_network_forward.1} parent=11 // pred_region
        _
      $region28: #{image_ppo_network_forward.1} parent=11 // pred_fallthru
        _
      // Predicated region
      $region29: #{image_ppo_network_forward.1} parent=11 // pred_check
        %p422 = pneg %p197
      $region30: #{image_ppo_network_forward.1} parent=11 // pred_check_branch
        %424 = sbr.rel (%p422) target = $region32
      $region31: #{image_ppo_network_forward.1} parent=11 // pred_region
        _
      $region32: #{image_ppo_network_forward.1} parent=11 // pred_fallthru
        _
      // Predicated region
      $region33: #{image_ppo_network_forward.1} parent=11 // pred_check
        %p425 = pneg %p218
      $region34: #{image_ppo_network_forward.1} parent=11 // pred_check_branch
        %427 = sbr.rel (%p425) target = $region36
      $region35: #{image_ppo_network_forward.1} parent=11 // pred_region
        _
      $region36: #{image_ppo_network_forward.1} parent=11 // pred_fallthru
        _
      // Predicated region
      $region37: #{image_ppo_network_forward.1} parent=11 // pred_check
        %p428 = pneg %p239
      $region38: #{image_ppo_network_forward.1} parent=11 // pred_check_branch
        %430 = sbr.rel (%p428) target = $region40
      $region39: #{image_ppo_network_forward.1} parent=11 // pred_region
        _
      $region40: #{image_ppo_network_forward.1} parent=11 // pred_fallthru
        _
      // Predicated region
      $region41: #{image_ppo_network_forward.1} parent=11 // pred_check
        %p431 = pneg %p260
      $region42: #{image_ppo_network_forward.1} parent=11 // pred_check_branch
        %433 = sbr.rel (%p431) target = $region44
      $region43: #{image_ppo_network_forward.1} parent=11 // pred_region
        _
      $region44: #{image_ppo_network_forward.1} parent=11 // pred_fallthru
        _
      // Predicated region
      $region45: #{image_ppo_network_forward.1} parent=11 // pred_check
        %p434 = pneg %p281
      $region46: #{image_ppo_network_forward.1} parent=11 // pred_check_branch
        %436 = sbr.rel (%p434) target = $region48
      $region47: #{image_ppo_network_forward.1} parent=11 // pred_region
        _
      $region48: #{image_ppo_network_forward.1} parent=11 // pred_fallthru
        _
      // Predicated region
      $region49: #{image_ppo_network_forward.1} parent=11 // pred_check
        %p437 = pneg %p302
      $region50: #{image_ppo_network_forward.1} parent=11 // pred_check_branch
        %439 = sbr.rel (%p437) target = $region52
      $region51: #{image_ppo_network_forward.1} parent=11 // pred_region
        _
      $region52: #{image_ppo_network_forward.1} parent=11 // pred_fallthru
        _
      // Predicated region
      $region53: #{image_ppo_network_forward.1} parent=11 // pred_check
        %p440 = pneg %p323
      $region54: #{image_ppo_network_forward.1} parent=11 // pred_check_branch
        %442 = sbr.rel (%p440) target = $region56
      $region55: #{image_ppo_network_forward.1} parent=11 // pred_region
        _
      $region56: #{image_ppo_network_forward.1} parent=11 // pred_fallthru
        _
      // Predicated region
      $region57: #{image_ppo_network_forward.1} parent=11 // pred_check
        %p443 = pneg %p344
      $region58: #{image_ppo_network_forward.1} parent=11 // pred_check_branch
        %445 = sbr.rel (%p443) target = $region60
      $region59: #{image_ppo_network_forward.1} parent=11 // pred_region
        _
      $region60: #{image_ppo_network_forward.1} parent=11 // pred_fallthru
        _
      // Predicated region
      $region61: #{image_ppo_network_forward.1} parent=11 // pred_check
        %p446 = pneg %p365
      $region62: #{image_ppo_network_forward.1} parent=11 // pred_check_branch
        %448 = sbr.rel (%p446) target = $region64
      $region63: #{image_ppo_network_forward.1} parent=11 // pred_region
        _
      $region64: #{image_ppo_network_forward.1} parent=11 // pred_fallthru
        _
    $region12: #{image_ppo_network_forward.1} parent=5 // pred_fallthru
      _
    %p449 = scmp.lt.s32.totalorder %s21, 16
    // Predicated region
    $region65: #{image_ppo_network_forward.1} parent=5 // pred_check
      %p450 = pneg %p449
    $region66: #{image_ppo_network_forward.1} parent=5 // pred_check_branch
      %452 = sbr.rel (%p450) target = $region68
    $region67: #{image_ppo_network_forward.1} parent=5 // pred_region
      // Predicated region
      $region69: #{image_ppo_network_forward.1} parent=67 // pred_check
        %p453 = pneg %p55
      $region70: #{image_ppo_network_forward.1} parent=67 // pred_check_branch
        %455 = sbr.rel (%p453) target = $region72
      $region71: #{image_ppo_network_forward.1} parent=67 // pred_region
        %p456 = scmp.lt.s32.totalorder %s29, 15
        %s457 = scalar_select %p456, %s29, 15
        %p458 = scmp.lt.s32.totalorder %s28, 0
        %s459 = scalar_select %p458, %s28, 0
        %s460 = smul.addr %s459, 98
        %s461 = smul.addr %s457, 98
        %s462 = sadd.s32 %s460, %s461
        %s463 = smul.addr %s462, 4
        %s464 = scalar_lea.vmem %s0, %s463
      $region72: #{image_ppo_network_forward.1} parent=67 // pred_fallthru
        _
      // Predicated region
      $region73: #{image_ppo_network_forward.1} parent=67 // pred_check
        %p465 = pneg %p149
      $region74: #{image_ppo_network_forward.1} parent=67 // pred_check_branch
        %467 = sbr.rel (%p465) target = $region76
      $region75: #{image_ppo_network_forward.1} parent=67 // pred_region
        %p468 = scmp.lt.s32.totalorder %s29, 15
        %s469 = scalar_select %p468, %s29, 15
        %s470 = smul.addr %s469, 8
        %s471 = smul.addr %s470, 4
        %s472 = scalar_lea.vmem %s4, %s471
      $region76: #{image_ppo_network_forward.1} parent=67 // pred_fallthru
        _
    $region68: #{image_ppo_network_forward.1} parent=5 // pred_fallthru
      _
    %p473 = scmp.le.s32.totalorder 1, %s21
    %p474 = scmp.lt.s32.totalorder %s21, 17
    %p475 = pnand %p473, %p474
    %p476 = pneg %p475
    // Predicated region
    $region77: #{image_ppo_network_forward.1} parent=5 // pred_check
      _
    $region78: #{image_ppo_network_forward.1} parent=5 // pred_check_branch
      %478 = sbr.rel (%p475) target = $region80
    $region79: #{image_ppo_network_forward.1} parent=5 // pred_region
      %s479 = ssub.s32 %s21, 1
      %p480 = scmp.lt.s32.totalorder %s31, 15
      %s481 = scalar_select %p480, %s31, 15
      %p482 = scmp.lt.s32.totalorder %s30, 0
      %s483 = scalar_select %p482, %s30, 0
      %s484 = smul.addr %s483, 98
      %s485 = smul.addr %s481, 98
      %s486 = sadd.s32 %s484, %s485
      %s487 = smul.addr %s486, 4
      %s488 = scalar_lea.vmem %s0, %s487
      %p489 = pneg %p61
      %p490 = pneg %p58
      %p491 = scmp.lt.s32.totalorder %s30, 0
      %s492 = scalar_select %p491, %s30, 0
      %s493 = smul.addr %s492, 8
      %s494 = scalar_lea.vmem %s1, %s493
      %p495 = pneg %p87
      %p496 = pneg %p84
      %p497 = pneg %p108
      %p498 = pneg %p105
      %p499 = pneg %p129
      %p500 = pneg %p126
      %p501 = scmp.lt.s32.totalorder %s31, 15
      %s502 = scalar_select %p501, %s31, 15
      %s503 = smul.addr %s502, 8
      %s504 = smul.addr %s503, 4
      %s505 = scalar_lea.vmem %s4, %s504
      %p506 = pneg %p155
      %p507 = pneg %p152
      %p508 = pneg %p176
      %p509 = pneg %p173
      %p510 = pneg %p197
      %p511 = pneg %p194
      %p512 = pneg %p218
      %p513 = pneg %p215
      %p514 = pneg %p239
      %p515 = pneg %p236
      %p516 = pneg %p260
      %p517 = pneg %p257
      %p518 = pneg %p281
      %p519 = pneg %p278
      %p520 = pneg %p302
      %p521 = pneg %p299
      %p522 = pneg %p323
      %p523 = pneg %p320
      %p524 = pneg %p344
      %p525 = pneg %p341
      %p526 = pneg %p365
      %p527 = pneg %p362
      %p528 = pneg %p391
      %p529 = pneg %p388
      %p530 = scmp.lt.s32.totalorder %s30, 0
      %s531 = scalar_select %p530, %s30, 0
      %s532 = smul.addr %s531, 8
      %s533 = scalar_lea.vmem %s15, %s532
      %p534 = scmp.lt.s32.totalorder %s31, 15
      %s535 = scalar_select %p534, %s31, 15
      %p536 = scmp.lt.s32.totalorder %s30, 0
      %s537 = scalar_select %p536, %s30, 0
      %s538 = smul.addr %s537, 98
      %s539 = smul.addr %s535, 98
      %s540 = sadd.s32 %s538, %s539
      %s541 = smul.addr %s540, 4
      %s542 = scalar_lea.vmem %s0, %s541
      %p543 = scmp.lt.s32.totalorder %s30, 0
      %s544 = scalar_select %p543, %s30, 0
      %s545 = smul.addr %s544, 8
      %s546 = scalar_lea.vmem %s1, %s545
      %p547 = scmp.lt.s32.totalorder %s31, 15
      %s548 = scalar_select %p547, %s31, 15
      %s549 = smul.addr %s548, 8
      %s550 = smul.addr %s549, 4
      %s551 = scalar_lea.vmem %s4, %s550
      %p552 = scmp.lt.s32.totalorder %s30, 0
      %s553 = scalar_select %p552, %s30, 0
      %s554 = smul.addr %s553, 8
      %s555 = scalar_lea.vmem %s15, %s554
      %v557 = vld [vmem:[%s542] sm:$0xff]
      %v558 = vld [vmem:[%s542 + $0x8] sm:$0xff]
      %v559 = vld [vmem:[%s542 + $0x10] sm:$0xff]
      %v560 = vld [vmem:[%s542 + $0x18] sm:$0xff]
      %v561 = vld [vmem:[%s542 + $0x20] sm:$0xff]
      %v562 = vld [vmem:[%s542 + $0x28] sm:$0xff]
      %v563 = vld [vmem:[%s542 + $0x30] sm:$0xff]
      %v564 = vld [vmem:[%s542 + $0x38] sm:$0xff]
      %v565 = vld [vmem:[%s542 + $0x40] sm:$0xff]
      %v566 = vld [vmem:[%s542 + $0x48] sm:$0xff]
      %v567 = vld [vmem:[%s542 + $0x50] sm:$0xff]
      %v568 = vld [vmem:[%s542 + $0x58] sm:$0xff]
      %v569 = vld [vmem:[%s542 + $0x60] sm:$0xff]
      %v570 = vld [vmem:[%s542 + $0x68] sm:$0xff]
      %v571 = vld [vmem:[%s542 + $0x70] sm:$0xff]
      %v572 = vld [vmem:[%s542 + $0x78] sm:$0xff]
      %v573 = vld [vmem:[%s542 + $0x80] sm:$0xff]
      %v574 = vld [vmem:[%s542 + $0x88] sm:$0xff]
      %v575 = vld [vmem:[%s542 + $0x90] sm:$0xff]
      %v576 = vld [vmem:[%s542 + $0x98] sm:$0xff]
      %v577 = vld [vmem:[%s542 + $0xa0] sm:$0xff]
      %v578 = vld [vmem:[%s542 + $0xa8] sm:$0xff]
      %v579 = vld [vmem:[%s542 + $0xb0] sm:$0xff]
      %v580 = vld [vmem:[%s542 + $0xb8] sm:$0xff]
      %v581 = vld [vmem:[%s542 + $0xc0] sm:$0xff]
      %v582 = vld [vmem:[%s542 + $0xc8] sm:$0xff]
      %v583 = vld [vmem:[%s542 + $0xd0] sm:$0xff]
      %v584 = vld [vmem:[%s542 + $0xd8] sm:$0xff]
      %v585 = vld [vmem:[%s542 + $0xe0] sm:$0xff]
      %v586 = vld [vmem:[%s542 + $0xe8] sm:$0xff]
      %v587 = vld [vmem:[%s542 + $0xf0] sm:$0xff]
      %v588 = vld [vmem:[%s542 + $0xf8] sm:$0xff]
      %v589 = vld [vmem:[%s542 + $0x100] sm:$0xff]
      %v590 = vld [vmem:[%s542 + $0x108] sm:$0xff]
      %v591 = vld [vmem:[%s542 + $0x110] sm:$0xff]
      %v592 = vld [vmem:[%s542 + $0x118] sm:$0xff]
      %v593 = vld [vmem:[%s542 + $0x120] sm:$0xff]
      %v594 = vld [vmem:[%s542 + $0x128] sm:$0xff]
      %v595 = vld [vmem:[%s542 + $0x130] sm:$0xff]
      %v596 = vld [vmem:[%s542 + $0x138] sm:$0xff]
      %v597 = vld [vmem:[%s542 + $0x140] sm:$0xff]
      %v598 = vld [vmem:[%s542 + $0x148] sm:$0xff]
      %v599 = vld [vmem:[%s542 + $0x150] sm:$0xff]
      %v600 = vld [vmem:[%s542 + $0x158] sm:$0xff]
      %v601 = vld [vmem:[%s542 + $0x160] sm:$0xff]
      %v602 = vld [vmem:[%s542 + $0x168] sm:$0xff]
      %v603 = vld [vmem:[%s542 + $0x170] sm:$0xff]
      %v604 = vld [vmem:[%s542 + $0x178] sm:$0xff]
      %v605 = vld [vmem:[%s542 + $0x180] sm:$0xff]
      %v606 = vld [vmem:[%s2] sm:$0xf]
      %v607 = vld [vmem:[%s2 + $0x4] sm:$0xf]
      %v608 = vld [vmem:[%s2 + $0x8] sm:$0xf]
      %v609 = vld [vmem:[%s2 + $0xc] sm:$0xf]
      %v610 = vld [vmem:[%s2 + $0x10] sm:$0xf]
      %v611 = vld [vmem:[%s2 + $0x14] sm:$0xf]
      %v612 = vld [vmem:[%s2 + $0x18] sm:$0xf]
      %v613 = vld [vmem:[%s2 + $0x1c] sm:$0xf]
      %v614 = vld [vmem:[%s2 + $0x20] sm:$0xf]
      %v615 = vld [vmem:[%s2 + $0x24] sm:$0xf]
      %v616 = vld [vmem:[%s2 + $0x28] sm:$0xf]
      %v617 = vld [vmem:[%s2 + $0x2c] sm:$0xf]
      %v618 = vld [vmem:[%s2 + $0x30] sm:$0xf]
      %v619 = vld [vmem:[%s2 + $0x34] sm:$0xf]
      %v620 = vld [vmem:[%s2 + $0x38] sm:$0xf]
      %v621 = vld [vmem:[%s2 + $0x3c] sm:$0xf]
      %v622 = vld [vmem:[%s2 + $0x40] sm:$0xf]
      %v623 = vld [vmem:[%s2 + $0x44] sm:$0xf]
      %v624 = vld [vmem:[%s2 + $0x48] sm:$0xf]
      %v625 = vld [vmem:[%s2 + $0x4c] sm:$0xf]
      %v626 = vld [vmem:[%s2 + $0x50] sm:$0xf]
      %v627 = vld [vmem:[%s2 + $0x54] sm:$0xf]
      %v628 = vld [vmem:[%s2 + $0x58] sm:$0xf]
      %v629 = vld [vmem:[%s2 + $0x5c] sm:$0xf]
      %v630 = vld [vmem:[%s3] sm:$0x1]
      %v632 = vlaneseq
      %v633 = vshrl.u32 %v632, 7
      %v634 = vsub.s32 0, %v633
      %v635 = vrot.slane %v630, %v634
      %v686 = vunpack.c.l.b16 %v557
      %v687 = vunpack.c.h.b16 %v557
      %v688 = vunpack.c.l.b16 %v558
      %v689 = vunpack.c.h.b16 %v558
      %v690 = vunpack.c.l.b16 %v559
      %v691 = vunpack.c.h.b16 %v559
      %v692 = vunpack.c.l.b16 %v560
      %v693 = vunpack.c.h.b16 %v560
      %v694 = vunpack.c.l.b16 %v561
      %v695 = vunpack.c.h.b16 %v561
      %v696 = vunpack.c.l.b16 %v562
      %v697 = vunpack.c.h.b16 %v562
      %v698 = vunpack.c.l.b16 %v563
      %v699 = vunpack.c.h.b16 %v563
      %v700 = vunpack.c.l.b16 %v564
      %v701 = vunpack.c.h.b16 %v564
      %v702 = vunpack.c.l.b16 %v565
      %v703 = vunpack.c.h.b16 %v565
      %v704 = vunpack.c.l.b16 %v566
      %v705 = vunpack.c.h.b16 %v566
      %v706 = vunpack.c.l.b16 %v567
      %v707 = vunpack.c.h.b16 %v567
      %v708 = vunpack.c.l.b16 %v568
      %v709 = vunpack.c.h.b16 %v568
      %v710 = vunpack.c.l.b16 %v569
      %v711 = vunpack.c.h.b16 %v569
      %v712 = vunpack.c.l.b16 %v570
      %v713 = vunpack.c.h.b16 %v570
      %v714 = vunpack.c.l.b16 %v571
      %v715 = vunpack.c.h.b16 %v571
      %v716 = vunpack.c.l.b16 %v572
      %v717 = vunpack.c.h.b16 %v572
      %v718 = vunpack.c.l.b16 %v573
      %v719 = vunpack.c.h.b16 %v573
      %v720 = vunpack.c.l.b16 %v574
      %v721 = vunpack.c.h.b16 %v574
      %v722 = vunpack.c.l.b16 %v575
      %v723 = vunpack.c.h.b16 %v575
      %v724 = vunpack.c.l.b16 %v576
      %v725 = vunpack.c.h.b16 %v576
      %v726 = vunpack.c.l.b16 %v577
      %v727 = vunpack.c.h.b16 %v577
      %v728 = vunpack.c.l.b16 %v578
      %v729 = vunpack.c.h.b16 %v578
      %v730 = vunpack.c.l.b16 %v579
      %v731 = vunpack.c.h.b16 %v579
      %v732 = vunpack.c.l.b16 %v580
      %v733 = vunpack.c.h.b16 %v580
      %v734 = vunpack.c.l.b16 %v581
      %v735 = vunpack.c.h.b16 %v581
      %v736 = vunpack.c.l.b16 %v582
      %v737 = vunpack.c.h.b16 %v582
      %v738 = vunpack.c.l.b16 %v583
      %v739 = vunpack.c.h.b16 %v583
      %v740 = vunpack.c.l.b16 %v584
      %v741 = vunpack.c.h.b16 %v584
      %v742 = vunpack.c.l.b16 %v585
      %v743 = vunpack.c.h.b16 %v585
      %v744 = vunpack.c.l.b16 %v586
      %v745 = vunpack.c.h.b16 %v586
      %v746 = vunpack.c.l.b16 %v587
      %v747 = vunpack.c.h.b16 %v587
      %v748 = vunpack.c.l.b16 %v588
      %v749 = vunpack.c.h.b16 %v588
      %v750 = vunpack.c.l.b16 %v589
      %v751 = vunpack.c.h.b16 %v589
      %v752 = vunpack.c.l.b16 %v590
      %v753 = vunpack.c.h.b16 %v590
      %v754 = vunpack.c.l.b16 %v591
      %v755 = vunpack.c.h.b16 %v591
      %v756 = vunpack.c.l.b16 %v592
      %v757 = vunpack.c.h.b16 %v592
      %v758 = vunpack.c.l.b16 %v593
      %v759 = vunpack.c.h.b16 %v593
      %v760 = vunpack.c.l.b16 %v594
      %v761 = vunpack.c.h.b16 %v594
      %v762 = vunpack.c.l.b16 %v595
      %v763 = vunpack.c.h.b16 %v595
      %v764 = vunpack.c.l.b16 %v596
      %v765 = vunpack.c.h.b16 %v596
      %v766 = vunpack.c.l.b16 %v597
      %v767 = vunpack.c.h.b16 %v597
      %v768 = vunpack.c.l.b16 %v598
      %v769 = vunpack.c.h.b16 %v598
      %v770 = vunpack.c.l.b16 %v599
      %v771 = vunpack.c.h.b16 %v599
      %v772 = vunpack.c.l.b16 %v600
      %v773 = vunpack.c.h.b16 %v600
      %v774 = vunpack.c.l.b16 %v601
      %v775 = vunpack.c.h.b16 %v601
      %v776 = vunpack.c.l.b16 %v602
      %v777 = vunpack.c.h.b16 %v602
      %v778 = vunpack.c.l.b16 %v603
      %v779 = vunpack.c.h.b16 %v603
      %v780 = vunpack.c.l.b16 %v604
      %v781 = vunpack.c.h.b16 %v604
      %v782 = vunpack.c.l.b16 %v605
      %v783 = vunpack.c.h.b16 %v605
      %v784 = vpack.c.b16 %v688, %v686
      %v785 = vpack.c.b16 %v689, %v687
      %v786 = vpack.c.b16 %v692, %v690
      %v787 = vpack.c.b16 %v693, %v691
      %v788 = vpack.c.b16 %v696, %v694
      %v789 = vpack.c.b16 %v697, %v695
      %v790 = vpack.c.b16 %v700, %v698
      %v791 = vpack.c.b16 %v701, %v699
      %v792 = vpack.c.b16 %v704, %v702
      %v793 = vpack.c.b16 %v705, %v703
      %v794 = vpack.c.b16 %v708, %v706
      %v795 = vpack.c.b16 %v709, %v707
      %v796 = vpack.c.b16 %v712, %v710
      %v797 = vpack.c.b16 %v713, %v711
      %v798 = vpack.c.b16 %v716, %v714
      %v799 = vpack.c.b16 %v717, %v715
      %v800 = vpack.c.b16 %v720, %v718
      %v801 = vpack.c.b16 %v721, %v719
      %v802 = vpack.c.b16 %v724, %v722
      %v803 = vpack.c.b16 %v725, %v723
      %v804 = vpack.c.b16 %v728, %v726
      %v805 = vpack.c.b16 %v729, %v727
      %v806 = vpack.c.b16 %v732, %v730
      %v807 = vpack.c.b16 %v733, %v731
      %v808 = vpack.c.b16 %v736, %v734
      %v809 = vpack.c.b16 %v737, %v735
      %v810 = vpack.c.b16 %v740, %v738
      %v811 = vpack.c.b16 %v741, %v739
      %v812 = vpack.c.b16 %v744, %v742
      %v813 = vpack.c.b16 %v745, %v743
      %v814 = vpack.c.b16 %v748, %v746
      %v815 = vpack.c.b16 %v749, %v747
      %v816 = vpack.c.b16 %v752, %v750
      %v817 = vpack.c.b16 %v753, %v751
      %v818 = vpack.c.b16 %v756, %v754
      %v819 = vpack.c.b16 %v757, %v755
      %v820 = vpack.c.b16 %v760, %v758
      %v821 = vpack.c.b16 %v761, %v759
      %v822 = vpack.c.b16 %v764, %v762
      %v823 = vpack.c.b16 %v765, %v763
      %v824 = vpack.c.b16 %v768, %v766
      %v825 = vpack.c.b16 %v769, %v767
      %v826 = vpack.c.b16 %v772, %v770
      %v827 = vpack.c.b16 %v773, %v771
      %v828 = vpack.c.b16 %v776, %v774
      %v829 = vpack.c.b16 %v777, %v775
      %v830 = vpack.c.b16 %v780, %v778
      %v831 = vpack.c.b16 %v781, %v779
      %v832 = vpack.c.b16 %v782, %v782
      %v833 = vpack.c.b16 %v783, %v783
      %v883 = vunpack.c.l.b16 %v606
      %v884 = vunpack.c.l.b16 %v607
      %v885 = vunpack.c.l.b16 %v608
      %v886 = vunpack.c.l.b16 %v609
      %v887 = vunpack.c.l.b16 %v610
      %v888 = vunpack.c.l.b16 %v611
      %v889 = vunpack.c.l.b16 %v612
      %v890 = vunpack.c.l.b16 %v613
      %v891 = vunpack.c.l.b16 %v614
      %v892 = vunpack.c.l.b16 %v615
      %v893 = vunpack.c.l.b16 %v616
      %v894 = vunpack.c.l.b16 %v617
      %v895 = vunpack.c.l.b16 %v618
      %v896 = vunpack.c.l.b16 %v619
      %v897 = vunpack.c.l.b16 %v620
      %v898 = vunpack.c.l.b16 %v621
      %v899 = vunpack.c.l.b16 %v622
      %v900 = vunpack.c.l.b16 %v623
      %v901 = vunpack.c.l.b16 %v624
      %v902 = vunpack.c.l.b16 %v625
      %v903 = vunpack.c.l.b16 %v626
      %v904 = vunpack.c.l.b16 %v627
      %v905 = vunpack.c.l.b16 %v628
      %v906 = vunpack.c.l.b16 %v629
      %v907 = vpack.c.b16 %v884, %v883
      %v908 = vpack.c.b16 %v886, %v885
      %v909 = vpack.c.b16 %v888, %v887
      %v910 = vpack.c.b16 %v890, %v889
      %v911 = vpack.c.b16 %v892, %v891
      %v912 = vpack.c.b16 %v894, %v893
      %v913 = vpack.c.b16 %v896, %v895
      %v914 = vpack.c.b16 %v898, %v897
      %v915 = vpack.c.b16 %v900, %v899
      %v916 = vpack.c.b16 %v902, %v901
      %v917 = vpack.c.b16 %v904, %v903
      %v918 = vpack.c.b16 %v906, %v905
      %vm931 = vcmask 523264
      %v933 = vsel %vm931, %v785, 0
      %v936 = vsel %vm931, %v787, 0
      %v939 = vsel %vm931, %v789, 0
      %v942 = vsel %vm931, %v791, 0
      %v945 = vsel %vm931, %v793, 0
      %v948 = vsel %vm931, %v795, 0
      %v951 = vsel %vm931, %v797, 0
      %v954 = vsel %vm931, %v799, 0
      %v957 = vsel %vm931, %v801, 0
      %v960 = vsel %vm931, %v803, 0
      %v963 = vsel %vm931, %v805, 0
      %v966 = vsel %vm931, %v807, 0
      %v969 = vsel %vm931, %v809, 0
      %v972 = vsel %vm931, %v811, 0
      %v975 = vsel %vm931, %v813, 0
      %v978 = vsel %vm931, %v815, 0
      %v981 = vsel %vm931, %v817, 0
      %v984 = vsel %vm931, %v819, 0
      %v987 = vsel %vm931, %v821, 0
      %v990 = vsel %vm931, %v823, 0
      %v993 = vsel %vm931, %v825, 0
      %v996 = vsel %vm931, %v827, 0
      %v999 = vsel %vm931, %v829, 0
      %v1002 = vsel %vm931, %v831, 0
      %v1005 = vsel %vm931, %v833, 0
      %1007 = vmatprep.subr.bf16.mxu0 0
      %1008 = vmatpush1.bf16.msra.mxu0 %v907
      %1009 = vmatprep.subr.bf16.mxu0 0
      %1010 = vmatpush1.bf16.msra.mxu0 %v908
      %1011 = vmatprep.subr.bf16.mxu0 0
      %1012 = vmatpush1.bf16.msra.mxu0 %v909
      %1013 = vmatprep.subr.bf16.mxu0 0
      %1014 = vmatpush1.bf16.msra.mxu0 %v910
      %1015 = vmatprep.subr.bf16.mxu0 0
      %1016 = vmatpush1.bf16.msra.mxu0 %v911
      %1017 = vmatprep.subr.bf16.mxu0 0
      %1018 = vmatpush1.bf16.msra.mxu0 %v912
      %1019 = vmatprep.subr.bf16.mxu0 0
      %1020 = vmatpush1.bf16.msra.mxu0 %v913
      %1021 = vmatprep.subr.bf16.mxu0 0
      %1022 = vmatpush1.bf16.msra.mxu0 %v914
      %1023 = vmatprep.subr.bf16.mxu0 0
      %1024 = vmatpush1.bf16.msra.mxu0 %v915
      %1025 = vmatprep.subr.bf16.mxu0 0
      %1026 = vmatpush1.bf16.msra.mxu0 %v916
      %1027 = vmatprep.subr.bf16.mxu0 0
      %1028 = vmatpush1.bf16.msra.mxu0 %v917
      %1029 = vmatprep.subr.bf16.mxu0 0
      %1030 = vmatpush1.bf16.msra.mxu0 %v918
      %1031 = vmatprep.subr.bf16.mxu0 0
      %1032 = vmatpush1.bf16.msra.mxu0 0
      %1033 = vmatprep.subr.bf16.mxu0 0
      %1034 = vmatpush1.bf16.msra.mxu0 0
      %1035 = vmatprep.subr.bf16.mxu0 0
      %1036 = vmatpush1.bf16.msra.mxu0 0
      %1037 = vmatprep.subr.bf16.mxu0 0
      %1038 = vmatpush1.bf16.msra.mxu0 0
      %1039 = vmatprep.mubr.bf16.mxu0 %v933
      %1040 = vmatmul.mubr.bf16.gmra.mrb[0].mxu0 %v784
      %v1041 = vpop.f32.mrb[0].mxu0
      %v1042 = vadd.f32 %v635, %v1041
      %v1043 = vpop.f32.mrb[0].mxu0
      %v1044 = vpop.f32.mrb[0].mxu0
      %v1045 = vadd.f32 %v635, %v1044
      %v1046 = vpop.f32.mrb[0].mxu0
      %1047 = vmatprep.mubr.bf16.mxu0 %v936
      %1048 = vmatmul.mubr.bf16.gmra.mrb[0].mxu0 %v786
      %v1049 = vpop.f32.mrb[0].mxu0
      %v1050 = vadd.f32 %v635, %v1049
      %v1051 = vpop.f32.mrb[0].mxu0
      %v1052 = vpop.f32.mrb[0].mxu0
      %v1053 = vadd.f32 %v635, %v1052
      %v1054 = vpop.f32.mrb[0].mxu0
      %1055 = vmatprep.mubr.bf16.mxu0 %v939
      %1056 = vmatmul.mubr.bf16.gmra.mrb[0].mxu0 %v788
      %v1057 = vpop.f32.mrb[0].mxu0
      %v1058 = vadd.f32 %v635, %v1057
      %v1059 = vpop.f32.mrb[0].mxu0
      %v1060 = vpop.f32.mrb[0].mxu0
      %v1061 = vadd.f32 %v635, %v1060
      %v1062 = vpop.f32.mrb[0].mxu0
      %1063 = vmatprep.mubr.bf16.mxu0 %v942
      %1064 = vmatmul.mubr.bf16.gmra.mrb[0].mxu0 %v790
      %v1065 = vpop.f32.mrb[0].mxu0
      %v1066 = vadd.f32 %v635, %v1065
      %v1067 = vpop.f32.mrb[0].mxu0
      %v1068 = vpop.f32.mrb[0].mxu0
      %v1069 = vadd.f32 %v635, %v1068
      %v1070 = vpop.f32.mrb[0].mxu0
      %1071 = vmatprep.mubr.bf16.mxu0 %v945
      %1072 = vmatmul.mubr.bf16.gmra.mrb[0].mxu0 %v792
      %v1073 = vpop.f32.mrb[0].mxu0
      %v1074 = vadd.f32 %v635, %v1073
      %v1075 = vpop.f32.mrb[0].mxu0
      %v1076 = vpop.f32.mrb[0].mxu0
      %v1077 = vadd.f32 %v635, %v1076
      %v1078 = vpop.f32.mrb[0].mxu0
      %1079 = vmatprep.mubr.bf16.mxu0 %v948
      %1080 = vmatmul.mubr.bf16.gmra.mrb[0].mxu0 %v794
      %v1081 = vpop.f32.mrb[0].mxu0
      %v1082 = vadd.f32 %v635, %v1081
      %v1083 = vpop.f32.mrb[0].mxu0
      %v1084 = vpop.f32.mrb[0].mxu0
      %v1085 = vadd.f32 %v635, %v1084
      %v1086 = vpop.f32.mrb[0].mxu0
      %1087 = vmatprep.mubr.bf16.mxu0 %v951
      %1088 = vmatmul.mubr.bf16.gmra.mrb[0].mxu0 %v796
      %v1089 = vpop.f32.mrb[0].mxu0
      %v1090 = vadd.f32 %v635, %v1089
      %v1091 = vpop.f32.mrb[0].mxu0
      %v1092 = vpop.f32.mrb[0].mxu0
      %v1093 = vadd.f32 %v635, %v1092
      %v1094 = vpop.f32.mrb[0].mxu0
      %1095 = vmatprep.mubr.bf16.mxu0 %v954
      %1096 = vmatmul.mubr.bf16.gmra.mrb[0].mxu0 %v798
      %v1097 = vpop.f32.mrb[0].mxu0
      %v1098 = vadd.f32 %v635, %v1097
      %v1099 = vpop.f32.mrb[0].mxu0
      %v1100 = vpop.f32.mrb[0].mxu0
      %v1101 = vadd.f32 %v635, %v1100
      %v1102 = vpop.f32.mrb[0].mxu0
      %1103 = vmatprep.mubr.bf16.mxu0 %v957
      %1104 = vmatmul.mubr.bf16.gmra.mrb[0].mxu0 %v800
      %v1105 = vpop.f32.mrb[0].mxu0
      %v1106 = vadd.f32 %v635, %v1105
      %v1107 = vpop.f32.mrb[0].mxu0
      %v1108 = vpop.f32.mrb[0].mxu0
      %v1109 = vadd.f32 %v635, %v1108
      %v1110 = vpop.f32.mrb[0].mxu0
      %1111 = vmatprep.mubr.bf16.mxu0 %v960
      %1112 = vmatmul.mubr.bf16.gmra.mrb[0].mxu0 %v802
      %v1113 = vpop.f32.mrb[0].mxu0
      %v1114 = vadd.f32 %v635, %v1113
      %v1115 = vpop.f32.mrb[0].mxu0
      %v1116 = vpop.f32.mrb[0].mxu0
      %v1117 = vadd.f32 %v635, %v1116
      %v1118 = vpop.f32.mrb[0].mxu0
      %1119 = vmatprep.mubr.bf16.mxu0 %v963
      %1120 = vmatmul.mubr.bf16.gmra.mrb[0].mxu0 %v804
      %v1121 = vpop.f32.mrb[0].mxu0
      %v1122 = vadd.f32 %v635, %v1121
      %v1123 = vpop.f32.mrb[0].mxu0
      %v1124 = vpop.f32.mrb[0].mxu0
      %v1125 = vadd.f32 %v635, %v1124
      %v1126 = vpop.f32.mrb[0].mxu0
      %1127 = vmatprep.mubr.bf16.mxu0 %v966
      %1128 = vmatmul.mubr.bf16.gmra.mrb[0].mxu0 %v806
      %v1129 = vpop.f32.mrb[0].mxu0
      %v1130 = vadd.f32 %v635, %v1129
      %v1131 = vpop.f32.mrb[0].mxu0
      %v1132 = vpop.f32.mrb[0].mxu0
      %v1133 = vadd.f32 %v635, %v1132
      %v1134 = vpop.f32.mrb[0].mxu0
      %1135 = vmatprep.mubr.bf16.mxu0 %v969
      %1136 = vmatmul.mubr.bf16.gmra.mrb[0].mxu0 %v808
      %v1137 = vpop.f32.mrb[0].mxu0
      %v1138 = vadd.f32 %v635, %v1137
      %v1139 = vpop.f32.mrb[0].mxu0
      %v1140 = vpop.f32.mrb[0].mxu0
      %v1141 = vadd.f32 %v635, %v1140
      %v1142 = vpop.f32.mrb[0].mxu0
      %1143 = vmatprep.mubr.bf16.mxu0 %v972
      %1144 = vmatmul.mubr.bf16.gmra.mrb[0].mxu0 %v810
      %v1145 = vpop.f32.mrb[0].mxu0
      %v1146 = vadd.f32 %v635, %v1145
      %v1147 = vpop.f32.mrb[0].mxu0
      %v1148 = vpop.f32.mrb[0].mxu0
      %v1149 = vadd.f32 %v635, %v1148
      %v1150 = vpop.f32.mrb[0].mxu0
      %1151 = vmatprep.mubr.bf16.mxu0 %v975
      %1152 = vmatmul.mubr.bf16.gmra.mrb[0].mxu0 %v812
      %v1153 = vpop.f32.mrb[0].mxu0
      %v1154 = vadd.f32 %v635, %v1153
      %v1155 = vpop.f32.mrb[0].mxu0
      %v1156 = vpop.f32.mrb[0].mxu0
      %v1157 = vadd.f32 %v635, %v1156
      %v1158 = vpop.f32.mrb[0].mxu0
      %1159 = vmatprep.mubr.bf16.mxu0 %v978
      %1160 = vmatmul.mubr.bf16.gmra.mrb[0].mxu0 %v814
      %v1161 = vpop.f32.mrb[0].mxu0
      %v1162 = vadd.f32 %v635, %v1161
      %v1163 = vpop.f32.mrb[0].mxu0
      %v1164 = vpop.f32.mrb[0].mxu0
      %v1165 = vadd.f32 %v635, %v1164
      %v1166 = vpop.f32.mrb[0].mxu0
      %1167 = vmatprep.mubr.bf16.mxu0 %v981
      %1168 = vmatmul.mubr.bf16.gmra.mrb[0].mxu0 %v816
      %v1169 = vpop.f32.mrb[0].mxu0
      %v1170 = vadd.f32 %v635, %v1169
      %v1171 = vpop.f32.mrb[0].mxu0
      %v1172 = vpop.f32.mrb[0].mxu0
      %v1173 = vadd.f32 %v635, %v1172
      %v1174 = vpop.f32.mrb[0].mxu0
      %1175 = vmatprep.mubr.bf16.mxu0 %v984
      %1176 = vmatmul.mubr.bf16.gmra.mrb[0].mxu0 %v818
      %v1177 = vpop.f32.mrb[0].mxu0
      %v1178 = vadd.f32 %v635, %v1177
      %v1179 = vpop.f32.mrb[0].mxu0
      %v1180 = vpop.f32.mrb[0].mxu0
      %v1181 = vadd.f32 %v635, %v1180
      %v1182 = vpop.f32.mrb[0].mxu0
      %1183 = vmatprep.mubr.bf16.mxu0 %v987
      %1184 = vmatmul.mubr.bf16.gmra.mrb[0].mxu0 %v820
      %v1185 = vpop.f32.mrb[0].mxu0
      %v1186 = vadd.f32 %v635, %v1185
      %v1187 = vpop.f32.mrb[0].mxu0
      %v1188 = vpop.f32.mrb[0].mxu0
      %v1189 = vadd.f32 %v635, %v1188
      %v1190 = vpop.f32.mrb[0].mxu0
      %1191 = vmatprep.mubr.bf16.mxu0 %v990
      %1192 = vmatmul.mubr.bf16.gmra.mrb[0].mxu0 %v822
      %v1193 = vpop.f32.mrb[0].mxu0
      %v1194 = vadd.f32 %v635, %v1193
      %v1195 = vpop.f32.mrb[0].mxu0
      %v1196 = vpop.f32.mrb[0].mxu0
      %v1197 = vadd.f32 %v635, %v1196
      %v1198 = vpop.f32.mrb[0].mxu0
      %1199 = vmatprep.mubr.bf16.mxu0 %v993
      %1200 = vmatmul.mubr.bf16.gmra.mrb[0].mxu0 %v824
      %v1201 = vpop.f32.mrb[0].mxu0
      %v1202 = vadd.f32 %v635, %v1201
      %v1203 = vpop.f32.mrb[0].mxu0
      %v1204 = vpop.f32.mrb[0].mxu0
      %v1205 = vadd.f32 %v635, %v1204
      %v1206 = vpop.f32.mrb[0].mxu0
      %1207 = vmatprep.mubr.bf16.mxu0 %v996
      %1208 = vmatmul.mubr.bf16.gmra.mrb[0].mxu0 %v826
      %v1209 = vpop.f32.mrb[0].mxu0
      %v1210 = vadd.f32 %v635, %v1209
      %v1211 = vpop.f32.mrb[0].mxu0
      %v1212 = vpop.f32.mrb[0].mxu0
      %v1213 = vadd.f32 %v635, %v1212
      %v1214 = vpop.f32.mrb[0].mxu0
      %1215 = vmatprep.mubr.bf16.mxu0 %v999
      %1216 = vmatmul.mubr.bf16.gmra.mrb[0].mxu0 %v828
      %v1217 = vpop.f32.mrb[0].mxu0
      %v1218 = vadd.f32 %v635, %v1217
      %v1219 = vpop.f32.mrb[0].mxu0
      %v1220 = vpop.f32.mrb[0].mxu0
      %v1221 = vadd.f32 %v635, %v1220
      %v1222 = vpop.f32.mrb[0].mxu0
      %1223 = vmatprep.mubr.bf16.mxu0 %v1002
      %1224 = vmatmul.mubr.bf16.gmra.mrb[0].mxu0 %v830
      %v1225 = vpop.f32.mrb[0].mxu0
      %v1226 = vadd.f32 %v635, %v1225
      %v1227 = vpop.f32.mrb[0].mxu0
      %v1228 = vpop.f32.mrb[0].mxu0
      %v1229 = vadd.f32 %v635, %v1228
      %v1230 = vpop.f32.mrb[0].mxu0
      %1231 = vmatprep.mubr.bf16.mxu0 %v1005
      %1232 = vmatmul.mubr.bf16.gmra.mrb[0].mxu0 %v832
      %v1233 = vpop.f32.mrb[0].mxu0
      %v1234 = vadd.f32 %v635, %v1233
      %v1235 = vpop.f32.mrb[0].mxu0
      %v1236 = vpop.f32.mrb[0].mxu0
      %v1237 = vpop.f32.mrb[0].mxu0
      %1238 = vdwg.mxu0
      %v1239 = vmax.f32 %v1042, 0.0
      %v1240 = vmax.f32 %v1045, 0.0
      %v1241 = vmax.f32 %v1050, 0.0
      %v1242 = vmax.f32 %v1053, 0.0
      %v1243 = vmax.f32 %v1058, 0.0
      %v1244 = vmax.f32 %v1061, 0.0
      %v1245 = vmax.f32 %v1066, 0.0
      %v1246 = vmax.f32 %v1069, 0.0
      %v1247 = vmax.f32 %v1074, 0.0
      %v1248 = vmax.f32 %v1077, 0.0
      %v1249 = vmax.f32 %v1082, 0.0
      %v1250 = vmax.f32 %v1085, 0.0
      %v1251 = vmax.f32 %v1090, 0.0
      %v1252 = vmax.f32 %v1093, 0.0
      %v1253 = vmax.f32 %v1098, 0.0
      %v1254 = vmax.f32 %v1101, 0.0
      %v1255 = vmax.f32 %v1106, 0.0
      %v1256 = vmax.f32 %v1109, 0.0
      %v1257 = vmax.f32 %v1114, 0.0
      %v1258 = vmax.f32 %v1117, 0.0
      %v1259 = vmax.f32 %v1122, 0.0
      %v1260 = vmax.f32 %v1125, 0.0
      %v1261 = vmax.f32 %v1130, 0.0
      %v1262 = vmax.f32 %v1133, 0.0
      %v1263 = vmax.f32 %v1138, 0.0
      %v1264 = vmax.f32 %v1141, 0.0
      %v1265 = vmax.f32 %v1146, 0.0
      %v1266 = vmax.f32 %v1149, 0.0
      %v1267 = vmax.f32 %v1154, 0.0
      %v1268 = vmax.f32 %v1157, 0.0
      %v1269 = vmax.f32 %v1162, 0.0
      %v1270 = vmax.f32 %v1165, 0.0
      %v1271 = vmax.f32 %v1170, 0.0
      %v1272 = vmax.f32 %v1173, 0.0
      %v1273 = vmax.f32 %v1178, 0.0
      %v1274 = vmax.f32 %v1181, 0.0
      %v1275 = vmax.f32 %v1186, 0.0
      %v1276 = vmax.f32 %v1189, 0.0
      %v1277 = vmax.f32 %v1194, 0.0
      %v1278 = vmax.f32 %v1197, 0.0
      %v1279 = vmax.f32 %v1202, 0.0
      %v1280 = vmax.f32 %v1205, 0.0
      %v1281 = vmax.f32 %v1210, 0.0
      %v1282 = vmax.f32 %v1213, 0.0
      %v1283 = vmax.f32 %v1218, 0.0
      %v1284 = vmax.f32 %v1221, 0.0
      %v1285 = vmax.f32 %v1226, 0.0
      %v1286 = vmax.f32 %v1229, 0.0
      %v1287 = vmax.f32 %v1234, 0.0
      %v1288 = vpack.c.bf16 %v1240, %v1239
      %v1289 = vpack.c.bf16 %v1242, %v1241
      %v1290 = vpack.c.bf16 %v1244, %v1243
      %v1291 = vpack.c.bf16 %v1246, %v1245
      %v1292 = vpack.c.bf16 %v1248, %v1247
      %v1293 = vpack.c.bf16 %v1250, %v1249
      %v1294 = vpack.c.bf16 %v1252, %v1251
      %v1295 = vpack.c.bf16 %v1254, %v1253
      %v1296 = vpack.c.bf16 %v1256, %v1255
      %v1297 = vpack.c.bf16 %v1258, %v1257
      %v1298 = vpack.c.bf16 %v1260, %v1259
      %v1299 = vpack.c.bf16 %v1262, %v1261
      %v1300 = vpack.c.bf16 %v1264, %v1263
      %v1301 = vpack.c.bf16 %v1266, %v1265
      %v1302 = vpack.c.bf16 %v1268, %v1267
      %v1303 = vpack.c.bf16 %v1270, %v1269
      %v1304 = vpack.c.bf16 %v1272, %v1271
      %v1305 = vpack.c.bf16 %v1274, %v1273
      %v1306 = vpack.c.bf16 %v1276, %v1275
      %v1307 = vpack.c.bf16 %v1278, %v1277
      %v1308 = vpack.c.bf16 %v1280, %v1279
      %v1309 = vpack.c.bf16 %v1282, %v1281
      %v1310 = vpack.c.bf16 %v1284, %v1283
      %v1311 = vpack.c.bf16 %v1286, %v1285
      %v1312 = vpack.c.bf16 %v1287, %v1287
      %v1313 = vld [vmem:[%s551] sm:$0xf]
      %v1314 = vld [vmem:[%s551 + $0x4] sm:$0xf]
      %v1315 = vld [vmem:[%s551 + $0x8] sm:$0xf]
      %v1316 = vld [vmem:[%s551 + $0xc] sm:$0xf]
      %v1317 = vld [vmem:[%s551 + $0x10] sm:$0xf]
      %v1318 = vld [vmem:[%s551 + $0x14] sm:$0xf]
      %v1319 = vld [vmem:[%s551 + $0x18] sm:$0xf]
      %v1320 = vld [vmem:[%s551 + $0x1c] sm:$0xf]
      %v1329 = vunpack.c.l.b16 %v1313
      %v1330 = vunpack.c.l.b16 %v1314
      %v1331 = vunpack.c.l.b16 %v1315
      %v1332 = vunpack.c.l.b16 %v1316
      %v1333 = vunpack.c.l.b16 %v1317
      %v1334 = vunpack.c.l.b16 %v1318
      %v1335 = vunpack.c.l.b16 %v1319
      %v1336 = vunpack.c.l.b16 %v1320
      %v1337 = vpack.c.b16 %v1330, %v1329
      %v1338 = vpack.c.b16 %v1332, %v1331
      %v1339 = vpack.c.b16 %v1334, %v1333
      %v1340 = vpack.c.b16 %v1336, %v1335
      %v1346 = vsel %vm931, %v1288, 0
      %v1349 = vsel %vm931, %v1289, 0
      %v1352 = vsel %vm931, %v1290, 0
      %v1355 = vsel %vm931, %v1291, 0
      %v1358 = vsel %vm931, %v1292, 0
      %v1361 = vsel %vm931, %v1293, 0
      %v1364 = vsel %vm931, %v1294, 0
      %v1367 = vsel %vm931, %v1295, 0
      %v1370 = vsel %vm931, %v1296, 0
      %v1373 = vsel %vm931, %v1297, 0
      %v1376 = vsel %vm931, %v1298, 0
      %v1379 = vsel %vm931, %v1299, 0
      %v1382 = vsel %vm931, %v1300, 0
      %v1385 = vsel %vm931, %v1301, 0
      %v1388 = vsel %vm931, %v1302, 0
      %v1391 = vsel %vm931, %v1303, 0
      %v1394 = vsel %vm931, %v1304, 0
      %v1397 = vsel %vm931, %v1305, 0
      %v1400 = vsel %vm931, %v1306, 0
      %v1403 = vsel %vm931, %v1307, 0
      %v1406 = vsel %vm931, %v1308, 0
      %v1409 = vsel %vm931, %v1309, 0
      %v1412 = vsel %vm931, %v1310, 0
      %v1415 = vsel %vm931, %v1311, 0
      %v1418 = vsel %vm931, %v1312, 0
      %1420 = vmatprep.subr.bf16.mxu0 0
      %1421 = vmatpush1.bf16.msra.mxu0 %v1337
      %1422 = vmatprep.subr.bf16.mxu0 0
      %1423 = vmatpush1.bf16.msra.mxu0 %v1338
      %1424 = vmatprep.subr.bf16.mxu0 0
      %1425 = vmatpush1.bf16.msra.mxu0 %v1339
      %1426 = vmatprep.subr.bf16.mxu0 0
      %1427 = vmatpush1.bf16.msra.mxu0 %v1340
      %1428 = vmatprep.subr.bf16.mxu0 0
      %1429 = vmatpush1.bf16.msra.mxu0 0
      %1430 = vmatprep.subr.bf16.mxu0 0
      %1431 = vmatpush1.bf16.msra.mxu0 0
      %1432 = vmatprep.subr.bf16.mxu0 0
      %1433 = vmatpush1.bf16.msra.mxu0 0
      %1434 = vmatprep.subr.bf16.mxu0 0
      %1435 = vmatpush1.bf16.msra.mxu0 0
      %1436 = vmatprep.subr.bf16.mxu0 0
      %1437 = vmatpush1.bf16.msra.mxu0 0
      %1438 = vmatprep.subr.bf16.mxu0 0
      %1439 = vmatpush1.bf16.msra.mxu0 0
      %1440 = vmatprep.subr.bf16.mxu0 0
      %1441 = vmatpush1.bf16.msra.mxu0 0
      %1442 = vmatprep.subr.bf16.mxu0 0
      %1443 = vmatpush1.bf16.msra.mxu0 0
      %1444 = vmatprep.subr.bf16.mxu0 0
      %1445 = vmatpush1.bf16.msra.mxu0 0
      %1446 = vmatprep.subr.bf16.mxu0 0
      %1447 = vmatpush1.bf16.msra.mxu0 0
      %1448 = vmatprep.subr.bf16.mxu0 0
      %1449 = vmatpush1.bf16.msra.mxu0 0
      %1450 = vmatprep.subr.bf16.mxu0 0
      %1451 = vmatpush1.bf16.msra.mxu0 0
      %1452 = vmatprep.mubr.bf16.mxu0 0
      %1453 = vmatmul.mubr.bf16.gmra.mrb[0].mxu0 %v1346
      %v1454 = vpop.f32.mrb[0].mxu0
      %v1455 = vadd.f32 0.0, %v1454
      %v1456 = vpop.f32.mrb[0].mxu0
      %v1457 = vpop.f32.mrb[0].mxu0
      %v1458 = vadd.f32 0.0, %v1457
      %v1459 = vpop.f32.mrb[0].mxu0
      %1460 = vmatprep.mubr.bf16.mxu0 0
      %1461 = vmatmul.mubr.bf16.gmra.mrb[0].mxu0 %v1349
      %v1462 = vpop.f32.mrb[0].mxu0
      %v1463 = vadd.f32 0.0, %v1462
      %v1464 = vpop.f32.mrb[0].mxu0
      %v1465 = vpop.f32.mrb[0].mxu0
      %v1466 = vadd.f32 0.0, %v1465
      %v1467 = vpop.f32.mrb[0].mxu0
      %1468 = vmatprep.mubr.bf16.mxu0 0
      %1469 = vmatmul.mubr.bf16.gmra.mrb[0].mxu0 %v1352
      %v1470 = vpop.f32.mrb[0].mxu0
      %v1471 = vadd.f32 0.0, %v1470
      %v1472 = vpop.f32.mrb[0].mxu0
      %v1473 = vpop.f32.mrb[0].mxu0
      %v1474 = vadd.f32 0.0, %v1473
      %v1475 = vpop.f32.mrb[0].mxu0
      %1476 = vmatprep.mubr.bf16.mxu0 0
      %1477 = vmatmul.mubr.bf16.gmra.mrb[0].mxu0 %v1355
      %v1478 = vpop.f32.mrb[0].mxu0
      %v1479 = vadd.f32 0.0, %v1478
      %v1480 = vpop.f32.mrb[0].mxu0
      %v1481 = vpop.f32.mrb[0].mxu0
      %v1482 = vadd.f32 0.0, %v1481
      %v1483 = vpop.f32.mrb[0].mxu0
      %1484 = vmatprep.mubr.bf16.mxu0 0
      %1485 = vmatmul.mubr.bf16.gmra.mrb[0].mxu0 %v1358
      %v1486 = vpop.f32.mrb[0].mxu0
      %v1487 = vadd.f32 0.0, %v1486
      %v1488 = vpop.f32.mrb[0].mxu0
      %v1489 = vpop.f32.mrb[0].mxu0
      %v1490 = vadd.f32 0.0, %v1489
      %v1491 = vpop.f32.mrb[0].mxu0
      %1492 = vmatprep.mubr.bf16.mxu0 0
      %1493 = vmatmul.mubr.bf16.gmra.mrb[0].mxu0 %v1361
      %v1494 = vpop.f32.mrb[0].mxu0
      %v1495 = vadd.f32 0.0, %v1494
      %v1496 = vpop.f32.mrb[0].mxu0
      %v1497 = vpop.f32.mrb[0].mxu0
      %v1498 = vadd.f32 0.0, %v1497
      %v1499 = vpop.f32.mrb[0].mxu0
      %1500 = vmatprep.mubr.bf16.mxu0 0
      %1501 = vmatmul.mubr.bf16.gmra.mrb[0].mxu0 %v1364
      %v1502 = vpop.f32.mrb[0].mxu0
      %v1503 = vadd.f32 0.0, %v1502
      %v1504 = vpop.f32.mrb[0].mxu0
      %v1505 = vpop.f32.mrb[0].mxu0
      %v1506 = vadd.f32 0.0, %v1505
      %v1507 = vpop.f32.mrb[0].mxu0
      %1508 = vmatprep.mubr.bf16.mxu0 0
      %1509 = vmatmul.mubr.bf16.gmra.mrb[0].mxu0 %v1367
      %v1510 = vpop.f32.mrb[0].mxu0
      %v1511 = vadd.f32 0.0, %v1510
      %v1512 = vpop.f32.mrb[0].mxu0
      %v1513 = vpop.f32.mrb[0].mxu0
      %v1514 = vadd.f32 0.0, %v1513
      %v1515 = vpop.f32.mrb[0].mxu0
      %1516 = vmatprep.mubr.bf16.mxu0 0
      %1517 = vmatmul.mubr.bf16.gmra.mrb[0].mxu0 %v1370
      %v1518 = vpop.f32.mrb[0].mxu0
      %v1519 = vadd.f32 0.0, %v1518
      %v1520 = vpop.f32.mrb[0].mxu0
      %v1521 = vpop.f32.mrb[0].mxu0
      %v1522 = vadd.f32 0.0, %v1521
      %v1523 = vpop.f32.mrb[0].mxu0
      %1524 = vmatprep.mubr.bf16.mxu0 0
      %1525 = vmatmul.mubr.bf16.gmra.mrb[0].mxu0 %v1373
      %v1526 = vpop.f32.mrb[0].mxu0
      %v1527 = vadd.f32 0.0, %v1526
      %v1528 = vpop.f32.mrb[0].mxu0
      %v1529 = vpop.f32.mrb[0].mxu0
      %v1530 = vadd.f32 0.0, %v1529
      %v1531 = vpop.f32.mrb[0].mxu0
      %1532 = vmatprep.mubr.bf16.mxu0 0
      %1533 = vmatmul.mubr.bf16.gmra.mrb[0].mxu0 %v1376
      %v1534 = vpop.f32.mrb[0].mxu0
      %v1535 = vadd.f32 0.0, %v1534
      %v1536 = vpop.f32.mrb[0].mxu0
      %v1537 = vpop.f32.mrb[0].mxu0
      %v1538 = vadd.f32 0.0, %v1537
      %v1539 = vpop.f32.mrb[0].mxu0
      %1540 = vmatprep.mubr.bf16.mxu0 0
      %1541 = vmatmul.mubr.bf16.gmra.mrb[0].mxu0 %v1379
      %v1542 = vpop.f32.mrb[0].mxu0
      %v1543 = vadd.f32 0.0, %v1542
      %v1544 = vpop.f32.mrb[0].mxu0
      %v1545 = vpop.f32.mrb[0].mxu0
      %v1546 = vadd.f32 0.0, %v1545
      %v1547 = vpop.f32.mrb[0].mxu0
      %1548 = vmatprep.mubr.bf16.mxu0 0
      %1549 = vmatmul.mubr.bf16.gmra.mrb[0].mxu0 %v1382
      %v1550 = vpop.f32.mrb[0].mxu0
      %v1551 = vadd.f32 0.0, %v1550
      %v1552 = vpop.f32.mrb[0].mxu0
      %v1553 = vpop.f32.mrb[0].mxu0
      %v1554 = vadd.f32 0.0, %v1553
      %v1555 = vpop.f32.mrb[0].mxu0
      %1556 = vmatprep.mubr.bf16.mxu0 0
      %1557 = vmatmul.mubr.bf16.gmra.mrb[0].mxu0 %v1385
      %v1558 = vpop.f32.mrb[0].mxu0
      %v1559 = vadd.f32 0.0, %v1558
      %v1560 = vpop.f32.mrb[0].mxu0
      %v1561 = vpop.f32.mrb[0].mxu0
      %v1562 = vadd.f32 0.0, %v1561
      %v1563 = vpop.f32.mrb[0].mxu0
      %1564 = vmatprep.mubr.bf16.mxu0 0
      %1565 = vmatmul.mubr.bf16.gmra.mrb[0].mxu0 %v1388
      %v1566 = vpop.f32.mrb[0].mxu0
      %v1567 = vadd.f32 0.0, %v1566
      %v1568 = vpop.f32.mrb[0].mxu0
      %v1569 = vpop.f32.mrb[0].mxu0
      %v1570 = vadd.f32 0.0, %v1569
      %v1571 = vpop.f32.mrb[0].mxu0
      %1572 = vmatprep.mubr.bf16.mxu0 0
      %1573 = vmatmul.mubr.bf16.gmra.mrb[0].mxu0 %v1391
      %v1574 = vpop.f32.mrb[0].mxu0
      %v1575 = vadd.f32 0.0, %v1574
      %v1576 = vpop.f32.mrb[0].mxu0
      %v1577 = vpop.f32.mrb[0].mxu0
      %v1578 = vadd.f32 0.0, %v1577
      %v1579 = vpop.f32.mrb[0].mxu0
      %1580 = vmatprep.mubr.bf16.mxu0 0
      %1581 = vmatmul.mubr.bf16.gmra.mrb[0].mxu0 %v1394
      %v1582 = vpop.f32.mrb[0].mxu0
      %v1583 = vadd.f32 0.0, %v1582
      %v1584 = vpop.f32.mrb[0].mxu0
      %v1585 = vpop.f32.mrb[0].mxu0
      %v1586 = vadd.f32 0.0, %v1585
      %v1587 = vpop.f32.mrb[0].mxu0
      %1588 = vmatprep.mubr.bf16.mxu0 0
      %1589 = vmatmul.mubr.bf16.gmra.mrb[0].mxu0 %v1397
      %v1590 = vpop.f32.mrb[0].mxu0
      %v1591 = vadd.f32 0.0, %v1590
      %v1592 = vpop.f32.mrb[0].mxu0
      %v1593 = vpop.f32.mrb[0].mxu0
      %v1594 = vadd.f32 0.0, %v1593
      %v1595 = vpop.f32.mrb[0].mxu0
      %1596 = vmatprep.mubr.bf16.mxu0 0
      %1597 = vmatmul.mubr.bf16.gmra.mrb[0].mxu0 %v1400
      %v1598 = vpop.f32.mrb[0].mxu0
      %v1599 = vadd.f32 0.0, %v1598
      %v1600 = vpop.f32.mrb[0].mxu0
      %v1601 = vpop.f32.mrb[0].mxu0
      %v1602 = vadd.f32 0.0, %v1601
      %v1603 = vpop.f32.mrb[0].mxu0
      %1604 = vmatprep.mubr.bf16.mxu0 0
      %1605 = vmatmul.mubr.bf16.gmra.mrb[0].mxu0 %v1403
      %v1606 = vpop.f32.mrb[0].mxu0
      %v1607 = vadd.f32 0.0, %v1606
      %v1608 = vpop.f32.mrb[0].mxu0
      %v1609 = vpop.f32.mrb[0].mxu0
      %v1610 = vadd.f32 0.0, %v1609
      %v1611 = vpop.f32.mrb[0].mxu0
      %1612 = vmatprep.mubr.bf16.mxu0 0
      %1613 = vmatmul.mubr.bf16.gmra.mrb[0].mxu0 %v1406
      %v1614 = vpop.f32.mrb[0].mxu0
      %v1615 = vadd.f32 0.0, %v1614
      %v1616 = vpop.f32.mrb[0].mxu0
      %v1617 = vpop.f32.mrb[0].mxu0
      %v1618 = vadd.f32 0.0, %v1617
      %v1619 = vpop.f32.mrb[0].mxu0
      %1620 = vmatprep.mubr.bf16.mxu0 0
      %1621 = vmatmul.mubr.bf16.gmra.mrb[0].mxu0 %v1409
      %v1622 = vpop.f32.mrb[0].mxu0
      %v1623 = vadd.f32 0.0, %v1622
      %v1624 = vpop.f32.mrb[0].mxu0
      %v1625 = vpop.f32.mrb[0].mxu0
      %v1626 = vadd.f32 0.0, %v1625
      %v1627 = vpop.f32.mrb[0].mxu0
      %1628 = vmatprep.mubr.bf16.mxu0 0
      %1629 = vmatmul.mubr.bf16.gmra.mrb[0].mxu0 %v1412
      %v1630 = vpop.f32.mrb[0].mxu0
      %v1631 = vadd.f32 0.0, %v1630
      %v1632 = vpop.f32.mrb[0].mxu0
      %v1633 = vpop.f32.mrb[0].mxu0
      %v1634 = vadd.f32 0.0, %v1633
      %v1635 = vpop.f32.mrb[0].mxu0
      %1636 = vmatprep.mubr.bf16.mxu0 0
      %1637 = vmatmul.mubr.bf16.gmra.mrb[0].mxu0 %v1415
      %v1638 = vpop.f32.mrb[0].mxu0
      %v1639 = vadd.f32 0.0, %v1638
      %v1640 = vpop.f32.mrb[0].mxu0
      %v1641 = vpop.f32.mrb[0].mxu0
      %v1642 = vadd.f32 0.0, %v1641
      %v1643 = vpop.f32.mrb[0].mxu0
      %1644 = vmatprep.mubr.bf16.mxu0 0
      %1645 = vmatmul.mubr.bf16.gmra.mrb[0].mxu0 %v1418
      %v1646 = vpop.f32.mrb[0].mxu0
      %v1647 = vadd.f32 0.0, %v1646
      %v1648 = vpop.f32.mrb[0].mxu0
      %v1649 = vpop.f32.mrb[0].mxu0
      %v1650 = vpop.f32.mrb[0].mxu0
      %1651 = vdwg.mxu0
      %p1652 = scmp.eq.s32.totalorder %s31, 0
      // Predicated region
      $region81: #{image_ppo_network_forward.1} parent=79 // pred_check
        %p1653 = pneg %p1652
      $region82: #{image_ppo_network_forward.1} parent=79 // pred_check_branch
        %1655 = sbr.rel (%p1653) target = $region84
      $region83: #{image_ppo_network_forward.1} parent=79 // pred_region
        %1656 = vst [vmem:[#allocation2] sm:$0xff] %v1455
        %1657 = vst [vmem:[#allocation2 + $0x8] sm:$0xff] %v1458
        %1658 = vst [vmem:[#allocation2 + $0x10] sm:$0xff] %v1463
        %1659 = vst [vmem:[#allocation2 + $0x18] sm:$0xff] %v1466
        %1660 = vst [vmem:[#allocation2 + $0x20] sm:$0xff] %v1471
        %1661 = vst [vmem:[#allocation2 + $0x28] sm:$0xff] %v1474
        %1662 = vst [vmem:[#allocation2 + $0x30] sm:$0xff] %v1479
        %1663 = vst [vmem:[#allocation2 + $0x38] sm:$0xff] %v1482
        %1664 = vst [vmem:[#allocation2 + $0x40] sm:$0xff] %v1487
        %1665 = vst [vmem:[#allocation2 + $0x48] sm:$0xff] %v1490
        %1666 = vst [vmem:[#allocation2 + $0x50] sm:$0xff] %v1495
        %1667 = vst [vmem:[#allocation2 + $0x58] sm:$0xff] %v1498
        %1668 = vst [vmem:[#allocation2 + $0x60] sm:$0xff] %v1503
        %1669 = vst [vmem:[#allocation2 + $0x68] sm:$0xff] %v1506
        %1670 = vst [vmem:[#allocation2 + $0x70] sm:$0xff] %v1511
        %1671 = vst [vmem:[#allocation2 + $0x78] sm:$0xff] %v1514
        %1672 = vst [vmem:[#allocation2 + $0x80] sm:$0xff] %v1519
        %1673 = vst [vmem:[#allocation2 + $0x88] sm:$0xff] %v1522
        %1674 = vst [vmem:[#allocation2 + $0x90] sm:$0xff] %v1527
        %1675 = vst [vmem:[#allocation2 + $0x98] sm:$0xff] %v1530
        %1676 = vst [vmem:[#allocation2 + $0xa0] sm:$0xff] %v1535
        %1677 = vst [vmem:[#allocation2 + $0xa8] sm:$0xff] %v1538
        %1678 = vst [vmem:[#allocation2 + $0xb0] sm:$0xff] %v1543
        %1679 = vst [vmem:[#allocation2 + $0xb8] sm:$0xff] %v1546
        %1680 = vst [vmem:[#allocation2 + $0xc0] sm:$0xff] %v1551
        %1681 = vst [vmem:[#allocation2 + $0xc8] sm:$0xff] %v1554
        %1682 = vst [vmem:[#allocation2 + $0xd0] sm:$0xff] %v1559
        %1683 = vst [vmem:[#allocation2 + $0xd8] sm:$0xff] %v1562
        %1684 = vst [vmem:[#allocation2 + $0xe0] sm:$0xff] %v1567
        %1685 = vst [vmem:[#allocation2 + $0xe8] sm:$0xff] %v1570
        %1686 = vst [vmem:[#allocation2 + $0xf0] sm:$0xff] %v1575
        %1687 = vst [vmem:[#allocation2 + $0xf8] sm:$0xff] %v1578
        %1688 = vst [vmem:[#allocation2 + $0x100] sm:$0xff] %v1583
        %1689 = vst [vmem:[#allocation2 + $0x108] sm:$0xff] %v1586
        %1690 = vst [vmem:[#allocation2 + $0x110] sm:$0xff] %v1591
        %1691 = vst [vmem:[#allocation2 + $0x118] sm:$0xff] %v1594
        %1692 = vst [vmem:[#allocation2 + $0x120] sm:$0xff] %v1599
        %1693 = vst [vmem:[#allocation2 + $0x128] sm:$0xff] %v1602
        %1694 = vst [vmem:[#allocation2 + $0x130] sm:$0xff] %v1607
        %1695 = vst [vmem:[#allocation2 + $0x138] sm:$0xff] %v1610
        %1696 = vst [vmem:[#allocation2 + $0x140] sm:$0xff] %v1615
        %1697 = vst [vmem:[#allocation2 + $0x148] sm:$0xff] %v1618
        %1698 = vst [vmem:[#allocation2 + $0x150] sm:$0xff] %v1623
        %1699 = vst [vmem:[#allocation2 + $0x158] sm:$0xff] %v1626
        %1700 = vst [vmem:[#allocation2 + $0x160] sm:$0xff] %v1631
        %1701 = vst [vmem:[#allocation2 + $0x168] sm:$0xff] %v1634
        %1702 = vst [vmem:[#allocation2 + $0x170] sm:$0xff] %v1639
        %1703 = vst [vmem:[#allocation2 + $0x178] sm:$0xff] %v1642
        %1704 = vst [vmem:[#allocation2 + $0x180] sm:$0xff] %v1647
      $region84: #{image_ppo_network_forward.1} parent=79 // pred_fallthru
        _
      %p1705 = scmp.gt.s32.totalorder %s31, 0
      // Predicated region
      $region85: #{image_ppo_network_forward.1} parent=79 // pred_check
        %p1706 = pneg %p1705
      $region86: #{image_ppo_network_forward.1} parent=79 // pred_check_branch
        %1708 = sbr.rel (%p1706) target = $region88
      $region87: #{image_ppo_network_forward.1} parent=79 // pred_region
        %v1709 = vld [vmem:[#allocation2] sm:$0xff]
        %v1710 = vld [vmem:[#allocation2 + $0x8] sm:$0xff]
        %v1711 = vld [vmem:[#allocation2 + $0x10] sm:$0xff]
        %v1712 = vld [vmem:[#allocation2 + $0x18] sm:$0xff]
        %v1713 = vld [vmem:[#allocation2 + $0x20] sm:$0xff]
        %v1714 = vld [vmem:[#allocation2 + $0x28] sm:$0xff]
        %v1715 = vld [vmem:[#allocation2 + $0x30] sm:$0xff]
        %v1716 = vld [vmem:[#allocation2 + $0x38] sm:$0xff]
        %v1717 = vld [vmem:[#allocation2 + $0x40] sm:$0xff]
        %v1718 = vld [vmem:[#allocation2 + $0x48] sm:$0xff]
        %v1719 = vld [vmem:[#allocation2 + $0x50] sm:$0xff]
        %v1720 = vld [vmem:[#allocation2 + $0x58] sm:$0xff]
        %v1721 = vld [vmem:[#allocation2 + $0x60] sm:$0xff]
        %v1722 = vld [vmem:[#allocation2 + $0x68] sm:$0xff]
        %v1723 = vld [vmem:[#allocation2 + $0x70] sm:$0xff]
        %v1724 = vld [vmem:[#allocation2 + $0x78] sm:$0xff]
        %v1725 = vld [vmem:[#allocation2 + $0x80] sm:$0xff]
        %v1726 = vld [vmem:[#allocation2 + $0x88] sm:$0xff]
        %v1727 = vld [vmem:[#allocation2 + $0x90] sm:$0xff]
        %v1728 = vld [vmem:[#allocation2 + $0x98] sm:$0xff]
        %v1729 = vld [vmem:[#allocation2 + $0xa0] sm:$0xff]
        %v1730 = vld [vmem:[#allocation2 + $0xa8] sm:$0xff]
        %v1731 = vld [vmem:[#allocation2 + $0xb0] sm:$0xff]
        %v1732 = vld [vmem:[#allocation2 + $0xb8] sm:$0xff]
        %v1733 = vld [vmem:[#allocation2 + $0xc0] sm:$0xff]
        %v1734 = vld [vmem:[#allocation2 + $0xc8] sm:$0xff]
        %v1735 = vld [vmem:[#allocation2 + $0xd0] sm:$0xff]
        %v1736 = vld [vmem:[#allocation2 + $0xd8] sm:$0xff]
        %v1737 = vld [vmem:[#allocation2 + $0xe0] sm:$0xff]
        %v1738 = vld [vmem:[#allocation2 + $0xe8] sm:$0xff]
        %v1739 = vld [vmem:[#allocation2 + $0xf0] sm:$0xff]
        %v1740 = vld [vmem:[#allocation2 + $0xf8] sm:$0xff]
        %v1741 = vld [vmem:[#allocation2 + $0x100] sm:$0xff]
        %v1742 = vld [vmem:[#allocation2 + $0x108] sm:$0xff]
        %v1743 = vld [vmem:[#allocation2 + $0x110] sm:$0xff]
        %v1744 = vld [vmem:[#allocation2 + $0x118] sm:$0xff]
        %v1745 = vld [vmem:[#allocation2 + $0x120] sm:$0xff]
        %v1746 = vld [vmem:[#allocation2 + $0x128] sm:$0xff]
        %v1747 = vld [vmem:[#allocation2 + $0x130] sm:$0xff]
        %v1748 = vld [vmem:[#allocation2 + $0x138] sm:$0xff]
        %v1749 = vld [vmem:[#allocation2 + $0x140] sm:$0xff]
        %v1750 = vld [vmem:[#allocation2 + $0x148] sm:$0xff]
        %v1751 = vld [vmem:[#allocation2 + $0x150] sm:$0xff]
        %v1752 = vld [vmem:[#allocation2 + $0x158] sm:$0xff]
        %v1753 = vld [vmem:[#allocation2 + $0x160] sm:$0xff]
        %v1754 = vld [vmem:[#allocation2 + $0x168] sm:$0xff]
        %v1755 = vld [vmem:[#allocation2 + $0x170] sm:$0xff]
        %v1756 = vld [vmem:[#allocation2 + $0x178] sm:$0xff]
        %v1757 = vld [vmem:[#allocation2 + $0x180] sm:$0xff]
        %v1758 = vadd.f32 %v1709, %v1455
        %v1759 = vadd.f32 %v1710, %v1458
        %v1760 = vadd.f32 %v1711, %v1463
        %v1761 = vadd.f32 %v1712, %v1466
        %v1762 = vadd.f32 %v1713, %v1471
        %v1763 = vadd.f32 %v1714, %v1474
        %v1764 = vadd.f32 %v1715, %v1479
        %v1765 = vadd.f32 %v1716, %v1482
        %v1766 = vadd.f32 %v1717, %v1487
        %v1767 = vadd.f32 %v1718, %v1490
        %v1768 = vadd.f32 %v1719, %v1495
        %v1769 = vadd.f32 %v1720, %v1498
        %v1770 = vadd.f32 %v1721, %v1503
        %v1771 = vadd.f32 %v1722, %v1506
        %v1772 = vadd.f32 %v1723, %v1511
        %v1773 = vadd.f32 %v1724, %v1514
        %v1774 = vadd.f32 %v1725, %v1519
        %v1775 = vadd.f32 %v1726, %v1522
        %v1776 = vadd.f32 %v1727, %v1527
        %v1777 = vadd.f32 %v1728, %v1530
        %v1778 = vadd.f32 %v1729, %v1535
        %v1779 = vadd.f32 %v1730, %v1538
        %v1780 = vadd.f32 %v1731, %v1543
        %v1781 = vadd.f32 %v1732, %v1546
        %v1782 = vadd.f32 %v1733, %v1551
        %v1783 = vadd.f32 %v1734, %v1554
        %v1784 = vadd.f32 %v1735, %v1559
        %v1785 = vadd.f32 %v1736, %v1562
        %v1786 = vadd.f32 %v1737, %v1567
        %v1787 = vadd.f32 %v1738, %v1570
        %v1788 = vadd.f32 %v1739, %v1575
        %v1789 = vadd.f32 %v1740, %v1578
        %v1790 = vadd.f32 %v1741, %v1583
        %v1791 = vadd.f32 %v1742, %v1586
        %v1792 = vadd.f32 %v1743, %v1591
        %v1793 = vadd.f32 %v1744, %v1594
        %v1794 = vadd.f32 %v1745, %v1599
        %v1795 = vadd.f32 %v1746, %v1602
        %v1796 = vadd.f32 %v1747, %v1607
        %v1797 = vadd.f32 %v1748, %v1610
        %v1798 = vadd.f32 %v1749, %v1615
        %v1799 = vadd.f32 %v1750, %v1618
        %v1800 = vadd.f32 %v1751, %v1623
        %v1801 = vadd.f32 %v1752, %v1626
        %v1802 = vadd.f32 %v1753, %v1631
        %v1803 = vadd.f32 %v1754, %v1634
        %v1804 = vadd.f32 %v1755, %v1639
        %v1805 = vadd.f32 %v1756, %v1642
        %v1806 = vadd.f32 %v1757, %v1647
        %1807 = vst [vmem:[#allocation2] sm:$0xff] %v1758
        %1808 = vst [vmem:[#allocation2 + $0x8] sm:$0xff] %v1759
        %1809 = vst [vmem:[#allocation2 + $0x10] sm:$0xff] %v1760
        %1810 = vst [vmem:[#allocation2 + $0x18] sm:$0xff] %v1761
        %1811 = vst [vmem:[#allocation2 + $0x20] sm:$0xff] %v1762
        %1812 = vst [vmem:[#allocation2 + $0x28] sm:$0xff] %v1763
        %1813 = vst [vmem:[#allocation2 + $0x30] sm:$0xff] %v1764
        %1814 = vst [vmem:[#allocation2 + $0x38] sm:$0xff] %v1765
        %1815 = vst [vmem:[#allocation2 + $0x40] sm:$0xff] %v1766
        %1816 = vst [vmem:[#allocation2 + $0x48] sm:$0xff] %v1767
        %1817 = vst [vmem:[#allocation2 + $0x50] sm:$0xff] %v1768
        %1818 = vst [vmem:[#allocation2 + $0x58] sm:$0xff] %v1769
        %1819 = vst [vmem:[#allocation2 + $0x60] sm:$0xff] %v1770
        %1820 = vst [vmem:[#allocation2 + $0x68] sm:$0xff] %v1771
        %1821 = vst [vmem:[#allocation2 + $0x70] sm:$0xff] %v1772
        %1822 = vst [vmem:[#allocation2 + $0x78] sm:$0xff] %v1773
        %1823 = vst [vmem:[#allocation2 + $0x80] sm:$0xff] %v1774
        %1824 = vst [vmem:[#allocation2 + $0x88] sm:$0xff] %v1775
        %1825 = vst [vmem:[#allocation2 + $0x90] sm:$0xff] %v1776
        %1826 = vst [vmem:[#allocation2 + $0x98] sm:$0xff] %v1777
        %1827 = vst [vmem:[#allocation2 + $0xa0] sm:$0xff] %v1778
        %1828 = vst [vmem:[#allocation2 + $0xa8] sm:$0xff] %v1779
        %1829 = vst [vmem:[#allocation2 + $0xb0] sm:$0xff] %v1780
        %1830 = vst [vmem:[#allocation2 + $0xb8] sm:$0xff] %v1781
        %1831 = vst [vmem:[#allocation2 + $0xc0] sm:$0xff] %v1782
        %1832 = vst [vmem:[#allocation2 + $0xc8] sm:$0xff] %v1783
        %1833 = vst [vmem:[#allocation2 + $0xd0] sm:$0xff] %v1784
        %1834 = vst [vmem:[#allocation2 + $0xd8] sm:$0xff] %v1785
        %1835 = vst [vmem:[#allocation2 + $0xe0] sm:$0xff] %v1786
        %1836 = vst [vmem:[#allocation2 + $0xe8] sm:$0xff] %v1787
        %1837 = vst [vmem:[#allocation2 + $0xf0] sm:$0xff] %v1788
        %1838 = vst [vmem:[#allocation2 + $0xf8] sm:$0xff] %v1789
        %1839 = vst [vmem:[#allocation2 + $0x100] sm:$0xff] %v1790
        %1840 = vst [vmem:[#allocation2 + $0x108] sm:$0xff] %v1791
        %1841 = vst [vmem:[#allocation2 + $0x110] sm:$0xff] %v1792
        %1842 = vst [vmem:[#allocation2 + $0x118] sm:$0xff] %v1793
        %1843 = vst [vmem:[#allocation2 + $0x120] sm:$0xff] %v1794
        %1844 = vst [vmem:[#allocation2 + $0x128] sm:$0xff] %v1795
        %1845 = vst [vmem:[#allocation2 + $0x130] sm:$0xff] %v1796
        %1846 = vst [vmem:[#allocation2 + $0x138] sm:$0xff] %v1797
        %1847 = vst [vmem:[#allocation2 + $0x140] sm:$0xff] %v1798
        %1848 = vst [vmem:[#allocation2 + $0x148] sm:$0xff] %v1799
        %1849 = vst [vmem:[#allocation2 + $0x150] sm:$0xff] %v1800
        %1850 = vst [vmem:[#allocation2 + $0x158] sm:$0xff] %v1801
        %1851 = vst [vmem:[#allocation2 + $0x160] sm:$0xff] %v1802
        %1852 = vst [vmem:[#allocation2 + $0x168] sm:$0xff] %v1803
        %1853 = vst [vmem:[#allocation2 + $0x170] sm:$0xff] %v1804
        %1854 = vst [vmem:[#allocation2 + $0x178] sm:$0xff] %v1805
        %1855 = vst [vmem:[#allocation2 + $0x180] sm:$0xff] %v1806
      $region88: #{image_ppo_network_forward.1} parent=79 // pred_fallthru
        _
      %p1856 = scmp.eq.s32.totalorder %s31, 15
      // Predicated region
      $region89: #{image_ppo_network_forward.1} parent=79 // pred_check
        %p1857 = pneg %p1856
      $region90: #{image_ppo_network_forward.1} parent=79 // pred_check_branch
        %1859 = sbr.rel (%p1857) target = $region92
      $region91: #{image_ppo_network_forward.1} parent=79 // pred_region
        %v1860 = vld [vmem:[#allocation2] sm:$0xff]
        %v1861 = vld [vmem:[#allocation2 + $0x8] sm:$0xff]
        %v1862 = vld [vmem:[#allocation2 + $0x10] sm:$0xff]
        %v1863 = vld [vmem:[#allocation2 + $0x18] sm:$0xff]
        %v1864 = vld [vmem:[#allocation2 + $0x20] sm:$0xff]
        %v1865 = vld [vmem:[#allocation2 + $0x28] sm:$0xff]
        %v1866 = vld [vmem:[#allocation2 + $0x30] sm:$0xff]
        %v1867 = vld [vmem:[#allocation2 + $0x38] sm:$0xff]
        %v1868 = vld [vmem:[#allocation2 + $0x40] sm:$0xff]
        %v1869 = vld [vmem:[#allocation2 + $0x48] sm:$0xff]
        %v1870 = vld [vmem:[#allocation2 + $0x50] sm:$0xff]
        %v1871 = vld [vmem:[#allocation2 + $0x58] sm:$0xff]
        %v1872 = vld [vmem:[#allocation2 + $0x60] sm:$0xff]
        %v1873 = vld [vmem:[#allocation2 + $0x68] sm:$0xff]
        %v1874 = vld [vmem:[#allocation2 + $0x70] sm:$0xff]
        %v1875 = vld [vmem:[#allocation2 + $0x78] sm:$0xff]
        %v1876 = vld [vmem:[#allocation2 + $0x80] sm:$0xff]
        %v1877 = vld [vmem:[#allocation2 + $0x88] sm:$0xff]
        %v1878 = vld [vmem:[#allocation2 + $0x90] sm:$0xff]
        %v1879 = vld [vmem:[#allocation2 + $0x98] sm:$0xff]
        %v1880 = vld [vmem:[#allocation2 + $0xa0] sm:$0xff]
        %v1881 = vld [vmem:[#allocation2 + $0xa8] sm:$0xff]
        %v1882 = vld [vmem:[#allocation2 + $0xb0] sm:$0xff]
        %v1883 = vld [vmem:[#allocation2 + $0xb8] sm:$0xff]
        %v1884 = vld [vmem:[#allocation2 + $0xc0] sm:$0xff]
        %v1885 = vld [vmem:[#allocation2 + $0xc8] sm:$0xff]
        %v1886 = vld [vmem:[#allocation2 + $0xd0] sm:$0xff]
        %v1887 = vld [vmem:[#allocation2 + $0xd8] sm:$0xff]
        %v1888 = vld [vmem:[#allocation2 + $0xe0] sm:$0xff]
        %v1889 = vld [vmem:[#allocation2 + $0xe8] sm:$0xff]
        %v1890 = vld [vmem:[#allocation2 + $0xf0] sm:$0xff]
        %v1891 = vld [vmem:[#allocation2 + $0xf8] sm:$0xff]
        %v1892 = vld [vmem:[#allocation2 + $0x100] sm:$0xff]
        %v1893 = vld [vmem:[#allocation2 + $0x108] sm:$0xff]
        %v1894 = vld [vmem:[#allocation2 + $0x110] sm:$0xff]
        %v1895 = vld [vmem:[#allocation2 + $0x118] sm:$0xff]
        %v1896 = vld [vmem:[#allocation2 + $0x120] sm:$0xff]
        %v1897 = vld [vmem:[#allocation2 + $0x128] sm:$0xff]
        %v1898 = vld [vmem:[#allocation2 + $0x130] sm:$0xff]
        %v1899 = vld [vmem:[#allocation2 + $0x138] sm:$0xff]
        %v1900 = vld [vmem:[#allocation2 + $0x140] sm:$0xff]
        %v1901 = vld [vmem:[#allocation2 + $0x148] sm:$0xff]
        %v1902 = vld [vmem:[#allocation2 + $0x150] sm:$0xff]
        %v1903 = vld [vmem:[#allocation2 + $0x158] sm:$0xff]
        %v1904 = vld [vmem:[#allocation2 + $0x160] sm:$0xff]
        %v1905 = vld [vmem:[#allocation2 + $0x168] sm:$0xff]
        %v1906 = vld [vmem:[#allocation2 + $0x170] sm:$0xff]
        %v1907 = vld [vmem:[#allocation2 + $0x178] sm:$0xff]
        %v1908 = vld [vmem:[#allocation2 + $0x180] sm:$0xff]
        %v1909 = vld [vmem:[%s5] sm:$0x1]
        %v1911 = vlaneseq
        %v1912 = vshrl.u32 %v1911, 7
        %v1913 = vsub.s32 0, %v1912
        %v1914 = vrot.slane %v1909, %v1913
        %v1916 = vadd.f32 %v1860, %v1914
        %v1917 = vadd.f32 %v1861, %v1914
        %v1918 = vadd.f32 %v1862, %v1914
        %v1919 = vadd.f32 %v1863, %v1914
        %v1920 = vadd.f32 %v1864, %v1914
        %v1921 = vadd.f32 %v1865, %v1914
        %v1922 = vadd.f32 %v1866, %v1914
        %v1923 = vadd.f32 %v1867, %v1914
        %v1924 = vadd.f32 %v1868, %v1914
        %v1925 = vadd.f32 %v1869, %v1914
        %v1926 = vadd.f32 %v1870, %v1914
        %v1927 = vadd.f32 %v1871, %v1914
        %v1928 = vadd.f32 %v1872, %v1914
        %v1929 = vadd.f32 %v1873, %v1914
        %v1930 = vadd.f32 %v1874, %v1914
        %v1931 = vadd.f32 %v1875, %v1914
        %v1932 = vadd.f32 %v1876, %v1914
        %v1933 = vadd.f32 %v1877, %v1914
        %v1934 = vadd.f32 %v1878, %v1914
        %v1935 = vadd.f32 %v1879, %v1914
        %v1936 = vadd.f32 %v1880, %v1914
        %v1937 = vadd.f32 %v1881, %v1914
        %v1938 = vadd.f32 %v1882, %v1914
        %v1939 = vadd.f32 %v1883, %v1914
        %v1940 = vadd.f32 %v1884, %v1914
        %v1941 = vadd.f32 %v1885, %v1914
        %v1942 = vadd.f32 %v1886, %v1914
        %v1943 = vadd.f32 %v1887, %v1914
        %v1944 = vadd.f32 %v1888, %v1914
        %v1945 = vadd.f32 %v1889, %v1914
        %v1946 = vadd.f32 %v1890, %v1914
        %v1947 = vadd.f32 %v1891, %v1914
        %v1948 = vadd.f32 %v1892, %v1914
        %v1949 = vadd.f32 %v1893, %v1914
        %v1950 = vadd.f32 %v1894, %v1914
        %v1951 = vadd.f32 %v1895, %v1914
        %v1952 = vadd.f32 %v1896, %v1914
        %v1953 = vadd.f32 %v1897, %v1914
        %v1954 = vadd.f32 %v1898, %v1914
        %v1955 = vadd.f32 %v1899, %v1914
        %v1956 = vadd.f32 %v1900, %v1914
        %v1957 = vadd.f32 %v1901, %v1914
        %v1958 = vadd.f32 %v1902, %v1914
        %v1959 = vadd.f32 %v1903, %v1914
        %v1960 = vadd.f32 %v1904, %v1914
        %v1961 = vadd.f32 %v1905, %v1914
        %v1962 = vadd.f32 %v1906, %v1914
        %v1963 = vadd.f32 %v1907, %v1914
        %v1964 = vadd.f32 %v1908, %v1914
        %v1965 = vmax.f32 %v1916, 0.0
        %v1966 = vmax.f32 %v1917, 0.0
        %v1967 = vmax.f32 %v1918, 0.0
        %v1968 = vmax.f32 %v1919, 0.0
        %v1969 = vmax.f32 %v1920, 0.0
        %v1970 = vmax.f32 %v1921, 0.0
        %v1971 = vmax.f32 %v1922, 0.0
        %v1972 = vmax.f32 %v1923, 0.0
        %v1973 = vmax.f32 %v1924, 0.0
        %v1974 = vmax.f32 %v1925, 0.0
        %v1975 = vmax.f32 %v1926, 0.0
        %v1976 = vmax.f32 %v1927, 0.0
        %v1977 = vmax.f32 %v1928, 0.0
        %v1978 = vmax.f32 %v1929, 0.0
        %v1979 = vmax.f32 %v1930, 0.0
        %v1980 = vmax.f32 %v1931, 0.0
        %v1981 = vmax.f32 %v1932, 0.0
        %v1982 = vmax.f32 %v1933, 0.0
        %v1983 = vmax.f32 %v1934, 0.0
        %v1984 = vmax.f32 %v1935, 0.0
        %v1985 = vmax.f32 %v1936, 0.0
        %v1986 = vmax.f32 %v1937, 0.0
        %v1987 = vmax.f32 %v1938, 0.0
        %v1988 = vmax.f32 %v1939, 0.0
        %v1989 = vmax.f32 %v1940, 0.0
        %v1990 = vmax.f32 %v1941, 0.0
        %v1991 = vmax.f32 %v1942, 0.0
        %v1992 = vmax.f32 %v1943, 0.0
        %v1993 = vmax.f32 %v1944, 0.0
        %v1994 = vmax.f32 %v1945, 0.0
        %v1995 = vmax.f32 %v1946, 0.0
        %v1996 = vmax.f32 %v1947, 0.0
        %v1997 = vmax.f32 %v1948, 0.0
        %v1998 = vmax.f32 %v1949, 0.0
        %v1999 = vmax.f32 %v1950, 0.0
        %v2000 = vmax.f32 %v1951, 0.0
        %v2001 = vmax.f32 %v1952, 0.0
        %v2002 = vmax.f32 %v1953, 0.0
        %v2003 = vmax.f32 %v1954, 0.0
        %v2004 = vmax.f32 %v1955, 0.0
        %v2005 = vmax.f32 %v1956, 0.0
        %v2006 = vmax.f32 %v1957, 0.0
        %v2007 = vmax.f32 %v1958, 0.0
        %v2008 = vmax.f32 %v1959, 0.0
        %v2009 = vmax.f32 %v1960, 0.0
        %v2010 = vmax.f32 %v1961, 0.0
        %v2011 = vmax.f32 %v1962, 0.0
        %v2012 = vmax.f32 %v1963, 0.0
        %v2013 = vmax.f32 %v1964, 0.0
        %2014 = vst [vmem:[#allocation2] sm:$0xff] %v1965
        %2015 = vst [vmem:[#allocation2 + $0x8] sm:$0xff] %v1966
        %2016 = vst [vmem:[#allocation2 + $0x10] sm:$0xff] %v1967
        %2017 = vst [vmem:[#allocation2 + $0x18] sm:$0xff] %v1968
        %2018 = vst [vmem:[#allocation2 + $0x20] sm:$0xff] %v1969
        %2019 = vst [vmem:[#allocation2 + $0x28] sm:$0xff] %v1970
        %2020 = vst [vmem:[#allocation2 + $0x30] sm:$0xff] %v1971
        %2021 = vst [vmem:[#allocation2 + $0x38] sm:$0xff] %v1972
        %2022 = vst [vmem:[#allocation2 + $0x40] sm:$0xff] %v1973
        %2023 = vst [vmem:[#allocation2 + $0x48] sm:$0xff] %v1974
        %2024 = vst [vmem:[#allocation2 + $0x50] sm:$0xff] %v1975
        %2025 = vst [vmem:[#allocation2 + $0x58] sm:$0xff] %v1976
        %2026 = vst [vmem:[#allocation2 + $0x60] sm:$0xff] %v1977
        %2027 = vst [vmem:[#allocation2 + $0x68] sm:$0xff] %v1978
        %2028 = vst [vmem:[#allocation2 + $0x70] sm:$0xff] %v1979
        %2029 = vst [vmem:[#allocation2 + $0x78] sm:$0xff] %v1980
        %2030 = vst [vmem:[#allocation2 + $0x80] sm:$0xff] %v1981
        %2031 = vst [vmem:[#allocation2 + $0x88] sm:$0xff] %v1982
        %2032 = vst [vmem:[#allocation2 + $0x90] sm:$0xff] %v1983
        %2033 = vst [vmem:[#allocation2 + $0x98] sm:$0xff] %v1984
        %2034 = vst [vmem:[#allocation2 + $0xa0] sm:$0xff] %v1985
        %2035 = vst [vmem:[#allocation2 + $0xa8] sm:$0xff] %v1986
        %2036 = vst [vmem:[#allocation2 + $0xb0] sm:$0xff] %v1987
        %2037 = vst [vmem:[#allocation2 + $0xb8] sm:$0xff] %v1988
        %2038 = vst [vmem:[#allocation2 + $0xc0] sm:$0xff] %v1989
        %2039 = vst [vmem:[#allocation2 + $0xc8] sm:$0xff] %v1990
        %2040 = vst [vmem:[#allocation2 + $0xd0] sm:$0xff] %v1991
        %2041 = vst [vmem:[#allocation2 + $0xd8] sm:$0xff] %v1992
        %2042 = vst [vmem:[#allocation2 + $0xe0] sm:$0xff] %v1993
        %2043 = vst [vmem:[#allocation2 + $0xe8] sm:$0xff] %v1994
        %2044 = vst [vmem:[#allocation2 + $0xf0] sm:$0xff] %v1995
        %2045 = vst [vmem:[#allocation2 + $0xf8] sm:$0xff] %v1996
        %2046 = vst [vmem:[#allocation2 + $0x100] sm:$0xff] %v1997
        %2047 = vst [vmem:[#allocation2 + $0x108] sm:$0xff] %v1998
        %2048 = vst [vmem:[#allocation2 + $0x110] sm:$0xff] %v1999
        %2049 = vst [vmem:[#allocation2 + $0x118] sm:$0xff] %v2000
        %2050 = vst [vmem:[#allocation2 + $0x120] sm:$0xff] %v2001
        %2051 = vst [vmem:[#allocation2 + $0x128] sm:$0xff] %v2002
        %2052 = vst [vmem:[#allocation2 + $0x130] sm:$0xff] %v2003
        %2053 = vst [vmem:[#allocation2 + $0x138] sm:$0xff] %v2004
        %2054 = vst [vmem:[#allocation2 + $0x140] sm:$0xff] %v2005
        %2055 = vst [vmem:[#allocation2 + $0x148] sm:$0xff] %v2006
        %2056 = vst [vmem:[#allocation2 + $0x150] sm:$0xff] %v2007
        %2057 = vst [vmem:[#allocation2 + $0x158] sm:$0xff] %v2008
        %2058 = vst [vmem:[#allocation2 + $0x160] sm:$0xff] %v2009
        %2059 = vst [vmem:[#allocation2 + $0x168] sm:$0xff] %v2010
        %2060 = vst [vmem:[#allocation2 + $0x170] sm:$0xff] %v2011
        %2061 = vst [vmem:[#allocation2 + $0x178] sm:$0xff] %v2012
        %2062 = vst [vmem:[#allocation2 + $0x180] sm:$0xff] %v2013
        %v2063 = vld [vmem:[%s6] sm:$0xf]
        %v2064 = vld [vmem:[%s6 + $0x4] sm:$0xf]
        %v2065 = vld [vmem:[%s6 + $0x8] sm:$0xf]
        %v2066 = vld [vmem:[%s6 + $0xc] sm:$0xf]
        %v2067 = vld [vmem:[%s6 + $0x10] sm:$0xf]
        %v2068 = vld [vmem:[%s6 + $0x14] sm:$0xf]
        %v2069 = vld [vmem:[%s6 + $0x18] sm:$0xf]
        %v2070 = vld [vmem:[%s6 + $0x1c] sm:$0xf]
        %v2071 = vld [vmem:[%s6 + $0x20] sm:$0xf]
        %v2072 = vld [vmem:[%s6 + $0x24] sm:$0xf]
        %v2073 = vld [vmem:[%s6 + $0x28] sm:$0xf]
        %v2074 = vld [vmem:[%s6 + $0x2c] sm:$0xf]
        %v2075 = vld [vmem:[%s6 + $0x30] sm:$0xf]
        %v2076 = vld [vmem:[%s6 + $0x34] sm:$0xf]
        %v2077 = vld [vmem:[%s6 + $0x38] sm:$0xf]
        %v2078 = vld [vmem:[%s6 + $0x3c] sm:$0xf]
        %v2079 = vld [vmem:[#allocation2] sm:$0xff]
        %v2080 = vld [vmem:[#allocation2 + $0x10] sm:$0xff]
        %v2081 = vld [vmem:[#allocation2 + $0x20] sm:$0xff]
        %v2082 = vld [vmem:[#allocation2 + $0x70] sm:$0xff]
        %v2083 = vld [vmem:[#allocation2 + $0x80] sm:$0xff]
        %v2084 = vld [vmem:[#allocation2 + $0x90] sm:$0xff]
        %v2085 = vld [vmem:[#allocation2 + $0xe0] sm:$0xff]
        %v2086 = vld [vmem:[#allocation2 + $0xf0] sm:$0xff]
        %v2087 = vld [vmem:[#allocation2 + $0x100] sm:$0xff]
        %v2088 = vpack.c.bf16 %v2080, %v2079
        %v2089 = vpack.c.bf16 %v2082, %v2081
        %v2090 = vpack.c.bf16 %v2084, %v2083
        %v2091 = vpack.c.bf16 %v2086, %v2085
        %v2092 = vpack.c.bf16 %v2087, %v2087
        %s2093 = scalar_lea.vmem %s6, 64
        %v2094 = vld [vmem:[%s2093] sm:$0xf]
        %v2095 = vld [vmem:[%s2093 + $0x4] sm:$0xf]
        %v2096 = vld [vmem:[%s2093 + $0x8] sm:$0xf]
        %v2097 = vld [vmem:[%s2093 + $0xc] sm:$0xf]
        %v2098 = vld [vmem:[%s2093 + $0x10] sm:$0xf]
        %v2099 = vld [vmem:[%s2093 + $0x14] sm:$0xf]
        %v2100 = vld [vmem:[%s2093 + $0x18] sm:$0xf]
        %v2101 = vld [vmem:[%s2093 + $0x1c] sm:$0xf]
        %v2102 = vld [vmem:[%s2093 + $0x20] sm:$0xf]
        %v2103 = vld [vmem:[%s2093 + $0x24] sm:$0xf]
        %v2104 = vld [vmem:[%s2093 + $0x28] sm:$0xf]
        %v2105 = vld [vmem:[%s2093 + $0x2c] sm:$0xf]
        %v2106 = vld [vmem:[%s2093 + $0x30] sm:$0xf]
        %v2107 = vld [vmem:[%s2093 + $0x34] sm:$0xf]
        %v2108 = vld [vmem:[%s2093 + $0x38] sm:$0xf]
        %v2109 = vld [vmem:[%s2093 + $0x3c] sm:$0xf]
        %v2110 = vld [vmem:[#allocation2 + $0x8] sm:$0xff]
        %v2111 = vld [vmem:[#allocation2 + $0x18] sm:$0xff]
        %v2112 = vld [vmem:[#allocation2 + $0x28] sm:$0xff]
        %v2113 = vld [vmem:[#allocation2 + $0x78] sm:$0xff]
        %v2114 = vld [vmem:[#allocation2 + $0x88] sm:$0xff]
        %v2115 = vld [vmem:[#allocation2 + $0x98] sm:$0xff]
        %v2116 = vld [vmem:[#allocation2 + $0xe8] sm:$0xff]
        %v2117 = vld [vmem:[#allocation2 + $0xf8] sm:$0xff]
        %v2118 = vld [vmem:[#allocation2 + $0x108] sm:$0xff]
        %v2119 = vpack.c.bf16 %v2111, %v2110
        %v2120 = vpack.c.bf16 %v2113, %v2112
        %v2121 = vpack.c.bf16 %v2115, %v2114
        %v2122 = vpack.c.bf16 %v2117, %v2116
        %v2123 = vpack.c.bf16 %v2118, %v2118
        %v2140 = vunpack.c.l.b16 %v2094
        %v2141 = vunpack.c.l.b16 %v2095
        %v2142 = vunpack.c.l.b16 %v2096
        %v2143 = vunpack.c.l.b16 %v2097
        %v2144 = vunpack.c.l.b16 %v2098
        %v2145 = vunpack.c.l.b16 %v2099
        %v2146 = vunpack.c.l.b16 %v2100
        %v2147 = vunpack.c.l.b16 %v2101
        %v2148 = vunpack.c.l.b16 %v2102
        %v2149 = vunpack.c.l.b16 %v2103
        %v2150 = vunpack.c.l.b16 %v2104
        %v2151 = vunpack.c.l.b16 %v2105
        %v2152 = vunpack.c.l.b16 %v2106
        %v2153 = vunpack.c.l.b16 %v2107
        %v2154 = vunpack.c.l.b16 %v2108
        %v2155 = vunpack.c.l.b16 %v2109
        %v2156 = vpack.c.b16 %v2141, %v2140
        %v2157 = vpack.c.b16 %v2143, %v2142
        %v2158 = vpack.c.b16 %v2145, %v2144
        %v2159 = vpack.c.b16 %v2147, %v2146
        %v2160 = vpack.c.b16 %v2149, %v2148
        %v2161 = vpack.c.b16 %v2151, %v2150
        %v2162 = vpack.c.b16 %v2153, %v2152
        %v2163 = vpack.c.b16 %v2155, %v2154
        %2172 = vmatprep.subr.bf16.mxu0 0
        %2173 = vmatpush1.bf16.msra.mxu0 %v2156
        %2174 = vmatprep.subr.bf16.mxu0 0
        %2175 = vmatpush1.bf16.msra.mxu0 %v2157
        %2176 = vmatprep.subr.bf16.mxu0 0
        %2177 = vmatpush1.bf16.msra.mxu0 %v2158
        %2178 = vmatprep.subr.bf16.mxu0 0
        %2179 = vmatpush1.bf16.msra.mxu0 %v2159
        %2180 = vmatprep.subr.bf16.mxu0 0
        %2181 = vmatpush1.bf16.msra.mxu0 %v2160
        %2182 = vmatprep.subr.bf16.mxu0 0
        %2183 = vmatpush1.bf16.msra.mxu0 %v2161
        %2184 = vmatprep.subr.bf16.mxu0 0
        %2185 = vmatpush1.bf16.msra.mxu0 %v2162
        %2186 = vmatprep.subr.bf16.mxu0 0
        %2187 = vmatpush1.bf16.msra.mxu0 %v2163
        %2188 = vmatprep.subr.bf16.mxu0 0
        %2189 = vmatpush1.bf16.msra.mxu0 0
        %2190 = vmatprep.subr.bf16.mxu0 0
        %2191 = vmatpush1.bf16.msra.mxu0 0
        %2192 = vmatprep.subr.bf16.mxu0 0
        %2193 = vmatpush1.bf16.msra.mxu0 0
        %2194 = vmatprep.subr.bf16.mxu0 0
        %2195 = vmatpush1.bf16.msra.mxu0 0
        %2196 = vmatprep.subr.bf16.mxu0 0
        %2197 = vmatpush1.bf16.msra.mxu0 0
        %2198 = vmatprep.subr.bf16.mxu0 0
        %2199 = vmatpush1.bf16.msra.mxu0 0
        %2200 = vmatprep.subr.bf16.mxu0 0
        %2201 = vmatpush1.bf16.msra.mxu0 0
        %2202 = vmatprep.subr.bf16.mxu0 0
        %2203 = vmatpush1.bf16.msra.mxu0 0
        %2204 = vmatprep.mubr.bf16.mxu0 0
        %2205 = vmatmul.mubr.bf16.gmra.mrb[0].mxu0 %v2119
        %v2206 = vpop.f32.mrb[0].mxu0
        %v2207 = vadd.f32 0.0, %v2206
        %v2208 = vpop.f32.mrb[0].mxu0
        %v2209 = vpop.f32.mrb[0].mxu0
        %v2210 = vadd.f32 0.0, %v2209
        %v2211 = vpop.f32.mrb[0].mxu0
        %2212 = vmatprep.mubr.bf16.mxu0 0
        %2213 = vmatmul.mubr.bf16.gmra.mrb[0].mxu0 %v2120
        %v2214 = vpop.f32.mrb[0].mxu0
        %v2215 = vadd.f32 0.0, %v2214
        %v2216 = vpop.f32.mrb[0].mxu0
        %v2217 = vpop.f32.mrb[0].mxu0
        %v2218 = vadd.f32 0.0, %v2217
        %v2219 = vpop.f32.mrb[0].mxu0
        %2220 = vmatprep.mubr.bf16.mxu0 0
        %2221 = vmatmul.mubr.bf16.gmra.mrb[0].mxu0 %v2121
        %v2222 = vpop.f32.mrb[0].mxu0
        %v2223 = vadd.f32 0.0, %v2222
        %v2224 = vpop.f32.mrb[0].mxu0
        %v2225 = vpop.f32.mrb[0].mxu0
        %v2226 = vadd.f32 0.0, %v2225
        %v2227 = vpop.f32.mrb[0].mxu0
        %2228 = vmatprep.mubr.bf16.mxu0 0
        %2229 = vmatmul.mubr.bf16.gmra.mrb[0].mxu0 %v2122
        %v2230 = vpop.f32.mrb[0].mxu0
        %v2231 = vadd.f32 0.0, %v2230
        %v2232 = vpop.f32.mrb[0].mxu0
        %v2233 = vpop.f32.mrb[0].mxu0
        %v2234 = vadd.f32 0.0, %v2233
        %v2235 = vpop.f32.mrb[0].mxu0
        %2236 = vmatprep.mubr.bf16.mxu0 0
        %2237 = vmatmul.mubr.bf16.gmra.mrb[0].mxu0 %v2123
        %v2238 = vpop.f32.mrb[0].mxu0
        %v2239 = vadd.f32 0.0, %v2238
        %v2240 = vpop.f32.mrb[0].mxu0
        %v2241 = vpop.f32.mrb[0].mxu0
        %v2242 = vpop.f32.mrb[0].mxu0
        %2243 = vdwg.mxu0
        %v2260 = vunpack.c.l.b16 %v2063
        %v2261 = vunpack.c.l.b16 %v2064
        %v2262 = vunpack.c.l.b16 %v2065
        %v2263 = vunpack.c.l.b16 %v2066
        %v2264 = vunpack.c.l.b16 %v2067
        %v2265 = vunpack.c.l.b16 %v2068
        %v2266 = vunpack.c.l.b16 %v2069
        %v2267 = vunpack.c.l.b16 %v2070
        %v2268 = vunpack.c.l.b16 %v2071
        %v2269 = vunpack.c.l.b16 %v2072
        %v2270 = vunpack.c.l.b16 %v2073
        %v2271 = vunpack.c.l.b16 %v2074
        %v2272 = vunpack.c.l.b16 %v2075
        %v2273 = vunpack.c.l.b16 %v2076
        %v2274 = vunpack.c.l.b16 %v2077
        %v2275 = vunpack.c.l.b16 %v2078
        %v2276 = vpack.c.b16 %v2261, %v2260
        %v2277 = vpack.c.b16 %v2263, %v2262
        %v2278 = vpack.c.b16 %v2265, %v2264
        %v2279 = vpack.c.b16 %v2267, %v2266
        %v2280 = vpack.c.b16 %v2269, %v2268
        %v2281 = vpack.c.b16 %v2271, %v2270
        %v2282 = vpack.c.b16 %v2273, %v2272
        %v2283 = vpack.c.b16 %v2275, %v2274
        %2292 = vmatprep.subr.bf16.mxu0 0
        %2293 = vmatpush1.bf16.msra.mxu0 %v2276
        %2294 = vmatprep.subr.bf16.mxu0 0
        %2295 = vmatpush1.bf16.msra.mxu0 %v2277
        %2296 = vmatprep.subr.bf16.mxu0 0
        %2297 = vmatpush1.bf16.msra.mxu0 %v2278
        %2298 = vmatprep.subr.bf16.mxu0 0
        %2299 = vmatpush1.bf16.msra.mxu0 %v2279
        %2300 = vmatprep.subr.bf16.mxu0 0
        %2301 = vmatpush1.bf16.msra.mxu0 %v2280
        %2302 = vmatprep.subr.bf16.mxu0 0
        %2303 = vmatpush1.bf16.msra.mxu0 %v2281
        %2304 = vmatprep.subr.bf16.mxu0 0
        %2305 = vmatpush1.bf16.msra.mxu0 %v2282
        %2306 = vmatprep.subr.bf16.mxu0 0
        %2307 = vmatpush1.bf16.msra.mxu0 %v2283
        %2308 = vmatprep.subr.bf16.mxu0 0
        %2309 = vmatpush1.bf16.msra.mxu0 0
        %2310 = vmatprep.subr.bf16.mxu0 0
        %2311 = vmatpush1.bf16.msra.mxu0 0
        %2312 = vmatprep.subr.bf16.mxu0 0
        %2313 = vmatpush1.bf16.msra.mxu0 0
        %2314 = vmatprep.subr.bf16.mxu0 0
        %2315 = vmatpush1.bf16.msra.mxu0 0
        %2316 = vmatprep.subr.bf16.mxu0 0
        %2317 = vmatpush1.bf16.msra.mxu0 0
        %2318 = vmatprep.subr.bf16.mxu0 0
        %2319 = vmatpush1.bf16.msra.mxu0 0
        %2320 = vmatprep.subr.bf16.mxu0 0
        %2321 = vmatpush1.bf16.msra.mxu0 0
        %2322 = vmatprep.subr.bf16.mxu0 0
        %2323 = vmatpush1.bf16.msra.mxu0 0
        %2324 = vmatprep.mubr.bf16.mxu0 0
        %2325 = vmatmul.mubr.bf16.gmra.mrb[0].mxu0 %v2088
        %v2326 = vpop.f32.mrb[0].mxu0
        %v2327 = vadd.f32 %v2207, %v2326
        %v2328 = vpop.f32.mrb[0].mxu0
        %v2329 = vpop.f32.mrb[0].mxu0
        %v2330 = vadd.f32 %v2210, %v2329
        %v2331 = vpop.f32.mrb[0].mxu0
        %2332 = vmatprep.mubr.bf16.mxu0 0
        %2333 = vmatmul.mubr.bf16.gmra.mrb[0].mxu0 %v2089
        %v2334 = vpop.f32.mrb[0].mxu0
        %v2335 = vadd.f32 %v2215, %v2334
        %v2336 = vpop.f32.mrb[0].mxu0
        %v2337 = vpop.f32.mrb[0].mxu0
        %v2338 = vadd.f32 %v2218, %v2337
        %v2339 = vpop.f32.mrb[0].mxu0
        %2340 = vmatprep.mubr.bf16.mxu0 0
        %2341 = vmatmul.mubr.bf16.gmra.mrb[0].mxu0 %v2090
        %v2342 = vpop.f32.mrb[0].mxu0
        %v2343 = vadd.f32 %v2223, %v2342
        %v2344 = vpop.f32.mrb[0].mxu0
        %v2345 = vpop.f32.mrb[0].mxu0
        %v2346 = vadd.f32 %v2226, %v2345
        %v2347 = vpop.f32.mrb[0].mxu0
        %2348 = vmatprep.mubr.bf16.mxu0 0
        %2349 = vmatmul.mubr.bf16.gmra.mrb[0].mxu0 %v2091
        %v2350 = vpop.f32.mrb[0].mxu0
        %v2351 = vadd.f32 %v2231, %v2350
        %v2352 = vpop.f32.mrb[0].mxu0
        %v2353 = vpop.f32.mrb[0].mxu0
        %v2354 = vadd.f32 %v2234, %v2353
        %v2355 = vpop.f32.mrb[0].mxu0
        %2356 = vmatprep.mubr.bf16.mxu0 0
        %2357 = vmatmul.mubr.bf16.gmra.mrb[0].mxu0 %v2092
        %v2358 = vpop.f32.mrb[0].mxu0
        %v2359 = vadd.f32 %v2239, %v2358
        %v2360 = vpop.f32.mrb[0].mxu0
        %v2361 = vpop.f32.mrb[0].mxu0
        %v2362 = vpop.f32.mrb[0].mxu0
        %2363 = vdwg.mxu0
        %s2364 = scalar_lea.vmem %s6, 128
        %v2365 = vld [vmem:[%s2364] sm:$0xf]
        %v2366 = vld [vmem:[%s2364 + $0x4] sm:$0xf]
        %v2367 = vld [vmem:[%s2364 + $0x8] sm:$0xf]
        %v2368 = vld [vmem:[%s2364 + $0xc] sm:$0xf]
        %v2369 = vld [vmem:[%s2364 + $0x10] sm:$0xf]
        %v2370 = vld [vmem:[%s2364 + $0x14] sm:$0xf]
        %v2371 = vld [vmem:[%s2364 + $0x18] sm:$0xf]
        %v2372 = vld [vmem:[%s2364 + $0x1c] sm:$0xf]
        %v2373 = vld [vmem:[%s2364 + $0x20] sm:$0xf]
        %v2374 = vld [vmem:[%s2364 + $0x24] sm:$0xf]
        %v2375 = vld [vmem:[%s2364 + $0x28] sm:$0xf]
        %v2376 = vld [vmem:[%s2364 + $0x2c] sm:$0xf]
        %v2377 = vld [vmem:[%s2364 + $0x30] sm:$0xf]
        %v2378 = vld [vmem:[%s2364 + $0x34] sm:$0xf]
        %v2379 = vld [vmem:[%s2364 + $0x38] sm:$0xf]
        %v2380 = vld [vmem:[%s2364 + $0x3c] sm:$0xf]
        %v2381 = vld [vmem:[#allocation2 + $0x30] sm:$0xff]
        %v2382 = vld [vmem:[#allocation2 + $0xa0] sm:$0xff]
        %v2383 = vld [vmem:[#allocation2 + $0x110] sm:$0xff]
        %v2384 = vpack.c.bf16 %v2081, %v2080
        %v2385 = vpack.c.bf16 %v2083, %v2381
        %v2386 = vpack.c.bf16 %v2382, %v2084
        %v2387 = vpack.c.bf16 %v2087, %v2086
        %v2388 = vpack.c.bf16 %v2383, %v2383
        %v2405 = vunpack.c.l.b16 %v2365
        %v2406 = vunpack.c.l.b16 %v2366
        %v2407 = vunpack.c.l.b16 %v2367
        %v2408 = vunpack.c.l.b16 %v2368
        %v2409 = vunpack.c.l.b16 %v2369
        %v2410 = vunpack.c.l.b16 %v2370
        %v2411 = vunpack.c.l.b16 %v2371
        %v2412 = vunpack.c.l.b16 %v2372
        %v2413 = vunpack.c.l.b16 %v2373
        %v2414 = vunpack.c.l.b16 %v2374
        %v2415 = vunpack.c.l.b16 %v2375
        %v2416 = vunpack.c.l.b16 %v2376
        %v2417 = vunpack.c.l.b16 %v2377
        %v2418 = vunpack.c.l.b16 %v2378
        %v2419 = vunpack.c.l.b16 %v2379
        %v2420 = vunpack.c.l.b16 %v2380
        %v2421 = vpack.c.b16 %v2406, %v2405
        %v2422 = vpack.c.b16 %v2408, %v2407
        %v2423 = vpack.c.b16 %v2410, %v2409
        %v2424 = vpack.c.b16 %v2412, %v2411
        %v2425 = vpack.c.b16 %v2414, %v2413
        %v2426 = vpack.c.b16 %v2416, %v2415
        %v2427 = vpack.c.b16 %v2418, %v2417
        %v2428 = vpack.c.b16 %v2420, %v2419
        %2437 = vmatprep.subr.bf16.mxu0 0
        %2438 = vmatpush1.bf16.msra.mxu0 %v2421
        %2439 = vmatprep.subr.bf16.mxu0 0
        %2440 = vmatpush1.bf16.msra.mxu0 %v2422
        %2441 = vmatprep.subr.bf16.mxu0 0
        %2442 = vmatpush1.bf16.msra.mxu0 %v2423
        %2443 = vmatprep.subr.bf16.mxu0 0
        %2444 = vmatpush1.bf16.msra.mxu0 %v2424
        %2445 = vmatprep.subr.bf16.mxu0 0
        %2446 = vmatpush1.bf16.msra.mxu0 %v2425
        %2447 = vmatprep.subr.bf16.mxu0 0
        %2448 = vmatpush1.bf16.msra.mxu0 %v2426
        %2449 = vmatprep.subr.bf16.mxu0 0
        %2450 = vmatpush1.bf16.msra.mxu0 %v2427
        %2451 = vmatprep.subr.bf16.mxu0 0
        %2452 = vmatpush1.bf16.msra.mxu0 %v2428
        %2453 = vmatprep.subr.bf16.mxu0 0
        %2454 = vmatpush1.bf16.msra.mxu0 0
        %2455 = vmatprep.subr.bf16.mxu0 0
        %2456 = vmatpush1.bf16.msra.mxu0 0
        %2457 = vmatprep.subr.bf16.mxu0 0
        %2458 = vmatpush1.bf16.msra.mxu0 0
        %2459 = vmatprep.subr.bf16.mxu0 0
        %2460 = vmatpush1.bf16.msra.mxu0 0
        %2461 = vmatprep.subr.bf16.mxu0 0
        %2462 = vmatpush1.bf16.msra.mxu0 0
        %2463 = vmatprep.subr.bf16.mxu0 0
        %2464 = vmatpush1.bf16.msra.mxu0 0
        %2465 = vmatprep.subr.bf16.mxu0 0
        %2466 = vmatpush1.bf16.msra.mxu0 0
        %2467 = vmatprep.subr.bf16.mxu0 0
        %2468 = vmatpush1.bf16.msra.mxu0 0
        %2469 = vmatprep.mubr.bf16.mxu0 0
        %2470 = vmatmul.mubr.bf16.gmra.mrb[0].mxu0 %v2384
        %v2471 = vpop.f32.mrb[0].mxu0
        %v2472 = vadd.f32 0.0, %v2471
        %v2473 = vpop.f32.mrb[0].mxu0
        %v2474 = vpop.f32.mrb[0].mxu0
        %v2475 = vadd.f32 0.0, %v2474
        %v2476 = vpop.f32.mrb[0].mxu0
        %2477 = vmatprep.mubr.bf16.mxu0 0
        %2478 = vmatmul.mubr.bf16.gmra.mrb[0].mxu0 %v2385
        %v2479 = vpop.f32.mrb[0].mxu0
        %v2480 = vadd.f32 0.0, %v2479
        %v2481 = vpop.f32.mrb[0].mxu0
        %v2482 = vpop.f32.mrb[0].mxu0
        %v2483 = vadd.f32 0.0, %v2482
        %v2484 = vpop.f32.mrb[0].mxu0
        %2485 = vmatprep.mubr.bf16.mxu0 0
        %2486 = vmatmul.mubr.bf16.gmra.mrb[0].mxu0 %v2386
        %v2487 = vpop.f32.mrb[0].mxu0
        %v2488 = vadd.f32 0.0, %v2487
        %v2489 = vpop.f32.mrb[0].mxu0
        %v2490 = vpop.f32.mrb[0].mxu0
        %v2491 = vadd.f32 0.0, %v2490
        %v2492 = vpop.f32.mrb[0].mxu0
        %2493 = vmatprep.mubr.bf16.mxu0 0
        %2494 = vmatmul.mubr.bf16.gmra.mrb[0].mxu0 %v2387
        %v2495 = vpop.f32.mrb[0].mxu0
        %v2496 = vadd.f32 0.0, %v2495
        %v2497 = vpop.f32.mrb[0].mxu0
        %v2498 = vpop.f32.mrb[0].mxu0
        %v2499 = vadd.f32 0.0, %v2498
        %v2500 = vpop.f32.mrb[0].mxu0
        %2501 = vmatprep.mubr.bf16.mxu0 0
        %2502 = vmatmul.mubr.bf16.gmra.mrb[0].mxu0 %v2388
        %v2503 = vpop.f32.mrb[0].mxu0
        %v2504 = vadd.f32 0.0, %v2503
        %v2505 = vpop.f32.mrb[0].mxu0
        %v2506 = vpop.f32.mrb[0].mxu0
        %v2507 = vpop.f32.mrb[0].mxu0
        %2508 = vdwg.mxu0
        %v2509 = vadd.f32 %v2327, %v2472
        %v2510 = vadd.f32 %v2330, %v2475
        %v2511 = vadd.f32 %v2335, %v2480
        %v2512 = vadd.f32 %v2338, %v2483
        %v2513 = vadd.f32 %v2343, %v2488
        %v2514 = vadd.f32 %v2346, %v2491
        %v2515 = vadd.f32 %v2351, %v2496
        %v2516 = vadd.f32 %v2354, %v2499
        %v2517 = vadd.f32 %v2359, %v2504
        %s2518 = scalar_lea.vmem %s6, 192
        %v2519 = vld [vmem:[%s2518] sm:$0xf]
        %v2520 = vld [vmem:[%s2518 + $0x4] sm:$0xf]
        %v2521 = vld [vmem:[%s2518 + $0x8] sm:$0xf]
        %v2522 = vld [vmem:[%s2518 + $0xc] sm:$0xf]
        %v2523 = vld [vmem:[%s2518 + $0x10] sm:$0xf]
        %v2524 = vld [vmem:[%s2518 + $0x14] sm:$0xf]
        %v2525 = vld [vmem:[%s2518 + $0x18] sm:$0xf]
        %v2526 = vld [vmem:[%s2518 + $0x1c] sm:$0xf]
        %v2527 = vld [vmem:[%s2518 + $0x20] sm:$0xf]
        %v2528 = vld [vmem:[%s2518 + $0x24] sm:$0xf]
        %v2529 = vld [vmem:[%s2518 + $0x28] sm:$0xf]
        %v2530 = vld [vmem:[%s2518 + $0x2c] sm:$0xf]
        %v2531 = vld [vmem:[%s2518 + $0x30] sm:$0xf]
        %v2532 = vld [vmem:[%s2518 + $0x34] sm:$0xf]
        %v2533 = vld [vmem:[%s2518 + $0x38] sm:$0xf]
        %v2534 = vld [vmem:[%s2518 + $0x3c] sm:$0xf]
        %v2535 = vld [vmem:[#allocation2 + $0x38] sm:$0xff]
        %v2536 = vld [vmem:[#allocation2 + $0x48] sm:$0xff]
        %v2537 = vld [vmem:[#allocation2 + $0x58] sm:$0xff]
        %v2538 = vld [vmem:[#allocation2 + $0xa8] sm:$0xff]
        %v2539 = vld [vmem:[#allocation2 + $0xb8] sm:$0xff]
        %v2540 = vld [vmem:[#allocation2 + $0xc8] sm:$0xff]
        %v2541 = vld [vmem:[#allocation2 + $0x118] sm:$0xff]
        %v2542 = vld [vmem:[#allocation2 + $0x128] sm:$0xff]
        %v2543 = vld [vmem:[#allocation2 + $0x138] sm:$0xff]
        %v2544 = vpack.c.bf16 %v2536, %v2535
        %v2545 = vpack.c.bf16 %v2538, %v2537
        %v2546 = vpack.c.bf16 %v2540, %v2539
        %v2547 = vpack.c.bf16 %v2542, %v2541
        %v2548 = vpack.c.bf16 %v2543, %v2543
        %v2565 = vunpack.c.l.b16 %v2519
        %v2566 = vunpack.c.l.b16 %v2520
        %v2567 = vunpack.c.l.b16 %v2521
        %v2568 = vunpack.c.l.b16 %v2522
        %v2569 = vunpack.c.l.b16 %v2523
        %v2570 = vunpack.c.l.b16 %v2524
        %v2571 = vunpack.c.l.b16 %v2525
        %v2572 = vunpack.c.l.b16 %v2526
        %v2573 = vunpack.c.l.b16 %v2527
        %v2574 = vunpack.c.l.b16 %v2528
        %v2575 = vunpack.c.l.b16 %v2529
        %v2576 = vunpack.c.l.b16 %v2530
        %v2577 = vunpack.c.l.b16 %v2531
        %v2578 = vunpack.c.l.b16 %v2532
        %v2579 = vunpack.c.l.b16 %v2533
        %v2580 = vunpack.c.l.b16 %v2534
        %v2581 = vpack.c.b16 %v2566, %v2565
        %v2582 = vpack.c.b16 %v2568, %v2567
        %v2583 = vpack.c.b16 %v2570, %v2569
        %v2584 = vpack.c.b16 %v2572, %v2571
        %v2585 = vpack.c.b16 %v2574, %v2573
        %v2586 = vpack.c.b16 %v2576, %v2575
        %v2587 = vpack.c.b16 %v2578, %v2577
        %v2588 = vpack.c.b16 %v2580, %v2579
        %2597 = vmatprep.subr.bf16.mxu0 0
        %2598 = vmatpush1.bf16.msra.mxu0 %v2581
        %2599 = vmatprep.subr.bf16.mxu0 0
        %2600 = vmatpush1.bf16.msra.mxu0 %v2582
        %2601 = vmatprep.subr.bf16.mxu0 0
        %2602 = vmatpush1.bf16.msra.mxu0 %v2583
        %2603 = vmatprep.subr.bf16.mxu0 0
        %2604 = vmatpush1.bf16.msra.mxu0 %v2584
        %2605 = vmatprep.subr.bf16.mxu0 0
        %2606 = vmatpush1.bf16.msra.mxu0 %v2585
        %2607 = vmatprep.subr.bf16.mxu0 0
        %2608 = vmatpush1.bf16.msra.mxu0 %v2586
        %2609 = vmatprep.subr.bf16.mxu0 0
        %2610 = vmatpush1.bf16.msra.mxu0 %v2587
        %2611 = vmatprep.subr.bf16.mxu0 0
        %2612 = vmatpush1.bf16.msra.mxu0 %v2588
        %2613 = vmatprep.subr.bf16.mxu0 0
        %2614 = vmatpush1.bf16.msra.mxu0 0
        %2615 = vmatprep.subr.bf16.mxu0 0
        %2616 = vmatpush1.bf16.msra.mxu0 0
        %2617 = vmatprep.subr.bf16.mxu0 0
        %2618 = vmatpush1.bf16.msra.mxu0 0
        %2619 = vmatprep.subr.bf16.mxu0 0
        %2620 = vmatpush1.bf16.msra.mxu0 0
        %2621 = vmatprep.subr.bf16.mxu0 0
        %2622 = vmatpush1.bf16.msra.mxu0 0
        %2623 = vmatprep.subr.bf16.mxu0 0
        %2624 = vmatpush1.bf16.msra.mxu0 0
        %2625 = vmatprep.subr.bf16.mxu0 0
        %2626 = vmatpush1.bf16.msra.mxu0 0
        %2627 = vmatprep.subr.bf16.mxu0 0
        %2628 = vmatpush1.bf16.msra.mxu0 0
        %2629 = vmatprep.mubr.bf16.mxu0 0
        %2630 = vmatmul.mubr.bf16.gmra.mrb[0].mxu0 %v2544
        %v2631 = vpop.f32.mrb[0].mxu0
        %v2632 = vadd.f32 0.0, %v2631
        %v2633 = vpop.f32.mrb[0].mxu0
        %v2634 = vpop.f32.mrb[0].mxu0
        %v2635 = vadd.f32 0.0, %v2634
        %v2636 = vpop.f32.mrb[0].mxu0
        %2637 = vmatprep.mubr.bf16.mxu0 0
        %2638 = vmatmul.mubr.bf16.gmra.mrb[0].mxu0 %v2545
        %v2639 = vpop.f32.mrb[0].mxu0
        %v2640 = vadd.f32 0.0, %v2639
        %v2641 = vpop.f32.mrb[0].mxu0
        %v2642 = vpop.f32.mrb[0].mxu0
        %v2643 = vadd.f32 0.0, %v2642
        %v2644 = vpop.f32.mrb[0].mxu0
        %2645 = vmatprep.mubr.bf16.mxu0 0
        %2646 = vmatmul.mubr.bf16.gmra.mrb[0].mxu0 %v2546
        %v2647 = vpop.f32.mrb[0].mxu0
        %v2648 = vadd.f32 0.0, %v2647
        %v2649 = vpop.f32.mrb[0].mxu0
        %v2650 = vpop.f32.mrb[0].mxu0
        %v2651 = vadd.f32 0.0, %v2650
        %v2652 = vpop.f32.mrb[0].mxu0
        %2653 = vmatprep.mubr.bf16.mxu0 0
        %2654 = vmatmul.mubr.bf16.gmra.mrb[0].mxu0 %v2547
        %v2655 = vpop.f32.mrb[0].mxu0
        %v2656 = vadd.f32 0.0, %v2655
        %v2657 = vpop.f32.mrb[0].mxu0
        %v2658 = vpop.f32.mrb[0].mxu0
        %v2659 = vadd.f32 0.0, %v2658
        %v2660 = vpop.f32.mrb[0].mxu0
        %2661 = vmatprep.mubr.bf16.mxu0 0
        %2662 = vmatmul.mubr.bf16.gmra.mrb[0].mxu0 %v2548
        %v2663 = vpop.f32.mrb[0].mxu0
        %v2664 = vadd.f32 0.0, %v2663
        %v2665 = vpop.f32.mrb[0].mxu0
        %v2666 = vpop.f32.mrb[0].mxu0
        %v2667 = vpop.f32.mrb[0].mxu0
        %2668 = vdwg.mxu0
        %v2669 = vadd.f32 %v2509, %v2632
        %v2670 = vadd.f32 %v2510, %v2635
        %v2671 = vadd.f32 %v2511, %v2640
        %v2672 = vadd.f32 %v2512, %v2643
        %v2673 = vadd.f32 %v2513, %v2648
        %v2674 = vadd.f32 %v2514, %v2651
        %v2675 = vadd.f32 %v2515, %v2656
        %v2676 = vadd.f32 %v2516, %v2659
        %v2677 = vadd.f32 %v2517, %v2664
        %s2678 = scalar_lea.vmem %s6, 256
        %v2679 = vld [vmem:[%s2678] sm:$0xf]
        %v2680 = vld [vmem:[%s2678 + $0x4] sm:$0xf]
        %v2681 = vld [vmem:[%s2678 + $0x8] sm:$0xf]
        %v2682 = vld [vmem:[%s2678 + $0xc] sm:$0xf]
        %v2683 = vld [vmem:[%s2678 + $0x10] sm:$0xf]
        %v2684 = vld [vmem:[%s2678 + $0x14] sm:$0xf]
        %v2685 = vld [vmem:[%s2678 + $0x18] sm:$0xf]
        %v2686 = vld [vmem:[%s2678 + $0x1c] sm:$0xf]
        %v2687 = vld [vmem:[%s2678 + $0x20] sm:$0xf]
        %v2688 = vld [vmem:[%s2678 + $0x24] sm:$0xf]
        %v2689 = vld [vmem:[%s2678 + $0x28] sm:$0xf]
        %v2690 = vld [vmem:[%s2678 + $0x2c] sm:$0xf]
        %v2691 = vld [vmem:[%s2678 + $0x30] sm:$0xf]
        %v2692 = vld [vmem:[%s2678 + $0x34] sm:$0xf]
        %v2693 = vld [vmem:[%s2678 + $0x38] sm:$0xf]
        %v2694 = vld [vmem:[%s2678 + $0x3c] sm:$0xf]
        %v2695 = vld [vmem:[#allocation2 + $0x40] sm:$0xff]
        %v2696 = vld [vmem:[#allocation2 + $0x50] sm:$0xff]
        %v2697 = vld [vmem:[#allocation2 + $0x60] sm:$0xff]
        %v2698 = vld [vmem:[#allocation2 + $0xb0] sm:$0xff]
        %v2699 = vld [vmem:[#allocation2 + $0xc0] sm:$0xff]
        %v2700 = vld [vmem:[#allocation2 + $0xd0] sm:$0xff]
        %v2701 = vld [vmem:[#allocation2 + $0x120] sm:$0xff]
        %v2702 = vld [vmem:[#allocation2 + $0x130] sm:$0xff]
        %v2703 = vld [vmem:[#allocation2 + $0x140] sm:$0xff]
        %v2704 = vpack.c.bf16 %v2696, %v2695
        %v2705 = vpack.c.bf16 %v2698, %v2697
        %v2706 = vpack.c.bf16 %v2700, %v2699
        %v2707 = vpack.c.bf16 %v2702, %v2701
        %v2708 = vpack.c.bf16 %v2703, %v2703
        %v2725 = vunpack.c.l.b16 %v2679
        %v2726 = vunpack.c.l.b16 %v2680
        %v2727 = vunpack.c.l.b16 %v2681
        %v2728 = vunpack.c.l.b16 %v2682
        %v2729 = vunpack.c.l.b16 %v2683
        %v2730 = vunpack.c.l.b16 %v2684
        %v2731 = vunpack.c.l.b16 %v2685
        %v2732 = vunpack.c.l.b16 %v2686
        %v2733 = vunpack.c.l.b16 %v2687
        %v2734 = vunpack.c.l.b16 %v2688
        %v2735 = vunpack.c.l.b16 %v2689
        %v2736 = vunpack.c.l.b16 %v2690
        %v2737 = vunpack.c.l.b16 %v2691
        %v2738 = vunpack.c.l.b16 %v2692
        %v2739 = vunpack.c.l.b16 %v2693
        %v2740 = vunpack.c.l.b16 %v2694
        %v2741 = vpack.c.b16 %v2726, %v2725
        %v2742 = vpack.c.b16 %v2728, %v2727
        %v2743 = vpack.c.b16 %v2730, %v2729
        %v2744 = vpack.c.b16 %v2732, %v2731
        %v2745 = vpack.c.b16 %v2734, %v2733
        %v2746 = vpack.c.b16 %v2736, %v2735
        %v2747 = vpack.c.b16 %v2738, %v2737
        %v2748 = vpack.c.b16 %v2740, %v2739
        %2757 = vmatprep.subr.bf16.mxu0 0
        %2758 = vmatpush1.bf16.msra.mxu0 %v2741
        %2759 = vmatprep.subr.bf16.mxu0 0
        %2760 = vmatpush1.bf16.msra.mxu0 %v2742
        %2761 = vmatprep.subr.bf16.mxu0 0
        %2762 = vmatpush1.bf16.msra.mxu0 %v2743
        %2763 = vmatprep.subr.bf16.mxu0 0
        %2764 = vmatpush1.bf16.msra.mxu0 %v2744
        %2765 = vmatprep.subr.bf16.mxu0 0
        %2766 = vmatpush1.bf16.msra.mxu0 %v2745
        %2767 = vmatprep.subr.bf16.mxu0 0
        %2768 = vmatpush1.bf16.msra.mxu0 %v2746
        %2769 = vmatprep.subr.bf16.mxu0 0
        %2770 = vmatpush1.bf16.msra.mxu0 %v2747
        %2771 = vmatprep.subr.bf16.mxu0 0
        %2772 = vmatpush1.bf16.msra.mxu0 %v2748
        %2773 = vmatprep.subr.bf16.mxu0 0
        %2774 = vmatpush1.bf16.msra.mxu0 0
        %2775 = vmatprep.subr.bf16.mxu0 0
        %2776 = vmatpush1.bf16.msra.mxu0 0
        %2777 = vmatprep.subr.bf16.mxu0 0
        %2778 = vmatpush1.bf16.msra.mxu0 0
        %2779 = vmatprep.subr.bf16.mxu0 0
        %2780 = vmatpush1.bf16.msra.mxu0 0
        %2781 = vmatprep.subr.bf16.mxu0 0
        %2782 = vmatpush1.bf16.msra.mxu0 0
        %2783 = vmatprep.subr.bf16.mxu0 0
        %2784 = vmatpush1.bf16.msra.mxu0 0
        %2785 = vmatprep.subr.bf16.mxu0 0
        %2786 = vmatpush1.bf16.msra.mxu0 0
        %2787 = vmatprep.subr.bf16.mxu0 0
        %2788 = vmatpush1.bf16.msra.mxu0 0
        %2789 = vmatprep.mubr.bf16.mxu0 0
        %2790 = vmatmul.mubr.bf16.gmra.mrb[0].mxu0 %v2704
        %v2791 = vpop.f32.mrb[0].mxu0
        %v2792 = vadd.f32 0.0, %v2791
        %v2793 = vpop.f32.mrb[0].mxu0
        %v2794 = vpop.f32.mrb[0].mxu0
        %v2795 = vadd.f32 0.0, %v2794
        %v2796 = vpop.f32.mrb[0].mxu0
        %2797 = vmatprep.mubr.bf16.mxu0 0
        %2798 = vmatmul.mubr.bf16.gmra.mrb[0].mxu0 %v2705
        %v2799 = vpop.f32.mrb[0].mxu0
        %v2800 = vadd.f32 0.0, %v2799
        %v2801 = vpop.f32.mrb[0].mxu0
        %v2802 = vpop.f32.mrb[0].mxu0
        %v2803 = vadd.f32 0.0, %v2802
        %v2804 = vpop.f32.mrb[0].mxu0
        %2805 = vmatprep.mubr.bf16.mxu0 0
        %2806 = vmatmul.mubr.bf16.gmra.mrb[0].mxu0 %v2706
        %v2807 = vpop.f32.mrb[0].mxu0
        %v2808 = vadd.f32 0.0, %v2807
        %v2809 = vpop.f32.mrb[0].mxu0
        %v2810 = vpop.f32.mrb[0].mxu0
        %v2811 = vadd.f32 0.0, %v2810
        %v2812 = vpop.f32.mrb[0].mxu0
        %2813 = vmatprep.mubr.bf16.mxu0 0
        %2814 = vmatmul.mubr.bf16.gmra.mrb[0].mxu0 %v2707
        %v2815 = vpop.f32.mrb[0].mxu0
        %v2816 = vadd.f32 0.0, %v2815
        %v2817 = vpop.f32.mrb[0].mxu0
        %v2818 = vpop.f32.mrb[0].mxu0
        %v2819 = vadd.f32 0.0, %v2818
        %v2820 = vpop.f32.mrb[0].mxu0
        %2821 = vmatprep.mubr.bf16.mxu0 0
        %2822 = vmatmul.mubr.bf16.gmra.mrb[0].mxu0 %v2708
        %v2823 = vpop.f32.mrb[0].mxu0
        %v2824 = vadd.f32 0.0, %v2823
        %v2825 = vpop.f32.mrb[0].mxu0
        %v2826 = vpop.f32.mrb[0].mxu0
        %v2827 = vpop.f32.mrb[0].mxu0
        %2828 = vdwg.mxu0
        %v2829 = vadd.f32 %v2669, %v2792
        %v2830 = vadd.f32 %v2670, %v2795
        %v2831 = vadd.f32 %v2671, %v2800
        %v2832 = vadd.f32 %v2672, %v2803
        %v2833 = vadd.f32 %v2673, %v2808
        %v2834 = vadd.f32 %v2674, %v2811
        %v2835 = vadd.f32 %v2675, %v2816
        %v2836 = vadd.f32 %v2676, %v2819
        %v2837 = vadd.f32 %v2677, %v2824
        %s2838 = scalar_lea.vmem %s6, 320
        %v2839 = vld [vmem:[%s2838] sm:$0xf]
        %v2840 = vld [vmem:[%s2838 + $0x4] sm:$0xf]
        %v2841 = vld [vmem:[%s2838 + $0x8] sm:$0xf]
        %v2842 = vld [vmem:[%s2838 + $0xc] sm:$0xf]
        %v2843 = vld [vmem:[%s2838 + $0x10] sm:$0xf]
        %v2844 = vld [vmem:[%s2838 + $0x14] sm:$0xf]
        %v2845 = vld [vmem:[%s2838 + $0x18] sm:$0xf]
        %v2846 = vld [vmem:[%s2838 + $0x1c] sm:$0xf]
        %v2847 = vld [vmem:[%s2838 + $0x20] sm:$0xf]
        %v2848 = vld [vmem:[%s2838 + $0x24] sm:$0xf]
        %v2849 = vld [vmem:[%s2838 + $0x28] sm:$0xf]
        %v2850 = vld [vmem:[%s2838 + $0x2c] sm:$0xf]
        %v2851 = vld [vmem:[%s2838 + $0x30] sm:$0xf]
        %v2852 = vld [vmem:[%s2838 + $0x34] sm:$0xf]
        %v2853 = vld [vmem:[%s2838 + $0x38] sm:$0xf]
        %v2854 = vld [vmem:[%s2838 + $0x3c] sm:$0xf]
        %v2855 = vld [vmem:[#allocation2 + $0x68] sm:$0xff]
        %v2856 = vld [vmem:[#allocation2 + $0xd8] sm:$0xff]
        %v2857 = vld [vmem:[#allocation2 + $0x148] sm:$0xff]
        %v2858 = vpack.c.bf16 %v2537, %v2536
        %v2859 = vpack.c.bf16 %v2539, %v2855
        %v2860 = vpack.c.bf16 %v2856, %v2540
        %v2861 = vpack.c.bf16 %v2543, %v2542
        %v2862 = vpack.c.bf16 %v2857, %v2857
        %v2879 = vunpack.c.l.b16 %v2839
        %v2880 = vunpack.c.l.b16 %v2840
        %v2881 = vunpack.c.l.b16 %v2841
        %v2882 = vunpack.c.l.b16 %v2842
        %v2883 = vunpack.c.l.b16 %v2843
        %v2884 = vunpack.c.l.b16 %v2844
        %v2885 = vunpack.c.l.b16 %v2845
        %v2886 = vunpack.c.l.b16 %v2846
        %v2887 = vunpack.c.l.b16 %v2847
        %v2888 = vunpack.c.l.b16 %v2848
        %v2889 = vunpack.c.l.b16 %v2849
        %v2890 = vunpack.c.l.b16 %v2850
        %v2891 = vunpack.c.l.b16 %v2851
        %v2892 = vunpack.c.l.b16 %v2852
        %v2893 = vunpack.c.l.b16 %v2853
        %v2894 = vunpack.c.l.b16 %v2854
        %v2895 = vpack.c.b16 %v2880, %v2879
        %v2896 = vpack.c.b16 %v2882, %v2881
        %v2897 = vpack.c.b16 %v2884, %v2883
        %v2898 = vpack.c.b16 %v2886, %v2885
        %v2899 = vpack.c.b16 %v2888, %v2887
        %v2900 = vpack.c.b16 %v2890, %v2889
        %v2901 = vpack.c.b16 %v2892, %v2891
        %v2902 = vpack.c.b16 %v2894, %v2893
        %2911 = vmatprep.subr.bf16.mxu0 0
        %2912 = vmatpush1.bf16.msra.mxu0 %v2895
        %2913 = vmatprep.subr.bf16.mxu0 0
        %2914 = vmatpush1.bf16.msra.mxu0 %v2896
        %2915 = vmatprep.subr.bf16.mxu0 0
        %2916 = vmatpush1.bf16.msra.mxu0 %v2897
        %2917 = vmatprep.subr.bf16.mxu0 0
        %2918 = vmatpush1.bf16.msra.mxu0 %v2898
        %2919 = vmatprep.subr.bf16.mxu0 0
        %2920 = vmatpush1.bf16.msra.mxu0 %v2899
        %2921 = vmatprep.subr.bf16.mxu0 0
        %2922 = vmatpush1.bf16.msra.mxu0 %v2900
        %2923 = vmatprep.subr.bf16.mxu0 0
        %2924 = vmatpush1.bf16.msra.mxu0 %v2901
        %2925 = vmatprep.subr.bf16.mxu0 0
        %2926 = vmatpush1.bf16.msra.mxu0 %v2902
        %2927 = vmatprep.subr.bf16.mxu0 0
        %2928 = vmatpush1.bf16.msra.mxu0 0
        %2929 = vmatprep.subr.bf16.mxu0 0
        %2930 = vmatpush1.bf16.msra.mxu0 0
        %2931 = vmatprep.subr.bf16.mxu0 0
        %2932 = vmatpush1.bf16.msra.mxu0 0
        %2933 = vmatprep.subr.bf16.mxu0 0
        %2934 = vmatpush1.bf16.msra.mxu0 0
        %2935 = vmatprep.subr.bf16.mxu0 0
        %2936 = vmatpush1.bf16.msra.mxu0 0
        %2937 = vmatprep.subr.bf16.mxu0 0
        %2938 = vmatpush1.bf16.msra.mxu0 0
        %2939 = vmatprep.subr.bf16.mxu0 0
        %2940 = vmatpush1.bf16.msra.mxu0 0
        %2941 = vmatprep.subr.bf16.mxu0 0
        %2942 = vmatpush1.bf16.msra.mxu0 0
        %2943 = vmatprep.mubr.bf16.mxu0 0
        %2944 = vmatmul.mubr.bf16.gmra.mrb[0].mxu0 %v2858
        %v2945 = vpop.f32.mrb[0].mxu0
        %v2946 = vadd.f32 0.0, %v2945
        %v2947 = vpop.f32.mrb[0].mxu0
        %v2948 = vpop.f32.mrb[0].mxu0
        %v2949 = vadd.f32 0.0, %v2948
        %v2950 = vpop.f32.mrb[0].mxu0
        %2951 = vmatprep.mubr.bf16.mxu0 0
        %2952 = vmatmul.mubr.bf16.gmra.mrb[0].mxu0 %v2859
        %v2953 = vpop.f32.mrb[0].mxu0
        %v2954 = vadd.f32 0.0, %v2953
        %v2955 = vpop.f32.mrb[0].mxu0
        %v2956 = vpop.f32.mrb[0].mxu0
        %v2957 = vadd.f32 0.0, %v2956
        %v2958 = vpop.f32.mrb[0].mxu0
        %2959 = vmatprep.mubr.bf16.mxu0 0
        %2960 = vmatmul.mubr.bf16.gmra.mrb[0].mxu0 %v2860
        %v2961 = vpop.f32.mrb[0].mxu0
        %v2962 = vadd.f32 0.0, %v2961
        %v2963 = vpop.f32.mrb[0].mxu0
        %v2964 = vpop.f32.mrb[0].mxu0
        %v2965 = vadd.f32 0.0, %v2964
        %v2966 = vpop.f32.mrb[0].mxu0
        %2967 = vmatprep.mubr.bf16.mxu0 0
        %2968 = vmatmul.mubr.bf16.gmra.mrb[0].mxu0 %v2861
        %v2969 = vpop.f32.mrb[0].mxu0
        %v2970 = vadd.f32 0.0, %v2969
        %v2971 = vpop.f32.mrb[0].mxu0
        %v2972 = vpop.f32.mrb[0].mxu0
        %v2973 = vadd.f32 0.0, %v2972
        %v2974 = vpop.f32.mrb[0].mxu0
        %2975 = vmatprep.mubr.bf16.mxu0 0
        %2976 = vmatmul.mubr.bf16.gmra.mrb[0].mxu0 %v2862
        %v2977 = vpop.f32.mrb[0].mxu0
        %v2978 = vadd.f32 0.0, %v2977
        %v2979 = vpop.f32.mrb[0].mxu0
        %v2980 = vpop.f32.mrb[0].mxu0
        %v2981 = vpop.f32.mrb[0].mxu0
        %2982 = vdwg.mxu0
        %v2983 = vadd.f32 %v2829, %v2946
        %v2984 = vadd.f32 %v2830, %v2949
        %v2985 = vadd.f32 %v2831, %v2954
        %v2986 = vadd.f32 %v2832, %v2957
        %v2987 = vadd.f32 %v2833, %v2962
        %v2988 = vadd.f32 %v2834, %v2965
        %v2989 = vadd.f32 %v2835, %v2970
        %v2990 = vadd.f32 %v2836, %v2973
        %v2991 = vadd.f32 %v2837, %v2978
        %s2992 = scalar_lea.vmem %s6, 384
        %v2993 = vld [vmem:[%s2992] sm:$0xf]
        %v2994 = vld [vmem:[%s2992 + $0x4] sm:$0xf]
        %v2995 = vld [vmem:[%s2992 + $0x8] sm:$0xf]
        %v2996 = vld [vmem:[%s2992 + $0xc] sm:$0xf]
        %v2997 = vld [vmem:[%s2992 + $0x10] sm:$0xf]
        %v2998 = vld [vmem:[%s2992 + $0x14] sm:$0xf]
        %v2999 = vld [vmem:[%s2992 + $0x18] sm:$0xf]
        %v3000 = vld [vmem:[%s2992 + $0x1c] sm:$0xf]
        %v3001 = vld [vmem:[%s2992 + $0x20] sm:$0xf]
        %v3002 = vld [vmem:[%s2992 + $0x24] sm:$0xf]
        %v3003 = vld [vmem:[%s2992 + $0x28] sm:$0xf]
        %v3004 = vld [vmem:[%s2992 + $0x2c] sm:$0xf]
        %v3005 = vld [vmem:[%s2992 + $0x30] sm:$0xf]
        %v3006 = vld [vmem:[%s2992 + $0x34] sm:$0xf]
        %v3007 = vld [vmem:[%s2992 + $0x38] sm:$0xf]
        %v3008 = vld [vmem:[%s2992 + $0x3c] sm:$0xf]
        %v3009 = vld [vmem:[#allocation2 + $0x150] sm:$0xff]
        %v3010 = vld [vmem:[#allocation2 + $0x160] sm:$0xff]
        %v3011 = vld [vmem:[#allocation2 + $0x170] sm:$0xff]
        %v3012 = vpack.c.bf16 %v2083, %v2082
        %v3013 = vpack.c.bf16 %v2085, %v2084
        %v3014 = vpack.c.bf16 %v3010, %v3009
        %v3015 = vpack.c.bf16 %v3011, %v3011
        %v3032 = vunpack.c.l.b16 %v2993
        %v3033 = vunpack.c.l.b16 %v2994
        %v3034 = vunpack.c.l.b16 %v2995
        %v3035 = vunpack.c.l.b16 %v2996
        %v3036 = vunpack.c.l.b16 %v2997
        %v3037 = vunpack.c.l.b16 %v2998
        %v3038 = vunpack.c.l.b16 %v2999
        %v3039 = vunpack.c.l.b16 %v3000
        %v3040 = vunpack.c.l.b16 %v3001
        %v3041 = vunpack.c.l.b16 %v3002
        %v3042 = vunpack.c.l.b16 %v3003
        %v3043 = vunpack.c.l.b16 %v3004
        %v3044 = vunpack.c.l.b16 %v3005
        %v3045 = vunpack.c.l.b16 %v3006
        %v3046 = vunpack.c.l.b16 %v3007
        %v3047 = vunpack.c.l.b16 %v3008
        %v3048 = vpack.c.b16 %v3033, %v3032
        %v3049 = vpack.c.b16 %v3035, %v3034
        %v3050 = vpack.c.b16 %v3037, %v3036
        %v3051 = vpack.c.b16 %v3039, %v3038
        %v3052 = vpack.c.b16 %v3041, %v3040
        %v3053 = vpack.c.b16 %v3043, %v3042
        %v3054 = vpack.c.b16 %v3045, %v3044
        %v3055 = vpack.c.b16 %v3047, %v3046
        %3064 = vmatprep.subr.bf16.mxu0 0
        %3065 = vmatpush1.bf16.msra.mxu0 %v3048
        %3066 = vmatprep.subr.bf16.mxu0 0
        %3067 = vmatpush1.bf16.msra.mxu0 %v3049
        %3068 = vmatprep.subr.bf16.mxu0 0
        %3069 = vmatpush1.bf16.msra.mxu0 %v3050
        %3070 = vmatprep.subr.bf16.mxu0 0
        %3071 = vmatpush1.bf16.msra.mxu0 %v3051
        %3072 = vmatprep.subr.bf16.mxu0 0
        %3073 = vmatpush1.bf16.msra.mxu0 %v3052
        %3074 = vmatprep.subr.bf16.mxu0 0
        %3075 = vmatpush1.bf16.msra.mxu0 %v3053
        %3076 = vmatprep.subr.bf16.mxu0 0
        %3077 = vmatpush1.bf16.msra.mxu0 %v3054
        %3078 = vmatprep.subr.bf16.mxu0 0
        %3079 = vmatpush1.bf16.msra.mxu0 %v3055
        %3080 = vmatprep.subr.bf16.mxu0 0
        %3081 = vmatpush1.bf16.msra.mxu0 0
        %3082 = vmatprep.subr.bf16.mxu0 0
        %3083 = vmatpush1.bf16.msra.mxu0 0
        %3084 = vmatprep.subr.bf16.mxu0 0
        %3085 = vmatpush1.bf16.msra.mxu0 0
        %3086 = vmatprep.subr.bf16.mxu0 0
        %3087 = vmatpush1.bf16.msra.mxu0 0
        %3088 = vmatprep.subr.bf16.mxu0 0
        %3089 = vmatpush1.bf16.msra.mxu0 0
        %3090 = vmatprep.subr.bf16.mxu0 0
        %3091 = vmatpush1.bf16.msra.mxu0 0
        %3092 = vmatprep.subr.bf16.mxu0 0
        %3093 = vmatpush1.bf16.msra.mxu0 0
        %3094 = vmatprep.subr.bf16.mxu0 0
        %3095 = vmatpush1.bf16.msra.mxu0 0
        %3096 = vmatprep.mubr.bf16.mxu0 0
        %3097 = vmatmul.mubr.bf16.gmra.mrb[0].mxu0 %v3012
        %v3098 = vpop.f32.mrb[0].mxu0
        %v3099 = vadd.f32 0.0, %v3098
        %v3100 = vpop.f32.mrb[0].mxu0
        %v3101 = vpop.f32.mrb[0].mxu0
        %v3102 = vadd.f32 0.0, %v3101
        %v3103 = vpop.f32.mrb[0].mxu0
        %3104 = vmatprep.mubr.bf16.mxu0 0
        %3105 = vmatmul.mubr.bf16.gmra.mrb[0].mxu0 %v3013
        %v3106 = vpop.f32.mrb[0].mxu0
        %v3107 = vadd.f32 0.0, %v3106
        %v3108 = vpop.f32.mrb[0].mxu0
        %v3109 = vpop.f32.mrb[0].mxu0
        %v3110 = vadd.f32 0.0, %v3109
        %v3111 = vpop.f32.mrb[0].mxu0
        %3112 = vmatprep.mubr.bf16.mxu0 0
        %3113 = vmatmul.mubr.bf16.gmra.mrb[0].mxu0 %v2387
        %v3114 = vpop.f32.mrb[0].mxu0
        %v3115 = vadd.f32 0.0, %v3114
        %v3116 = vpop.f32.mrb[0].mxu0
        %v3117 = vpop.f32.mrb[0].mxu0
        %v3118 = vadd.f32 0.0, %v3117
        %v3119 = vpop.f32.mrb[0].mxu0
        %3120 = vmatprep.mubr.bf16.mxu0 0
        %3121 = vmatmul.mubr.bf16.gmra.mrb[0].mxu0 %v3014
        %v3122 = vpop.f32.mrb[0].mxu0
        %v3123 = vadd.f32 0.0, %v3122
        %v3124 = vpop.f32.mrb[0].mxu0
        %v3125 = vpop.f32.mrb[0].mxu0
        %v3126 = vadd.f32 0.0, %v3125
        %v3127 = vpop.f32.mrb[0].mxu0
        %3128 = vmatprep.mubr.bf16.mxu0 0
        %3129 = vmatmul.mubr.bf16.gmra.mrb[0].mxu0 %v3015
        %v3130 = vpop.f32.mrb[0].mxu0
        %v3131 = vadd.f32 0.0, %v3130
        %v3132 = vpop.f32.mrb[0].mxu0
        %v3133 = vpop.f32.mrb[0].mxu0
        %v3134 = vpop.f32.mrb[0].mxu0
        %3135 = vdwg.mxu0
        %v3136 = vadd.f32 %v2983, %v3099
        %v3137 = vadd.f32 %v2984, %v3102
        %v3138 = vadd.f32 %v2985, %v3107
        %v3139 = vadd.f32 %v2986, %v3110
        %v3140 = vadd.f32 %v2987, %v3115
        %v3141 = vadd.f32 %v2988, %v3118
        %v3142 = vadd.f32 %v2989, %v3123
        %v3143 = vadd.f32 %v2990, %v3126
        %v3144 = vadd.f32 %v2991, %v3131
        %s3145 = scalar_lea.vmem %s6, 448
        %v3146 = vld [vmem:[%s3145] sm:$0xf]
        %v3147 = vld [vmem:[%s3145 + $0x4] sm:$0xf]
        %v3148 = vld [vmem:[%s3145 + $0x8] sm:$0xf]
        %v3149 = vld [vmem:[%s3145 + $0xc] sm:$0xf]
        %v3150 = vld [vmem:[%s3145 + $0x10] sm:$0xf]
        %v3151 = vld [vmem:[%s3145 + $0x14] sm:$0xf]
        %v3152 = vld [vmem:[%s3145 + $0x18] sm:$0xf]
        %v3153 = vld [vmem:[%s3145 + $0x1c] sm:$0xf]
        %v3154 = vld [vmem:[%s3145 + $0x20] sm:$0xf]
        %v3155 = vld [vmem:[%s3145 + $0x24] sm:$0xf]
        %v3156 = vld [vmem:[%s3145 + $0x28] sm:$0xf]
        %v3157 = vld [vmem:[%s3145 + $0x2c] sm:$0xf]
        %v3158 = vld [vmem:[%s3145 + $0x30] sm:$0xf]
        %v3159 = vld [vmem:[%s3145 + $0x34] sm:$0xf]
        %v3160 = vld [vmem:[%s3145 + $0x38] sm:$0xf]
        %v3161 = vld [vmem:[%s3145 + $0x3c] sm:$0xf]
        %v3162 = vld [vmem:[#allocation2 + $0x158] sm:$0xff]
        %v3163 = vld [vmem:[#allocation2 + $0x168] sm:$0xff]
        %v3164 = vld [vmem:[#allocation2 + $0x178] sm:$0xff]
        %v3165 = vpack.c.bf16 %v2114, %v2113
        %v3166 = vpack.c.bf16 %v2116, %v2115
        %v3167 = vpack.c.bf16 %v2118, %v2117
        %v3168 = vpack.c.bf16 %v3163, %v3162
        %v3169 = vpack.c.bf16 %v3164, %v3164
        %v3186 = vunpack.c.l.b16 %v3146
        %v3187 = vunpack.c.l.b16 %v3147
        %v3188 = vunpack.c.l.b16 %v3148
        %v3189 = vunpack.c.l.b16 %v3149
        %v3190 = vunpack.c.l.b16 %v3150
        %v3191 = vunpack.c.l.b16 %v3151
        %v3192 = vunpack.c.l.b16 %v3152
        %v3193 = vunpack.c.l.b16 %v3153
        %v3194 = vunpack.c.l.b16 %v3154
        %v3195 = vunpack.c.l.b16 %v3155
        %v3196 = vunpack.c.l.b16 %v3156
        %v3197 = vunpack.c.l.b16 %v3157
        %v3198 = vunpack.c.l.b16 %v3158
        %v3199 = vunpack.c.l.b16 %v3159
        %v3200 = vunpack.c.l.b16 %v3160
        %v3201 = vunpack.c.l.b16 %v3161
        %v3202 = vpack.c.b16 %v3187, %v3186
        %v3203 = vpack.c.b16 %v3189, %v3188
        %v3204 = vpack.c.b16 %v3191, %v3190
        %v3205 = vpack.c.b16 %v3193, %v3192
        %v3206 = vpack.c.b16 %v3195, %v3194
        %v3207 = vpack.c.b16 %v3197, %v3196
        %v3208 = vpack.c.b16 %v3199, %v3198
        %v3209 = vpack.c.b16 %v3201, %v3200
        %3218 = vmatprep.subr.bf16.mxu0 0
        %3219 = vmatpush1.bf16.msra.mxu0 %v3202
        %3220 = vmatprep.subr.bf16.mxu0 0
        %3221 = vmatpush1.bf16.msra.mxu0 %v3203
        %3222 = vmatprep.subr.bf16.mxu0 0
        %3223 = vmatpush1.bf16.msra.mxu0 %v3204
        %3224 = vmatprep.subr.bf16.mxu0 0
        %3225 = vmatpush1.bf16.msra.mxu0 %v3205
        %3226 = vmatprep.subr.bf16.mxu0 0
        %3227 = vmatpush1.bf16.msra.mxu0 %v3206
        %3228 = vmatprep.subr.bf16.mxu0 0
        %3229 = vmatpush1.bf16.msra.mxu0 %v3207
        %3230 = vmatprep.subr.bf16.mxu0 0
        %3231 = vmatpush1.bf16.msra.mxu0 %v3208
        %3232 = vmatprep.subr.bf16.mxu0 0
        %3233 = vmatpush1.bf16.msra.mxu0 %v3209
        %3234 = vmatprep.subr.bf16.mxu0 0
        %3235 = vmatpush1.bf16.msra.mxu0 0
        %3236 = vmatprep.subr.bf16.mxu0 0
        %3237 = vmatpush1.bf16.msra.mxu0 0
        %3238 = vmatprep.subr.bf16.mxu0 0
        %3239 = vmatpush1.bf16.msra.mxu0 0
        %3240 = vmatprep.subr.bf16.mxu0 0
        %3241 = vmatpush1.bf16.msra.mxu0 0
        %3242 = vmatprep.subr.bf16.mxu0 0
        %3243 = vmatpush1.bf16.msra.mxu0 0
        %3244 = vmatprep.subr.bf16.mxu0 0
        %3245 = vmatpush1.bf16.msra.mxu0 0
        %3246 = vmatprep.subr.bf16.mxu0 0
        %3247 = vmatpush1.bf16.msra.mxu0 0
        %3248 = vmatprep.subr.bf16.mxu0 0
        %3249 = vmatpush1.bf16.msra.mxu0 0
        %3250 = vmatprep.mubr.bf16.mxu0 0
        %3251 = vmatmul.mubr.bf16.gmra.mrb[0].mxu0 %v3165
        %v3252 = vpop.f32.mrb[0].mxu0
        %v3253 = vadd.f32 0.0, %v3252
        %v3254 = vpop.f32.mrb[0].mxu0
        %v3255 = vpop.f32.mrb[0].mxu0
        %v3256 = vadd.f32 0.0, %v3255
        %v3257 = vpop.f32.mrb[0].mxu0
        %3258 = vmatprep.mubr.bf16.mxu0 0
        %3259 = vmatmul.mubr.bf16.gmra.mrb[0].mxu0 %v3166
        %v3260 = vpop.f32.mrb[0].mxu0
        %v3261 = vadd.f32 0.0, %v3260
        %v3262 = vpop.f32.mrb[0].mxu0
        %v3263 = vpop.f32.mrb[0].mxu0
        %v3264 = vadd.f32 0.0, %v3263
        %v3265 = vpop.f32.mrb[0].mxu0
        %3266 = vmatprep.mubr.bf16.mxu0 0
        %3267 = vmatmul.mubr.bf16.gmra.mrb[0].mxu0 %v3167
        %v3268 = vpop.f32.mrb[0].mxu0
        %v3269 = vadd.f32 0.0, %v3268
        %v3270 = vpop.f32.mrb[0].mxu0
        %v3271 = vpop.f32.mrb[0].mxu0
        %v3272 = vadd.f32 0.0, %v3271
        %v3273 = vpop.f32.mrb[0].mxu0
        %3274 = vmatprep.mubr.bf16.mxu0 0
        %3275 = vmatmul.mubr.bf16.gmra.mrb[0].mxu0 %v3168
        %v3276 = vpop.f32.mrb[0].mxu0
        %v3277 = vadd.f32 0.0, %v3276
        %v3278 = vpop.f32.mrb[0].mxu0
        %v3279 = vpop.f32.mrb[0].mxu0
        %v3280 = vadd.f32 0.0, %v3279
        %v3281 = vpop.f32.mrb[0].mxu0
        %3282 = vmatprep.mubr.bf16.mxu0 0
        %3283 = vmatmul.mubr.bf16.gmra.mrb[0].mxu0 %v3169
        %v3284 = vpop.f32.mrb[0].mxu0
        %v3285 = vadd.f32 0.0, %v3284
        %v3286 = vpop.f32.mrb[0].mxu0
        %v3287 = vpop.f32.mrb[0].mxu0
        %v3288 = vpop.f32.mrb[0].mxu0
        %3289 = vdwg.mxu0
        %v3290 = vadd.f32 %v3136, %v3253
        %v3291 = vadd.f32 %v3137, %v3256
        %v3292 = vadd.f32 %v3138, %v3261
        %v3293 = vadd.f32 %v3139, %v3264
        %v3294 = vadd.f32 %v3140, %v3269
        %v3295 = vadd.f32 %v3141, %v3272
        %v3296 = vadd.f32 %v3142, %v3277
        %v3297 = vadd.f32 %v3143, %v3280
        %v3298 = vadd.f32 %v3144, %v3285
        %s3299 = scalar_lea.vmem %s6, 512
        %v3300 = vld [vmem:[%s3299] sm:$0xf]
        %v3301 = vld [vmem:[%s3299 + $0x4] sm:$0xf]
        %v3302 = vld [vmem:[%s3299 + $0x8] sm:$0xf]
        %v3303 = vld [vmem:[%s3299 + $0xc] sm:$0xf]
        %v3304 = vld [vmem:[%s3299 + $0x10] sm:$0xf]
        %v3305 = vld [vmem:[%s3299 + $0x14] sm:$0xf]
        %v3306 = vld [vmem:[%s3299 + $0x18] sm:$0xf]
        %v3307 = vld [vmem:[%s3299 + $0x1c] sm:$0xf]
        %v3308 = vld [vmem:[%s3299 + $0x20] sm:$0xf]
        %v3309 = vld [vmem:[%s3299 + $0x24] sm:$0xf]
        %v3310 = vld [vmem:[%s3299 + $0x28] sm:$0xf]
        %v3311 = vld [vmem:[%s3299 + $0x2c] sm:$0xf]
        %v3312 = vld [vmem:[%s3299 + $0x30] sm:$0xf]
        %v3313 = vld [vmem:[%s3299 + $0x34] sm:$0xf]
        %v3314 = vld [vmem:[%s3299 + $0x38] sm:$0xf]
        %v3315 = vld [vmem:[%s3299 + $0x3c] sm:$0xf]
        %v3316 = vld [vmem:[#allocation2 + $0x180] sm:$0xff]
        %v3317 = vpack.c.bf16 %v2086, %v2382
        %v3318 = vpack.c.bf16 %v2383, %v2087
        %v3319 = vpack.c.bf16 %v3011, %v3010
        %v3320 = vpack.c.bf16 %v3316, %v3316
        %v3337 = vunpack.c.l.b16 %v3300
        %v3338 = vunpack.c.l.b16 %v3301
        %v3339 = vunpack.c.l.b16 %v3302
        %v3340 = vunpack.c.l.b16 %v3303
        %v3341 = vunpack.c.l.b16 %v3304
        %v3342 = vunpack.c.l.b16 %v3305
        %v3343 = vunpack.c.l.b16 %v3306
        %v3344 = vunpack.c.l.b16 %v3307
        %v3345 = vunpack.c.l.b16 %v3308
        %v3346 = vunpack.c.l.b16 %v3309
        %v3347 = vunpack.c.l.b16 %v3310
        %v3348 = vunpack.c.l.b16 %v3311
        %v3349 = vunpack.c.l.b16 %v3312
        %v3350 = vunpack.c.l.b16 %v3313
        %v3351 = vunpack.c.l.b16 %v3314
        %v3352 = vunpack.c.l.b16 %v3315
        %v3353 = vpack.c.b16 %v3338, %v3337
        %v3354 = vpack.c.b16 %v3340, %v3339
        %v3355 = vpack.c.b16 %v3342, %v3341
        %v3356 = vpack.c.b16 %v3344, %v3343
        %v3357 = vpack.c.b16 %v3346, %v3345
        %v3358 = vpack.c.b16 %v3348, %v3347
        %v3359 = vpack.c.b16 %v3350, %v3349
        %v3360 = vpack.c.b16 %v3352, %v3351
        %3369 = vmatprep.subr.bf16.mxu0 0
        %3370 = vmatpush1.bf16.msra.mxu0 %v3353
        %3371 = vmatprep.subr.bf16.mxu0 0
        %3372 = vmatpush1.bf16.msra.mxu0 %v3354
        %3373 = vmatprep.subr.bf16.mxu0 0
        %3374 = vmatpush1.bf16.msra.mxu0 %v3355
        %3375 = vmatprep.subr.bf16.mxu0 0
        %3376 = vmatpush1.bf16.msra.mxu0 %v3356
        %3377 = vmatprep.subr.bf16.mxu0 0
        %3378 = vmatpush1.bf16.msra.mxu0 %v3357
        %3379 = vmatprep.subr.bf16.mxu0 0
        %3380 = vmatpush1.bf16.msra.mxu0 %v3358
        %3381 = vmatprep.subr.bf16.mxu0 0
        %3382 = vmatpush1.bf16.msra.mxu0 %v3359
        %3383 = vmatprep.subr.bf16.mxu0 0
        %3384 = vmatpush1.bf16.msra.mxu0 %v3360
        %3385 = vmatprep.subr.bf16.mxu0 0
        %3386 = vmatpush1.bf16.msra.mxu0 0
        %3387 = vmatprep.subr.bf16.mxu0 0
        %3388 = vmatpush1.bf16.msra.mxu0 0
        %3389 = vmatprep.subr.bf16.mxu0 0
        %3390 = vmatpush1.bf16.msra.mxu0 0
        %3391 = vmatprep.subr.bf16.mxu0 0
        %3392 = vmatpush1.bf16.msra.mxu0 0
        %3393 = vmatprep.subr.bf16.mxu0 0
        %3394 = vmatpush1.bf16.msra.mxu0 0
        %3395 = vmatprep.subr.bf16.mxu0 0
        %3396 = vmatpush1.bf16.msra.mxu0 0
        %3397 = vmatprep.subr.bf16.mxu0 0
        %3398 = vmatpush1.bf16.msra.mxu0 0
        %3399 = vmatprep.subr.bf16.mxu0 0
        %3400 = vmatpush1.bf16.msra.mxu0 0
        %3401 = vmatprep.mubr.bf16.mxu0 0
        %3402 = vmatmul.mubr.bf16.gmra.mrb[0].mxu0 %v2090
        %v3403 = vpop.f32.mrb[0].mxu0
        %v3404 = vadd.f32 0.0, %v3403
        %v3405 = vpop.f32.mrb[0].mxu0
        %v3406 = vpop.f32.mrb[0].mxu0
        %v3407 = vadd.f32 0.0, %v3406
        %v3408 = vpop.f32.mrb[0].mxu0
        %3409 = vmatprep.mubr.bf16.mxu0 0
        %3410 = vmatmul.mubr.bf16.gmra.mrb[0].mxu0 %v3317
        %v3411 = vpop.f32.mrb[0].mxu0
        %v3412 = vadd.f32 0.0, %v3411
        %v3413 = vpop.f32.mrb[0].mxu0
        %v3414 = vpop.f32.mrb[0].mxu0
        %v3415 = vadd.f32 0.0, %v3414
        %v3416 = vpop.f32.mrb[0].mxu0
        %3417 = vmatprep.mubr.bf16.mxu0 0
        %3418 = vmatmul.mubr.bf16.gmra.mrb[0].mxu0 %v3318
        %v3419 = vpop.f32.mrb[0].mxu0
        %v3420 = vadd.f32 0.0, %v3419
        %v3421 = vpop.f32.mrb[0].mxu0
        %v3422 = vpop.f32.mrb[0].mxu0
        %v3423 = vadd.f32 0.0, %v3422
        %v3424 = vpop.f32.mrb[0].mxu0
        %3425 = vmatprep.mubr.bf16.mxu0 0
        %3426 = vmatmul.mubr.bf16.gmra.mrb[0].mxu0 %v3319
        %v3427 = vpop.f32.mrb[0].mxu0
        %v3428 = vadd.f32 0.0, %v3427
        %v3429 = vpop.f32.mrb[0].mxu0
        %v3430 = vpop.f32.mrb[0].mxu0
        %v3431 = vadd.f32 0.0, %v3430
        %v3432 = vpop.f32.mrb[0].mxu0
        %3433 = vmatprep.mubr.bf16.mxu0 0
        %3434 = vmatmul.mubr.bf16.gmra.mrb[0].mxu0 %v3320
        %v3435 = vpop.f32.mrb[0].mxu0
        %v3436 = vadd.f32 0.0, %v3435
        %v3437 = vpop.f32.mrb[0].mxu0
        %v3438 = vpop.f32.mrb[0].mxu0
        %v3439 = vpop.f32.mrb[0].mxu0
        %3440 = vdwg.mxu0
        %v3441 = vadd.f32 %v3290, %v3404
        %v3442 = vadd.f32 %v3291, %v3407
        %v3443 = vadd.f32 %v3292, %v3412
        %v3444 = vadd.f32 %v3293, %v3415
        %v3445 = vadd.f32 %v3294, %v3420
        %v3446 = vadd.f32 %v3295, %v3423
        %v3447 = vadd.f32 %v3296, %v3428
        %v3448 = vadd.f32 %v3297, %v3431
        %v3449 = vadd.f32 %v3298, %v3436
        %v3450 = vld [vmem:[%s7] sm:$0x1]
        %v3452 = vlaneseq
        %v3453 = vshrl.u32 %v3452, 7
        %v3454 = vsub.s32 0, %v3453
        %v3455 = vrot.slane %v3450, %v3454
        %v3457 = vadd.f32 %v3441, %v3455
        %v3458 = vadd.f32 %v3442, %v3455
        %v3459 = vadd.f32 %v3443, %v3455
        %v3460 = vadd.f32 %v3444, %v3455
        %v3461 = vadd.f32 %v3445, %v3455
        %v3462 = vadd.f32 %v3446, %v3455
        %v3463 = vadd.f32 %v3447, %v3455
        %v3464 = vadd.f32 %v3448, %v3455
        %v3465 = vadd.f32 %v3449, %v3455
        %v3466 = vmax.f32 %v3457, 0.0
        %v3467 = vmax.f32 %v3458, 0.0
        %v3468 = vmax.f32 %v3459, 0.0
        %v3469 = vmax.f32 %v3460, 0.0
        %v3470 = vmax.f32 %v3461, 0.0
        %v3471 = vmax.f32 %v3462, 0.0
        %v3472 = vmax.f32 %v3463, 0.0
        %v3473 = vmax.f32 %v3464, 0.0
        %v3474 = vmax.f32 %v3465, 0.0
        %v3475 = vpack.c.bf16 %v3466, %v3466
        %v3476 = vld [vmem:[%s8] sm:$0xf]
        %v3477 = vld [vmem:[%s8 + $0x4] sm:$0xf]
        %v3478 = vld [vmem:[%s8 + $0x8] sm:$0xf]
        %v3479 = vld [vmem:[%s8 + $0xc] sm:$0xf]
        %v3480 = vld [vmem:[%s8 + $0x10] sm:$0xf]
        %v3481 = vld [vmem:[%s8 + $0x14] sm:$0xf]
        %v3482 = vld [vmem:[%s8 + $0x18] sm:$0xf]
        %v3483 = vld [vmem:[%s8 + $0x1c] sm:$0xf]
        %v3484 = vld [vmem:[%s8 + $0x20] sm:$0xf]
        %v3485 = vld [vmem:[%s8 + $0x24] sm:$0xf]
        %v3486 = vld [vmem:[%s8 + $0x28] sm:$0xf]
        %v3487 = vld [vmem:[%s8 + $0x2c] sm:$0xf]
        %v3488 = vld [vmem:[%s8 + $0x30] sm:$0xf]
        %v3489 = vld [vmem:[%s8 + $0x34] sm:$0xf]
        %v3490 = vld [vmem:[%s8 + $0x38] sm:$0xf]
        %v3491 = vld [vmem:[%s8 + $0x3c] sm:$0xf]
        %v3492 = vpack.c.bf16 %v3467, %v3467
        %s3493 = scalar_lea.vmem %s8, 64
        %v3494 = vld [vmem:[%s3493] sm:$0xf]
        %v3495 = vld [vmem:[%s3493 + $0x4] sm:$0xf]
        %v3496 = vld [vmem:[%s3493 + $0x8] sm:$0xf]
        %v3497 = vld [vmem:[%s3493 + $0xc] sm:$0xf]
        %v3498 = vld [vmem:[%s3493 + $0x10] sm:$0xf]
        %v3499 = vld [vmem:[%s3493 + $0x14] sm:$0xf]
        %v3500 = vld [vmem:[%s3493 + $0x18] sm:$0xf]
        %v3501 = vld [vmem:[%s3493 + $0x1c] sm:$0xf]
        %v3502 = vld [vmem:[%s3493 + $0x20] sm:$0xf]
        %v3503 = vld [vmem:[%s3493 + $0x24] sm:$0xf]
        %v3504 = vld [vmem:[%s3493 + $0x28] sm:$0xf]
        %v3505 = vld [vmem:[%s3493 + $0x2c] sm:$0xf]
        %v3506 = vld [vmem:[%s3493 + $0x30] sm:$0xf]
        %v3507 = vld [vmem:[%s3493 + $0x34] sm:$0xf]
        %v3508 = vld [vmem:[%s3493 + $0x38] sm:$0xf]
        %v3509 = vld [vmem:[%s3493 + $0x3c] sm:$0xf]
        %v3526 = vunpack.c.l.b16 %v3494
        %v3527 = vunpack.c.l.b16 %v3495
        %v3528 = vunpack.c.l.b16 %v3496
        %v3529 = vunpack.c.l.b16 %v3497
        %v3530 = vunpack.c.l.b16 %v3498
        %v3531 = vunpack.c.l.b16 %v3499
        %v3532 = vunpack.c.l.b16 %v3500
        %v3533 = vunpack.c.l.b16 %v3501
        %v3534 = vunpack.c.l.b16 %v3502
        %v3535 = vunpack.c.l.b16 %v3503
        %v3536 = vunpack.c.l.b16 %v3504
        %v3537 = vunpack.c.l.b16 %v3505
        %v3538 = vunpack.c.l.b16 %v3506
        %v3539 = vunpack.c.l.b16 %v3507
        %v3540 = vunpack.c.l.b16 %v3508
        %v3541 = vunpack.c.l.b16 %v3509
        %v3542 = vpack.c.b16 %v3527, %v3526
        %v3543 = vpack.c.b16 %v3529, %v3528
        %v3544 = vpack.c.b16 %v3531, %v3530
        %v3545 = vpack.c.b16 %v3533, %v3532
        %v3546 = vpack.c.b16 %v3535, %v3534
        %v3547 = vpack.c.b16 %v3537, %v3536
        %v3548 = vpack.c.b16 %v3539, %v3538
        %v3549 = vpack.c.b16 %v3541, %v3540
        %3558 = vmatprep.subr.bf16.mxu0 0
        %3559 = vmatpush1.bf16.msra.mxu0 %v3542
        %3560 = vmatprep.subr.bf16.mxu0 0
        %3561 = vmatpush1.bf16.msra.mxu0 %v3543
        %3562 = vmatprep.subr.bf16.mxu0 0
        %3563 = vmatpush1.bf16.msra.mxu0 %v3544
        %3564 = vmatprep.subr.bf16.mxu0 0
        %3565 = vmatpush1.bf16.msra.mxu0 %v3545
        %3566 = vmatprep.subr.bf16.mxu0 0
        %3567 = vmatpush1.bf16.msra.mxu0 %v3546
        %3568 = vmatprep.subr.bf16.mxu0 0
        %3569 = vmatpush1.bf16.msra.mxu0 %v3547
        %3570 = vmatprep.subr.bf16.mxu0 0
        %3571 = vmatpush1.bf16.msra.mxu0 %v3548
        %3572 = vmatprep.subr.bf16.mxu0 0
        %3573 = vmatpush1.bf16.msra.mxu0 %v3549
        %3574 = vmatprep.subr.bf16.mxu0 0
        %3575 = vmatpush1.bf16.msra.mxu0 0
        %3576 = vmatprep.subr.bf16.mxu0 0
        %3577 = vmatpush1.bf16.msra.mxu0 0
        %3578 = vmatprep.subr.bf16.mxu0 0
        %3579 = vmatpush1.bf16.msra.mxu0 0
        %3580 = vmatprep.subr.bf16.mxu0 0
        %3581 = vmatpush1.bf16.msra.mxu0 0
        %3582 = vmatprep.subr.bf16.mxu0 0
        %3583 = vmatpush1.bf16.msra.mxu0 0
        %3584 = vmatprep.subr.bf16.mxu0 0
        %3585 = vmatpush1.bf16.msra.mxu0 0
        %3586 = vmatprep.subr.bf16.mxu0 0
        %3587 = vmatpush1.bf16.msra.mxu0 0
        %3588 = vmatprep.subr.bf16.mxu0 0
        %3589 = vmatpush1.bf16.msra.mxu0 0
        %3590 = vmatprep.mubr.bf16.mxu0 0
        %3591 = vmatmul.mubr.bf16.gmra.mrb[0].mxu0 %v3492
        %v3592 = vpop.f32.mrb[0].mxu0
        %v3593 = vadd.f32 0.0, %v3592
        %v3594 = vpop.f32.mrb[0].mxu0
        %v3595 = vpop.f32.mrb[0].mxu0
        %v3596 = vpop.f32.mrb[0].mxu0
        %3597 = vdwg.mxu0
        %v3614 = vunpack.c.l.b16 %v3476
        %v3615 = vunpack.c.l.b16 %v3477
        %v3616 = vunpack.c.l.b16 %v3478
        %v3617 = vunpack.c.l.b16 %v3479
        %v3618 = vunpack.c.l.b16 %v3480
        %v3619 = vunpack.c.l.b16 %v3481
        %v3620 = vunpack.c.l.b16 %v3482
        %v3621 = vunpack.c.l.b16 %v3483
        %v3622 = vunpack.c.l.b16 %v3484
        %v3623 = vunpack.c.l.b16 %v3485
        %v3624 = vunpack.c.l.b16 %v3486
        %v3625 = vunpack.c.l.b16 %v3487
        %v3626 = vunpack.c.l.b16 %v3488
        %v3627 = vunpack.c.l.b16 %v3489
        %v3628 = vunpack.c.l.b16 %v3490
        %v3629 = vunpack.c.l.b16 %v3491
        %v3630 = vpack.c.b16 %v3615, %v3614
        %v3631 = vpack.c.b16 %v3617, %v3616
        %v3632 = vpack.c.b16 %v3619, %v3618
        %v3633 = vpack.c.b16 %v3621, %v3620
        %v3634 = vpack.c.b16 %v3623, %v3622
        %v3635 = vpack.c.b16 %v3625, %v3624
        %v3636 = vpack.c.b16 %v3627, %v3626
        %v3637 = vpack.c.b16 %v3629, %v3628
        %3646 = vmatprep.subr.bf16.mxu0 0
        %3647 = vmatpush1.bf16.msra.mxu0 %v3630
        %3648 = vmatprep.subr.bf16.mxu0 0
        %3649 = vmatpush1.bf16.msra.mxu0 %v3631
        %3650 = vmatprep.subr.bf16.mxu0 0
        %3651 = vmatpush1.bf16.msra.mxu0 %v3632
        %3652 = vmatprep.subr.bf16.mxu0 0
        %3653 = vmatpush1.bf16.msra.mxu0 %v3633
        %3654 = vmatprep.subr.bf16.mxu0 0
        %3655 = vmatpush1.bf16.msra.mxu0 %v3634
        %3656 = vmatprep.subr.bf16.mxu0 0
        %3657 = vmatpush1.bf16.msra.mxu0 %v3635
        %3658 = vmatprep.subr.bf16.mxu0 0
        %3659 = vmatpush1.bf16.msra.mxu0 %v3636
        %3660 = vmatprep.subr.bf16.mxu0 0
        %3661 = vmatpush1.bf16.msra.mxu0 %v3637
        %3662 = vmatprep.subr.bf16.mxu0 0
        %3663 = vmatpush1.bf16.msra.mxu0 0
        %3664 = vmatprep.subr.bf16.mxu0 0
        %3665 = vmatpush1.bf16.msra.mxu0 0
        %3666 = vmatprep.subr.bf16.mxu0 0
        %3667 = vmatpush1.bf16.msra.mxu0 0
        %3668 = vmatprep.subr.bf16.mxu0 0
        %3669 = vmatpush1.bf16.msra.mxu0 0
        %3670 = vmatprep.subr.bf16.mxu0 0
        %3671 = vmatpush1.bf16.msra.mxu0 0
        %3672 = vmatprep.subr.bf16.mxu0 0
        %3673 = vmatpush1.bf16.msra.mxu0 0
        %3674 = vmatprep.subr.bf16.mxu0 0
        %3675 = vmatpush1.bf16.msra.mxu0 0
        %3676 = vmatprep.subr.bf16.mxu0 0
        %3677 = vmatpush1.bf16.msra.mxu0 0
        %3678 = vmatprep.mubr.bf16.mxu0 0
        %3679 = vmatmul.mubr.bf16.gmra.mrb[0].mxu0 %v3475
        %v3680 = vpop.f32.mrb[0].mxu0
        %v3681 = vadd.f32 %v3593, %v3680
        %v3682 = vpop.f32.mrb[0].mxu0
        %v3683 = vpop.f32.mrb[0].mxu0
        %v3684 = vpop.f32.mrb[0].mxu0
        %3685 = vdwg.mxu0
        %v3686 = vpack.c.bf16 %v3468, %v3468
        %s3687 = scalar_lea.vmem %s8, 128
        %v3688 = vld [vmem:[%s3687] sm:$0xf]
        %v3689 = vld [vmem:[%s3687 + $0x4] sm:$0xf]
        %v3690 = vld [vmem:[%s3687 + $0x8] sm:$0xf]
        %v3691 = vld [vmem:[%s3687 + $0xc] sm:$0xf]
        %v3692 = vld [vmem:[%s3687 + $0x10] sm:$0xf]
        %v3693 = vld [vmem:[%s3687 + $0x14] sm:$0xf]
        %v3694 = vld [vmem:[%s3687 + $0x18] sm:$0xf]
        %v3695 = vld [vmem:[%s3687 + $0x1c] sm:$0xf]
        %v3696 = vld [vmem:[%s3687 + $0x20] sm:$0xf]
        %v3697 = vld [vmem:[%s3687 + $0x24] sm:$0xf]
        %v3698 = vld [vmem:[%s3687 + $0x28] sm:$0xf]
        %v3699 = vld [vmem:[%s3687 + $0x2c] sm:$0xf]
        %v3700 = vld [vmem:[%s3687 + $0x30] sm:$0xf]
        %v3701 = vld [vmem:[%s3687 + $0x34] sm:$0xf]
        %v3702 = vld [vmem:[%s3687 + $0x38] sm:$0xf]
        %v3703 = vld [vmem:[%s3687 + $0x3c] sm:$0xf]
        %v3720 = vunpack.c.l.b16 %v3688
        %v3721 = vunpack.c.l.b16 %v3689
        %v3722 = vunpack.c.l.b16 %v3690
        %v3723 = vunpack.c.l.b16 %v3691
        %v3724 = vunpack.c.l.b16 %v3692
        %v3725 = vunpack.c.l.b16 %v3693
        %v3726 = vunpack.c.l.b16 %v3694
        %v3727 = vunpack.c.l.b16 %v3695
        %v3728 = vunpack.c.l.b16 %v3696
        %v3729 = vunpack.c.l.b16 %v3697
        %v3730 = vunpack.c.l.b16 %v3698
        %v3731 = vunpack.c.l.b16 %v3699
        %v3732 = vunpack.c.l.b16 %v3700
        %v3733 = vunpack.c.l.b16 %v3701
        %v3734 = vunpack.c.l.b16 %v3702
        %v3735 = vunpack.c.l.b16 %v3703
        %v3736 = vpack.c.b16 %v3721, %v3720
        %v3737 = vpack.c.b16 %v3723, %v3722
        %v3738 = vpack.c.b16 %v3725, %v3724
        %v3739 = vpack.c.b16 %v3727, %v3726
        %v3740 = vpack.c.b16 %v3729, %v3728
        %v3741 = vpack.c.b16 %v3731, %v3730
        %v3742 = vpack.c.b16 %v3733, %v3732
        %v3743 = vpack.c.b16 %v3735, %v3734
        %3752 = vmatprep.subr.bf16.mxu0 0
        %3753 = vmatpush1.bf16.msra.mxu0 %v3736
        %3754 = vmatprep.subr.bf16.mxu0 0
        %3755 = vmatpush1.bf16.msra.mxu0 %v3737
        %3756 = vmatprep.subr.bf16.mxu0 0
        %3757 = vmatpush1.bf16.msra.mxu0 %v3738
        %3758 = vmatprep.subr.bf16.mxu0 0
        %3759 = vmatpush1.bf16.msra.mxu0 %v3739
        %3760 = vmatprep.subr.bf16.mxu0 0
        %3761 = vmatpush1.bf16.msra.mxu0 %v3740
        %3762 = vmatprep.subr.bf16.mxu0 0
        %3763 = vmatpush1.bf16.msra.mxu0 %v3741
        %3764 = vmatprep.subr.bf16.mxu0 0
        %3765 = vmatpush1.bf16.msra.mxu0 %v3742
        %3766 = vmatprep.subr.bf16.mxu0 0
        %3767 = vmatpush1.bf16.msra.mxu0 %v3743
        %3768 = vmatprep.subr.bf16.mxu0 0
        %3769 = vmatpush1.bf16.msra.mxu0 0
        %3770 = vmatprep.subr.bf16.mxu0 0
        %3771 = vmatpush1.bf16.msra.mxu0 0
        %3772 = vmatprep.subr.bf16.mxu0 0
        %3773 = vmatpush1.bf16.msra.mxu0 0
        %3774 = vmatprep.subr.bf16.mxu0 0
        %3775 = vmatpush1.bf16.msra.mxu0 0
        %3776 = vmatprep.subr.bf16.mxu0 0
        %3777 = vmatpush1.bf16.msra.mxu0 0
        %3778 = vmatprep.subr.bf16.mxu0 0
        %3779 = vmatpush1.bf16.msra.mxu0 0
        %3780 = vmatprep.subr.bf16.mxu0 0
        %3781 = vmatpush1.bf16.msra.mxu0 0
        %3782 = vmatprep.subr.bf16.mxu0 0
        %3783 = vmatpush1.bf16.msra.mxu0 0
        %3784 = vmatprep.mubr.bf16.mxu0 0
        %3785 = vmatmul.mubr.bf16.gmra.mrb[0].mxu0 %v3686
        %v3786 = vpop.f32.mrb[0].mxu0
        %v3787 = vadd.f32 0.0, %v3786
        %v3788 = vpop.f32.mrb[0].mxu0
        %v3789 = vpop.f32.mrb[0].mxu0
        %v3790 = vpop.f32.mrb[0].mxu0
        %3791 = vdwg.mxu0
        %v3792 = vadd.f32 %v3681, %v3787
        %v3793 = vpack.c.bf16 %v3469, %v3469
        %s3794 = scalar_lea.vmem %s8, 192
        %v3795 = vld [vmem:[%s3794] sm:$0xf]
        %v3796 = vld [vmem:[%s3794 + $0x4] sm:$0xf]
        %v3797 = vld [vmem:[%s3794 + $0x8] sm:$0xf]
        %v3798 = vld [vmem:[%s3794 + $0xc] sm:$0xf]
        %v3799 = vld [vmem:[%s3794 + $0x10] sm:$0xf]
        %v3800 = vld [vmem:[%s3794 + $0x14] sm:$0xf]
        %v3801 = vld [vmem:[%s3794 + $0x18] sm:$0xf]
        %v3802 = vld [vmem:[%s3794 + $0x1c] sm:$0xf]
        %v3803 = vld [vmem:[%s3794 + $0x20] sm:$0xf]
        %v3804 = vld [vmem:[%s3794 + $0x24] sm:$0xf]
        %v3805 = vld [vmem:[%s3794 + $0x28] sm:$0xf]
        %v3806 = vld [vmem:[%s3794 + $0x2c] sm:$0xf]
        %v3807 = vld [vmem:[%s3794 + $0x30] sm:$0xf]
        %v3808 = vld [vmem:[%s3794 + $0x34] sm:$0xf]
        %v3809 = vld [vmem:[%s3794 + $0x38] sm:$0xf]
        %v3810 = vld [vmem:[%s3794 + $0x3c] sm:$0xf]
        %v3827 = vunpack.c.l.b16 %v3795
        %v3828 = vunpack.c.l.b16 %v3796
        %v3829 = vunpack.c.l.b16 %v3797
        %v3830 = vunpack.c.l.b16 %v3798
        %v3831 = vunpack.c.l.b16 %v3799
        %v3832 = vunpack.c.l.b16 %v3800
        %v3833 = vunpack.c.l.b16 %v3801
        %v3834 = vunpack.c.l.b16 %v3802
        %v3835 = vunpack.c.l.b16 %v3803
        %v3836 = vunpack.c.l.b16 %v3804
        %v3837 = vunpack.c.l.b16 %v3805
        %v3838 = vunpack.c.l.b16 %v3806
        %v3839 = vunpack.c.l.b16 %v3807
        %v3840 = vunpack.c.l.b16 %v3808
        %v3841 = vunpack.c.l.b16 %v3809
        %v3842 = vunpack.c.l.b16 %v3810
        %v3843 = vpack.c.b16 %v3828, %v3827
        %v3844 = vpack.c.b16 %v3830, %v3829
        %v3845 = vpack.c.b16 %v3832, %v3831
        %v3846 = vpack.c.b16 %v3834, %v3833
        %v3847 = vpack.c.b16 %v3836, %v3835
        %v3848 = vpack.c.b16 %v3838, %v3837
        %v3849 = vpack.c.b16 %v3840, %v3839
        %v3850 = vpack.c.b16 %v3842, %v3841
        %3859 = vmatprep.subr.bf16.mxu0 0
        %3860 = vmatpush1.bf16.msra.mxu0 %v3843
        %3861 = vmatprep.subr.bf16.mxu0 0
        %3862 = vmatpush1.bf16.msra.mxu0 %v3844
        %3863 = vmatprep.subr.bf16.mxu0 0
        %3864 = vmatpush1.bf16.msra.mxu0 %v3845
        %3865 = vmatprep.subr.bf16.mxu0 0
        %3866 = vmatpush1.bf16.msra.mxu0 %v3846
        %3867 = vmatprep.subr.bf16.mxu0 0
        %3868 = vmatpush1.bf16.msra.mxu0 %v3847
        %3869 = vmatprep.subr.bf16.mxu0 0
        %3870 = vmatpush1.bf16.msra.mxu0 %v3848
        %3871 = vmatprep.subr.bf16.mxu0 0
        %3872 = vmatpush1.bf16.msra.mxu0 %v3849
        %3873 = vmatprep.subr.bf16.mxu0 0
        %3874 = vmatpush1.bf16.msra.mxu0 %v3850
        %3875 = vmatprep.subr.bf16.mxu0 0
        %3876 = vmatpush1.bf16.msra.mxu0 0
        %3877 = vmatprep.subr.bf16.mxu0 0
        %3878 = vmatpush1.bf16.msra.mxu0 0
        %3879 = vmatprep.subr.bf16.mxu0 0
        %3880 = vmatpush1.bf16.msra.mxu0 0
        %3881 = vmatprep.subr.bf16.mxu0 0
        %3882 = vmatpush1.bf16.msra.mxu0 0
        %3883 = vmatprep.subr.bf16.mxu0 0
        %3884 = vmatpush1.bf16.msra.mxu0 0
        %3885 = vmatprep.subr.bf16.mxu0 0
        %3886 = vmatpush1.bf16.msra.mxu0 0
        %3887 = vmatprep.subr.bf16.mxu0 0
        %3888 = vmatpush1.bf16.msra.mxu0 0
        %3889 = vmatprep.subr.bf16.mxu0 0
        %3890 = vmatpush1.bf16.msra.mxu0 0
        %3891 = vmatprep.mubr.bf16.mxu0 0
        %3892 = vmatmul.mubr.bf16.gmra.mrb[0].mxu0 %v3793
        %v3893 = vpop.f32.mrb[0].mxu0
        %v3894 = vadd.f32 0.0, %v3893
        %v3895 = vpop.f32.mrb[0].mxu0
        %v3896 = vpop.f32.mrb[0].mxu0
        %v3897 = vpop.f32.mrb[0].mxu0
        %3898 = vdwg.mxu0
        %v3899 = vadd.f32 %v3792, %v3894
        %v3900 = vpack.c.bf16 %v3470, %v3470
        %s3901 = scalar_lea.vmem %s8, 256
        %v3902 = vld [vmem:[%s3901] sm:$0xf]
        %v3903 = vld [vmem:[%s3901 + $0x4] sm:$0xf]
        %v3904 = vld [vmem:[%s3901 + $0x8] sm:$0xf]
        %v3905 = vld [vmem:[%s3901 + $0xc] sm:$0xf]
        %v3906 = vld [vmem:[%s3901 + $0x10] sm:$0xf]
        %v3907 = vld [vmem:[%s3901 + $0x14] sm:$0xf]
        %v3908 = vld [vmem:[%s3901 + $0x18] sm:$0xf]
        %v3909 = vld [vmem:[%s3901 + $0x1c] sm:$0xf]
        %v3910 = vld [vmem:[%s3901 + $0x20] sm:$0xf]
        %v3911 = vld [vmem:[%s3901 + $0x24] sm:$0xf]
        %v3912 = vld [vmem:[%s3901 + $0x28] sm:$0xf]
        %v3913 = vld [vmem:[%s3901 + $0x2c] sm:$0xf]
        %v3914 = vld [vmem:[%s3901 + $0x30] sm:$0xf]
        %v3915 = vld [vmem:[%s3901 + $0x34] sm:$0xf]
        %v3916 = vld [vmem:[%s3901 + $0x38] sm:$0xf]
        %v3917 = vld [vmem:[%s3901 + $0x3c] sm:$0xf]
        %v3934 = vunpack.c.l.b16 %v3902
        %v3935 = vunpack.c.l.b16 %v3903
        %v3936 = vunpack.c.l.b16 %v3904
        %v3937 = vunpack.c.l.b16 %v3905
        %v3938 = vunpack.c.l.b16 %v3906
        %v3939 = vunpack.c.l.b16 %v3907
        %v3940 = vunpack.c.l.b16 %v3908
        %v3941 = vunpack.c.l.b16 %v3909
        %v3942 = vunpack.c.l.b16 %v3910
        %v3943 = vunpack.c.l.b16 %v3911
        %v3944 = vunpack.c.l.b16 %v3912
        %v3945 = vunpack.c.l.b16 %v3913
        %v3946 = vunpack.c.l.b16 %v3914
        %v3947 = vunpack.c.l.b16 %v3915
        %v3948 = vunpack.c.l.b16 %v3916
        %v3949 = vunpack.c.l.b16 %v3917
        %v3950 = vpack.c.b16 %v3935, %v3934
        %v3951 = vpack.c.b16 %v3937, %v3936
        %v3952 = vpack.c.b16 %v3939, %v3938
        %v3953 = vpack.c.b16 %v3941, %v3940
        %v3954 = vpack.c.b16 %v3943, %v3942
        %v3955 = vpack.c.b16 %v3945, %v3944
        %v3956 = vpack.c.b16 %v3947, %v3946
        %v3957 = vpack.c.b16 %v3949, %v3948
        %3966 = vmatprep.subr.bf16.mxu0 0
        %3967 = vmatpush1.bf16.msra.mxu0 %v3950
        %3968 = vmatprep.subr.bf16.mxu0 0
        %3969 = vmatpush1.bf16.msra.mxu0 %v3951
        %3970 = vmatprep.subr.bf16.mxu0 0
        %3971 = vmatpush1.bf16.msra.mxu0 %v3952
        %3972 = vmatprep.subr.bf16.mxu0 0
        %3973 = vmatpush1.bf16.msra.mxu0 %v3953
        %3974 = vmatprep.subr.bf16.mxu0 0
        %3975 = vmatpush1.bf16.msra.mxu0 %v3954
        %3976 = vmatprep.subr.bf16.mxu0 0
        %3977 = vmatpush1.bf16.msra.mxu0 %v3955
        %3978 = vmatprep.subr.bf16.mxu0 0
        %3979 = vmatpush1.bf16.msra.mxu0 %v3956
        %3980 = vmatprep.subr.bf16.mxu0 0
        %3981 = vmatpush1.bf16.msra.mxu0 %v3957
        %3982 = vmatprep.subr.bf16.mxu0 0
        %3983 = vmatpush1.bf16.msra.mxu0 0
        %3984 = vmatprep.subr.bf16.mxu0 0
        %3985 = vmatpush1.bf16.msra.mxu0 0
        %3986 = vmatprep.subr.bf16.mxu0 0
        %3987 = vmatpush1.bf16.msra.mxu0 0
        %3988 = vmatprep.subr.bf16.mxu0 0
        %3989 = vmatpush1.bf16.msra.mxu0 0
        %3990 = vmatprep.subr.bf16.mxu0 0
        %3991 = vmatpush1.bf16.msra.mxu0 0
        %3992 = vmatprep.subr.bf16.mxu0 0
        %3993 = vmatpush1.bf16.msra.mxu0 0
        %3994 = vmatprep.subr.bf16.mxu0 0
        %3995 = vmatpush1.bf16.msra.mxu0 0
        %3996 = vmatprep.subr.bf16.mxu0 0
        %3997 = vmatpush1.bf16.msra.mxu0 0
        %3998 = vmatprep.mubr.bf16.mxu0 0
        %3999 = vmatmul.mubr.bf16.gmra.mrb[0].mxu0 %v3900
        %v4000 = vpop.f32.mrb[0].mxu0
        %v4001 = vadd.f32 0.0, %v4000
        %v4002 = vpop.f32.mrb[0].mxu0
        %v4003 = vpop.f32.mrb[0].mxu0
        %v4004 = vpop.f32.mrb[0].mxu0
        %4005 = vdwg.mxu0
        %v4006 = vadd.f32 %v3899, %v4001
        %v4007 = vpack.c.bf16 %v3471, %v3471
        %s4008 = scalar_lea.vmem %s8, 320
        %v4009 = vld [vmem:[%s4008] sm:$0xf]
        %v4010 = vld [vmem:[%s4008 + $0x4] sm:$0xf]
        %v4011 = vld [vmem:[%s4008 + $0x8] sm:$0xf]
        %v4012 = vld [vmem:[%s4008 + $0xc] sm:$0xf]
        %v4013 = vld [vmem:[%s4008 + $0x10] sm:$0xf]
        %v4014 = vld [vmem:[%s4008 + $0x14] sm:$0xf]
        %v4015 = vld [vmem:[%s4008 + $0x18] sm:$0xf]
        %v4016 = vld [vmem:[%s4008 + $0x1c] sm:$0xf]
        %v4017 = vld [vmem:[%s4008 + $0x20] sm:$0xf]
        %v4018 = vld [vmem:[%s4008 + $0x24] sm:$0xf]
        %v4019 = vld [vmem:[%s4008 + $0x28] sm:$0xf]
        %v4020 = vld [vmem:[%s4008 + $0x2c] sm:$0xf]
        %v4021 = vld [vmem:[%s4008 + $0x30] sm:$0xf]
        %v4022 = vld [vmem:[%s4008 + $0x34] sm:$0xf]
        %v4023 = vld [vmem:[%s4008 + $0x38] sm:$0xf]
        %v4024 = vld [vmem:[%s4008 + $0x3c] sm:$0xf]
        %v4041 = vunpack.c.l.b16 %v4009
        %v4042 = vunpack.c.l.b16 %v4010
        %v4043 = vunpack.c.l.b16 %v4011
        %v4044 = vunpack.c.l.b16 %v4012
        %v4045 = vunpack.c.l.b16 %v4013
        %v4046 = vunpack.c.l.b16 %v4014
        %v4047 = vunpack.c.l.b16 %v4015
        %v4048 = vunpack.c.l.b16 %v4016
        %v4049 = vunpack.c.l.b16 %v4017
        %v4050 = vunpack.c.l.b16 %v4018
        %v4051 = vunpack.c.l.b16 %v4019
        %v4052 = vunpack.c.l.b16 %v4020
        %v4053 = vunpack.c.l.b16 %v4021
        %v4054 = vunpack.c.l.b16 %v4022
        %v4055 = vunpack.c.l.b16 %v4023
        %v4056 = vunpack.c.l.b16 %v4024
        %v4057 = vpack.c.b16 %v4042, %v4041
        %v4058 = vpack.c.b16 %v4044, %v4043
        %v4059 = vpack.c.b16 %v4046, %v4045
        %v4060 = vpack.c.b16 %v4048, %v4047
        %v4061 = vpack.c.b16 %v4050, %v4049
        %v4062 = vpack.c.b16 %v4052, %v4051
        %v4063 = vpack.c.b16 %v4054, %v4053
        %v4064 = vpack.c.b16 %v4056, %v4055
        %4073 = vmatprep.subr.bf16.mxu0 0
        %4074 = vmatpush1.bf16.msra.mxu0 %v4057
        %4075 = vmatprep.subr.bf16.mxu0 0
        %4076 = vmatpush1.bf16.msra.mxu0 %v4058
        %4077 = vmatprep.subr.bf16.mxu0 0
        %4078 = vmatpush1.bf16.msra.mxu0 %v4059
        %4079 = vmatprep.subr.bf16.mxu0 0
        %4080 = vmatpush1.bf16.msra.mxu0 %v4060
        %4081 = vmatprep.subr.bf16.mxu0 0
        %4082 = vmatpush1.bf16.msra.mxu0 %v4061
        %4083 = vmatprep.subr.bf16.mxu0 0
        %4084 = vmatpush1.bf16.msra.mxu0 %v4062
        %4085 = vmatprep.subr.bf16.mxu0 0
        %4086 = vmatpush1.bf16.msra.mxu0 %v4063
        %4087 = vmatprep.subr.bf16.mxu0 0
        %4088 = vmatpush1.bf16.msra.mxu0 %v4064
        %4089 = vmatprep.subr.bf16.mxu0 0
        %4090 = vmatpush1.bf16.msra.mxu0 0
        %4091 = vmatprep.subr.bf16.mxu0 0
        %4092 = vmatpush1.bf16.msra.mxu0 0
        %4093 = vmatprep.subr.bf16.mxu0 0
        %4094 = vmatpush1.bf16.msra.mxu0 0
        %4095 = vmatprep.subr.bf16.mxu0 0
        %4096 = vmatpush1.bf16.msra.mxu0 0
        %4097 = vmatprep.subr.bf16.mxu0 0
        %4098 = vmatpush1.bf16.msra.mxu0 0
        %4099 = vmatprep.subr.bf16.mxu0 0
        %4100 = vmatpush1.bf16.msra.mxu0 0
        %4101 = vmatprep.subr.bf16.mxu0 0
        %4102 = vmatpush1.bf16.msra.mxu0 0
        %4103 = vmatprep.subr.bf16.mxu0 0
        %4104 = vmatpush1.bf16.msra.mxu0 0
        %4105 = vmatprep.mubr.bf16.mxu0 0
        %4106 = vmatmul.mubr.bf16.gmra.mrb[0].mxu0 %v4007
        %v4107 = vpop.f32.mrb[0].mxu0
        %v4108 = vadd.f32 0.0, %v4107
        %v4109 = vpop.f32.mrb[0].mxu0
        %v4110 = vpop.f32.mrb[0].mxu0
        %v4111 = vpop.f32.mrb[0].mxu0
        %4112 = vdwg.mxu0
        %v4113 = vadd.f32 %v4006, %v4108
        %v4114 = vpack.c.bf16 %v3472, %v3472
        %s4115 = scalar_lea.vmem %s8, 384
        %v4116 = vld [vmem:[%s4115] sm:$0xf]
        %v4117 = vld [vmem:[%s4115 + $0x4] sm:$0xf]
        %v4118 = vld [vmem:[%s4115 + $0x8] sm:$0xf]
        %v4119 = vld [vmem:[%s4115 + $0xc] sm:$0xf]
        %v4120 = vld [vmem:[%s4115 + $0x10] sm:$0xf]
        %v4121 = vld [vmem:[%s4115 + $0x14] sm:$0xf]
        %v4122 = vld [vmem:[%s4115 + $0x18] sm:$0xf]
        %v4123 = vld [vmem:[%s4115 + $0x1c] sm:$0xf]
        %v4124 = vld [vmem:[%s4115 + $0x20] sm:$0xf]
        %v4125 = vld [vmem:[%s4115 + $0x24] sm:$0xf]
        %v4126 = vld [vmem:[%s4115 + $0x28] sm:$0xf]
        %v4127 = vld [vmem:[%s4115 + $0x2c] sm:$0xf]
        %v4128 = vld [vmem:[%s4115 + $0x30] sm:$0xf]
        %v4129 = vld [vmem:[%s4115 + $0x34] sm:$0xf]
        %v4130 = vld [vmem:[%s4115 + $0x38] sm:$0xf]
        %v4131 = vld [vmem:[%s4115 + $0x3c] sm:$0xf]
        %v4148 = vunpack.c.l.b16 %v4116
        %v4149 = vunpack.c.l.b16 %v4117
        %v4150 = vunpack.c.l.b16 %v4118
        %v4151 = vunpack.c.l.b16 %v4119
        %v4152 = vunpack.c.l.b16 %v4120
        %v4153 = vunpack.c.l.b16 %v4121
        %v4154 = vunpack.c.l.b16 %v4122
        %v4155 = vunpack.c.l.b16 %v4123
        %v4156 = vunpack.c.l.b16 %v4124
        %v4157 = vunpack.c.l.b16 %v4125
        %v4158 = vunpack.c.l.b16 %v4126
        %v4159 = vunpack.c.l.b16 %v4127
        %v4160 = vunpack.c.l.b16 %v4128
        %v4161 = vunpack.c.l.b16 %v4129
        %v4162 = vunpack.c.l.b16 %v4130
        %v4163 = vunpack.c.l.b16 %v4131
        %v4164 = vpack.c.b16 %v4149, %v4148
        %v4165 = vpack.c.b16 %v4151, %v4150
        %v4166 = vpack.c.b16 %v4153, %v4152
        %v4167 = vpack.c.b16 %v4155, %v4154
        %v4168 = vpack.c.b16 %v4157, %v4156
        %v4169 = vpack.c.b16 %v4159, %v4158
        %v4170 = vpack.c.b16 %v4161, %v4160
        %v4171 = vpack.c.b16 %v4163, %v4162
        %4180 = vmatprep.subr.bf16.mxu0 0
        %4181 = vmatpush1.bf16.msra.mxu0 %v4164
        %4182 = vmatprep.subr.bf16.mxu0 0
        %4183 = vmatpush1.bf16.msra.mxu0 %v4165
        %4184 = vmatprep.subr.bf16.mxu0 0
        %4185 = vmatpush1.bf16.msra.mxu0 %v4166
        %4186 = vmatprep.subr.bf16.mxu0 0
        %4187 = vmatpush1.bf16.msra.mxu0 %v4167
        %4188 = vmatprep.subr.bf16.mxu0 0
        %4189 = vmatpush1.bf16.msra.mxu0 %v4168
        %4190 = vmatprep.subr.bf16.mxu0 0
        %4191 = vmatpush1.bf16.msra.mxu0 %v4169
        %4192 = vmatprep.subr.bf16.mxu0 0
        %4193 = vmatpush1.bf16.msra.mxu0 %v4170
        %4194 = vmatprep.subr.bf16.mxu0 0
        %4195 = vmatpush1.bf16.msra.mxu0 %v4171
        %4196 = vmatprep.subr.bf16.mxu0 0
        %4197 = vmatpush1.bf16.msra.mxu0 0
        %4198 = vmatprep.subr.bf16.mxu0 0
        %4199 = vmatpush1.bf16.msra.mxu0 0
        %4200 = vmatprep.subr.bf16.mxu0 0
        %4201 = vmatpush1.bf16.msra.mxu0 0
        %4202 = vmatprep.subr.bf16.mxu0 0
        %4203 = vmatpush1.bf16.msra.mxu0 0
        %4204 = vmatprep.subr.bf16.mxu0 0
        %4205 = vmatpush1.bf16.msra.mxu0 0
        %4206 = vmatprep.subr.bf16.mxu0 0
        %4207 = vmatpush1.bf16.msra.mxu0 0
        %4208 = vmatprep.subr.bf16.mxu0 0
        %4209 = vmatpush1.bf16.msra.mxu0 0
        %4210 = vmatprep.subr.bf16.mxu0 0
        %4211 = vmatpush1.bf16.msra.mxu0 0
        %4212 = vmatprep.mubr.bf16.mxu0 0
        %4213 = vmatmul.mubr.bf16.gmra.mrb[0].mxu0 %v4114
        %v4214 = vpop.f32.mrb[0].mxu0
        %v4215 = vadd.f32 0.0, %v4214
        %v4216 = vpop.f32.mrb[0].mxu0
        %v4217 = vpop.f32.mrb[0].mxu0
        %v4218 = vpop.f32.mrb[0].mxu0
        %4219 = vdwg.mxu0
        %v4220 = vadd.f32 %v4113, %v4215
        %v4221 = vpack.c.bf16 %v3473, %v3473
        %s4222 = scalar_lea.vmem %s8, 448
        %v4223 = vld [vmem:[%s4222] sm:$0xf]
        %v4224 = vld [vmem:[%s4222 + $0x4] sm:$0xf]
        %v4225 = vld [vmem:[%s4222 + $0x8] sm:$0xf]
        %v4226 = vld [vmem:[%s4222 + $0xc] sm:$0xf]
        %v4227 = vld [vmem:[%s4222 + $0x10] sm:$0xf]
        %v4228 = vld [vmem:[%s4222 + $0x14] sm:$0xf]
        %v4229 = vld [vmem:[%s4222 + $0x18] sm:$0xf]
        %v4230 = vld [vmem:[%s4222 + $0x1c] sm:$0xf]
        %v4231 = vld [vmem:[%s4222 + $0x20] sm:$0xf]
        %v4232 = vld [vmem:[%s4222 + $0x24] sm:$0xf]
        %v4233 = vld [vmem:[%s4222 + $0x28] sm:$0xf]
        %v4234 = vld [vmem:[%s4222 + $0x2c] sm:$0xf]
        %v4235 = vld [vmem:[%s4222 + $0x30] sm:$0xf]
        %v4236 = vld [vmem:[%s4222 + $0x34] sm:$0xf]
        %v4237 = vld [vmem:[%s4222 + $0x38] sm:$0xf]
        %v4238 = vld [vmem:[%s4222 + $0x3c] sm:$0xf]
        %v4255 = vunpack.c.l.b16 %v4223
        %v4256 = vunpack.c.l.b16 %v4224
        %v4257 = vunpack.c.l.b16 %v4225
        %v4258 = vunpack.c.l.b16 %v4226
        %v4259 = vunpack.c.l.b16 %v4227
        %v4260 = vunpack.c.l.b16 %v4228
        %v4261 = vunpack.c.l.b16 %v4229
        %v4262 = vunpack.c.l.b16 %v4230
        %v4263 = vunpack.c.l.b16 %v4231
        %v4264 = vunpack.c.l.b16 %v4232
        %v4265 = vunpack.c.l.b16 %v4233
        %v4266 = vunpack.c.l.b16 %v4234
        %v4267 = vunpack.c.l.b16 %v4235
        %v4268 = vunpack.c.l.b16 %v4236
        %v4269 = vunpack.c.l.b16 %v4237
        %v4270 = vunpack.c.l.b16 %v4238
        %v4271 = vpack.c.b16 %v4256, %v4255
        %v4272 = vpack.c.b16 %v4258, %v4257
        %v4273 = vpack.c.b16 %v4260, %v4259
        %v4274 = vpack.c.b16 %v4262, %v4261
        %v4275 = vpack.c.b16 %v4264, %v4263
        %v4276 = vpack.c.b16 %v4266, %v4265
        %v4277 = vpack.c.b16 %v4268, %v4267
        %v4278 = vpack.c.b16 %v4270, %v4269
        %4287 = vmatprep.subr.bf16.mxu0 0
        %4288 = vmatpush1.bf16.msra.mxu0 %v4271
        %4289 = vmatprep.subr.bf16.mxu0 0
        %4290 = vmatpush1.bf16.msra.mxu0 %v4272
        %4291 = vmatprep.subr.bf16.mxu0 0
        %4292 = vmatpush1.bf16.msra.mxu0 %v4273
        %4293 = vmatprep.subr.bf16.mxu0 0
        %4294 = vmatpush1.bf16.msra.mxu0 %v4274
        %4295 = vmatprep.subr.bf16.mxu0 0
        %4296 = vmatpush1.bf16.msra.mxu0 %v4275
        %4297 = vmatprep.subr.bf16.mxu0 0
        %4298 = vmatpush1.bf16.msra.mxu0 %v4276
        %4299 = vmatprep.subr.bf16.mxu0 0
        %4300 = vmatpush1.bf16.msra.mxu0 %v4277
        %4301 = vmatprep.subr.bf16.mxu0 0
        %4302 = vmatpush1.bf16.msra.mxu0 %v4278
        %4303 = vmatprep.subr.bf16.mxu0 0
        %4304 = vmatpush1.bf16.msra.mxu0 0
        %4305 = vmatprep.subr.bf16.mxu0 0
        %4306 = vmatpush1.bf16.msra.mxu0 0
        %4307 = vmatprep.subr.bf16.mxu0 0
        %4308 = vmatpush1.bf16.msra.mxu0 0
        %4309 = vmatprep.subr.bf16.mxu0 0
        %4310 = vmatpush1.bf16.msra.mxu0 0
        %4311 = vmatprep.subr.bf16.mxu0 0
        %4312 = vmatpush1.bf16.msra.mxu0 0
        %4313 = vmatprep.subr.bf16.mxu0 0
        %4314 = vmatpush1.bf16.msra.mxu0 0
        %4315 = vmatprep.subr.bf16.mxu0 0
        %4316 = vmatpush1.bf16.msra.mxu0 0
        %4317 = vmatprep.subr.bf16.mxu0 0
        %4318 = vmatpush1.bf16.msra.mxu0 0
        %4319 = vmatprep.mubr.bf16.mxu0 0
        %4320 = vmatmul.mubr.bf16.gmra.mrb[0].mxu0 %v4221
        %v4321 = vpop.f32.mrb[0].mxu0
        %v4322 = vadd.f32 0.0, %v4321
        %v4323 = vpop.f32.mrb[0].mxu0
        %v4324 = vpop.f32.mrb[0].mxu0
        %v4325 = vpop.f32.mrb[0].mxu0
        %4326 = vdwg.mxu0
        %v4327 = vadd.f32 %v4220, %v4322
        %v4328 = vpack.c.bf16 %v3474, %v3474
        %s4329 = scalar_lea.vmem %s8, 512
        %v4330 = vld [vmem:[%s4329] sm:$0xf]
        %v4331 = vld [vmem:[%s4329 + $0x4] sm:$0xf]
        %v4332 = vld [vmem:[%s4329 + $0x8] sm:$0xf]
        %v4333 = vld [vmem:[%s4329 + $0xc] sm:$0xf]
        %v4334 = vld [vmem:[%s4329 + $0x10] sm:$0xf]
        %v4335 = vld [vmem:[%s4329 + $0x14] sm:$0xf]
        %v4336 = vld [vmem:[%s4329 + $0x18] sm:$0xf]
        %v4337 = vld [vmem:[%s4329 + $0x1c] sm:$0xf]
        %v4338 = vld [vmem:[%s4329 + $0x20] sm:$0xf]
        %v4339 = vld [vmem:[%s4329 + $0x24] sm:$0xf]
        %v4340 = vld [vmem:[%s4329 + $0x28] sm:$0xf]
        %v4341 = vld [vmem:[%s4329 + $0x2c] sm:$0xf]
        %v4342 = vld [vmem:[%s4329 + $0x30] sm:$0xf]
        %v4343 = vld [vmem:[%s4329 + $0x34] sm:$0xf]
        %v4344 = vld [vmem:[%s4329 + $0x38] sm:$0xf]
        %v4345 = vld [vmem:[%s4329 + $0x3c] sm:$0xf]
        %v4362 = vunpack.c.l.b16 %v4330
        %v4363 = vunpack.c.l.b16 %v4331
        %v4364 = vunpack.c.l.b16 %v4332
        %v4365 = vunpack.c.l.b16 %v4333
        %v4366 = vunpack.c.l.b16 %v4334
        %v4367 = vunpack.c.l.b16 %v4335
        %v4368 = vunpack.c.l.b16 %v4336
        %v4369 = vunpack.c.l.b16 %v4337
        %v4370 = vunpack.c.l.b16 %v4338
        %v4371 = vunpack.c.l.b16 %v4339
        %v4372 = vunpack.c.l.b16 %v4340
        %v4373 = vunpack.c.l.b16 %v4341
        %v4374 = vunpack.c.l.b16 %v4342
        %v4375 = vunpack.c.l.b16 %v4343
        %v4376 = vunpack.c.l.b16 %v4344
        %v4377 = vunpack.c.l.b16 %v4345
        %v4378 = vpack.c.b16 %v4363, %v4362
        %v4379 = vpack.c.b16 %v4365, %v4364
        %v4380 = vpack.c.b16 %v4367, %v4366
        %v4381 = vpack.c.b16 %v4369, %v4368
        %v4382 = vpack.c.b16 %v4371, %v4370
        %v4383 = vpack.c.b16 %v4373, %v4372
        %v4384 = vpack.c.b16 %v4375, %v4374
        %v4385 = vpack.c.b16 %v4377, %v4376
        %4394 = vmatprep.subr.bf16.mxu0 0
        %4395 = vmatpush1.bf16.msra.mxu0 %v4378
        %4396 = vmatprep.subr.bf16.mxu0 0
        %4397 = vmatpush1.bf16.msra.mxu0 %v4379
        %4398 = vmatprep.subr.bf16.mxu0 0
        %4399 = vmatpush1.bf16.msra.mxu0 %v4380
        %4400 = vmatprep.subr.bf16.mxu0 0
        %4401 = vmatpush1.bf16.msra.mxu0 %v4381
        %4402 = vmatprep.subr.bf16.mxu0 0
        %4403 = vmatpush1.bf16.msra.mxu0 %v4382
        %4404 = vmatprep.subr.bf16.mxu0 0
        %4405 = vmatpush1.bf16.msra.mxu0 %v4383
        %4406 = vmatprep.subr.bf16.mxu0 0
        %4407 = vmatpush1.bf16.msra.mxu0 %v4384
        %4408 = vmatprep.subr.bf16.mxu0 0
        %4409 = vmatpush1.bf16.msra.mxu0 %v4385
        %4410 = vmatprep.subr.bf16.mxu0 0
        %4411 = vmatpush1.bf16.msra.mxu0 0
        %4412 = vmatprep.subr.bf16.mxu0 0
        %4413 = vmatpush1.bf16.msra.mxu0 0
        %4414 = vmatprep.subr.bf16.mxu0 0
        %4415 = vmatpush1.bf16.msra.mxu0 0
        %4416 = vmatprep.subr.bf16.mxu0 0
        %4417 = vmatpush1.bf16.msra.mxu0 0
        %4418 = vmatprep.subr.bf16.mxu0 0
        %4419 = vmatpush1.bf16.msra.mxu0 0
        %4420 = vmatprep.subr.bf16.mxu0 0
        %4421 = vmatpush1.bf16.msra.mxu0 0
        %4422 = vmatprep.subr.bf16.mxu0 0
        %4423 = vmatpush1.bf16.msra.mxu0 0
        %4424 = vmatprep.subr.bf16.mxu0 0
        %4425 = vmatpush1.bf16.msra.mxu0 0
        %4426 = vmatprep.mubr.bf16.mxu0 0
        %4427 = vmatmul.mubr.bf16.gmra.mrb[0].mxu0 %v4328
        %v4428 = vpop.f32.mrb[0].mxu0
        %v4429 = vadd.f32 0.0, %v4428
        %v4430 = vpop.f32.mrb[0].mxu0
        %v4431 = vpop.f32.mrb[0].mxu0
        %v4432 = vpop.f32.mrb[0].mxu0
        %4433 = vdwg.mxu0
        %v4434 = vadd.f32 %v4327, %v4429
        %v4435 = vld [vmem:[%s9] sm:$0x1]
        %v4437 = vlaneseq
        %v4438 = vshrl.u32 %v4437, 7
        %v4439 = vsub.s32 0, %v4438
        %v4440 = vrot.slane %v4435, %v4439
        %v4442 = vadd.f32 %v4434, %v4440
        %v4443 = vmax.f32 %v4442, 0.0
        %v4444 = vld [vmem:[%s546] sm:$0xff]
        %v4445 = vld [vmem:[%s10] sm:$0xff]
        %v4446 = vld [vmem:[%s10 + $0x8] sm:$0xff]
        %v4447 = vld [vmem:[%s10 + $0x10] sm:$0xff]
        %v4448 = vld [vmem:[%s10 + $0x18] sm:$0xff]
        %v4449 = vld [vmem:[%s10 + $0x20] sm:$0xff]
        %v4450 = vld [vmem:[%s10 + $0x28] sm:$0xff]
        %v4451 = vld [vmem:[%s10 + $0x30] sm:$0xff]
        %v4452 = vld [vmem:[%s10 + $0x38] sm:$0xff]
        %v4453 = vld [vmem:[%s10 + $0x40] sm:$0xff]
        %v4454 = vld [vmem:[%s10 + $0x48] sm:$0xff]
        %v4455 = vld [vmem:[%s10 + $0x50] sm:$0xff]
        %v4456 = vld [vmem:[%s10 + $0x58] sm:$0xff]
        %v4457 = vld [vmem:[%s10 + $0x60] sm:$0xff]
        %v4458 = vld [vmem:[%s10 + $0x68] sm:$0xff]
        %v4459 = vld [vmem:[%s10 + $0x70] sm:$0xff]
        %v4460 = vld [vmem:[%s10 + $0x78] sm:$0xff]
        %v4461 = vld [vmem:[%s11] sm:$0xff]
        %vm4462 = vcmask 64512
        %v4464 = vsel %vm4462, %v4444, 0
        %4466 = vmatprep.subr.mxu0 0.0
        %4467 = vmatpush1.msra.mxu0 %v4461
        %4468 = vmatprep.subr.mxu0 0.0
        %4469 = vmatpush1.msra.mxu0 0.0
        %4470 = vmatprep.subr.mxu0 0.0
        %4471 = vmatpush1.msra.mxu0 0.0
        %4472 = vmatprep.subr.mxu0 0.0
        %4473 = vmatpush1.msra.mxu0 0.0
        %4474 = vmatprep.subr.mxu0 0.0
        %4475 = vmatpush1.msra.mxu0 0.0
        %4476 = vmatprep.subr.mxu0 0.0
        %4477 = vmatpush1.msra.mxu0 0.0
        %4478 = vmatprep.subr.mxu0 0.0
        %4479 = vmatpush1.msra.mxu0 0.0
        %4480 = vmatprep.subr.mxu0 0.0
        %4481 = vmatpush1.msra.mxu0 0.0
        %4482 = vmatprep.subr.mxu0 0.0
        %4483 = vmatpush1.msra.mxu0 0.0
        %4484 = vmatprep.subr.mxu0 0.0
        %4485 = vmatpush1.msra.mxu0 0.0
        %4486 = vmatprep.subr.mxu0 0.0
        %4487 = vmatpush1.msra.mxu0 0.0
        %4488 = vmatprep.subr.mxu0 0.0
        %4489 = vmatpush1.msra.mxu0 0.0
        %4490 = vmatprep.subr.mxu0 0.0
        %4491 = vmatpush1.msra.mxu0 0.0
        %4492 = vmatprep.subr.mxu0 0.0
        %4493 = vmatpush1.msra.mxu0 0.0
        %4494 = vmatprep.subr.mxu0 0.0
        %4495 = vmatpush1.msra.mxu0 0.0
        %4496 = vmatprep.subr.mxu0 0.0
        %4497 = vmatpush1.msra.mxu0 0.0
        %4498 = vmatprep.subr.mxu0 0.0
        %4499 = vmatpush1.msra.mxu0 0.0
        %4500 = vmatprep.subr.mxu0 0.0
        %4501 = vmatpush1.msra.mxu0 0.0
        %4502 = vmatprep.subr.mxu0 0.0
        %4503 = vmatpush1.msra.mxu0 0.0
        %4504 = vmatprep.subr.mxu0 0.0
        %4505 = vmatpush1.msra.mxu0 0.0
        %4506 = vmatprep.subr.mxu0 0.0
        %4507 = vmatpush1.msra.mxu0 0.0
        %4508 = vmatprep.subr.mxu0 0.0
        %4509 = vmatpush1.msra.mxu0 0.0
        %4510 = vmatprep.subr.mxu0 0.0
        %4511 = vmatpush1.msra.mxu0 0.0
        %4512 = vmatprep.subr.mxu0 0.0
        %4513 = vmatpush1.msra.mxu0 0.0
        %4514 = vmatprep.subr.mxu0 0.0
        %4515 = vmatpush1.msra.mxu0 0.0
        %4516 = vmatprep.subr.mxu0 0.0
        %4517 = vmatpush1.msra.mxu0 0.0
        %4518 = vmatprep.subr.mxu0 0.0
        %4519 = vmatpush1.msra.mxu0 0.0
        %4520 = vmatprep.subr.mxu0 0.0
        %4521 = vmatpush1.msra.mxu0 0.0
        %4522 = vmatprep.subr.mxu0 0.0
        %4523 = vmatpush1.msra.mxu0 0.0
        %4524 = vmatprep.subr.mxu0 0.0
        %4525 = vmatpush1.msra.mxu0 0.0
        %4526 = vmatprep.subr.mxu0 0.0
        %4527 = vmatpush1.msra.mxu0 0.0
        %4528 = vmatprep.subr.mxu0 0.0
        %4529 = vmatpush1.msra.mxu0 0.0
        %4530 = vmatprep.mubr.f32.mxu0 0.0
        %4531 = vmatmul.mubr.f32.gmra.mrb[0].mxu0 %v4464
        %v4532 = vpop.f32.mrb[0].mxu0
        %v4533 = vadd.f32 0.0, %v4532
        %v4534 = vpop.f32.mrb[0].mxu0
        %4535 = vdwg.mxu0
        %4536 = vmatprep.subr.mxu0 0.0
        %4537 = vmatpush1.msra.mxu0 %v4445
        %4538 = vmatprep.subr.mxu0 0.0
        %4539 = vmatpush1.msra.mxu0 %v4446
        %4540 = vmatprep.subr.mxu0 0.0
        %4541 = vmatpush1.msra.mxu0 %v4447
        %4542 = vmatprep.subr.mxu0 0.0
        %4543 = vmatpush1.msra.mxu0 %v4448
        %4544 = vmatprep.subr.mxu0 0.0
        %4545 = vmatpush1.msra.mxu0 %v4449
        %4546 = vmatprep.subr.mxu0 0.0
        %4547 = vmatpush1.msra.mxu0 %v4450
        %4548 = vmatprep.subr.mxu0 0.0
        %4549 = vmatpush1.msra.mxu0 %v4451
        %4550 = vmatprep.subr.mxu0 0.0
        %4551 = vmatpush1.msra.mxu0 %v4452
        %4552 = vmatprep.subr.mxu0 0.0
        %4553 = vmatpush1.msra.mxu0 %v4453
        %4554 = vmatprep.subr.mxu0 0.0
        %4555 = vmatpush1.msra.mxu0 %v4454
        %4556 = vmatprep.subr.mxu0 0.0
        %4557 = vmatpush1.msra.mxu0 %v4455
        %4558 = vmatprep.subr.mxu0 0.0
        %4559 = vmatpush1.msra.mxu0 %v4456
        %4560 = vmatprep.subr.mxu0 0.0
        %4561 = vmatpush1.msra.mxu0 %v4457
        %4562 = vmatprep.subr.mxu0 0.0
        %4563 = vmatpush1.msra.mxu0 %v4458
        %4564 = vmatprep.subr.mxu0 0.0
        %4565 = vmatpush1.msra.mxu0 %v4459
        %4566 = vmatprep.subr.mxu0 0.0
        %4567 = vmatpush1.msra.mxu0 %v4460
        %4568 = vmatprep.subr.mxu0 0.0
        %4569 = vmatpush1.msra.mxu0 0.0
        %4570 = vmatprep.subr.mxu0 0.0
        %4571 = vmatpush1.msra.mxu0 0.0
        %4572 = vmatprep.subr.mxu0 0.0
        %4573 = vmatpush1.msra.mxu0 0.0
        %4574 = vmatprep.subr.mxu0 0.0
        %4575 = vmatpush1.msra.mxu0 0.0
        %4576 = vmatprep.subr.mxu0 0.0
        %4577 = vmatpush1.msra.mxu0 0.0
        %4578 = vmatprep.subr.mxu0 0.0
        %4579 = vmatpush1.msra.mxu0 0.0
        %4580 = vmatprep.subr.mxu0 0.0
        %4581 = vmatpush1.msra.mxu0 0.0
        %4582 = vmatprep.subr.mxu0 0.0
        %4583 = vmatpush1.msra.mxu0 0.0
        %4584 = vmatprep.subr.mxu0 0.0
        %4585 = vmatpush1.msra.mxu0 0.0
        %4586 = vmatprep.subr.mxu0 0.0
        %4587 = vmatpush1.msra.mxu0 0.0
        %4588 = vmatprep.subr.mxu0 0.0
        %4589 = vmatpush1.msra.mxu0 0.0
        %4590 = vmatprep.subr.mxu0 0.0
        %4591 = vmatpush1.msra.mxu0 0.0
        %4592 = vmatprep.subr.mxu0 0.0
        %4593 = vmatpush1.msra.mxu0 0.0
        %4594 = vmatprep.subr.mxu0 0.0
        %4595 = vmatpush1.msra.mxu0 0.0
        %4596 = vmatprep.subr.mxu0 0.0
        %4597 = vmatpush1.msra.mxu0 0.0
        %4598 = vmatprep.subr.mxu0 0.0
        %4599 = vmatpush1.msra.mxu0 0.0
        %4600 = vmatprep.mubr.f32.mxu0 0.0
        %4601 = vmatmul.mubr.f32.gmra.mrb[0].mxu0 %v4443
        %v4602 = vpop.f32.mrb[0].mxu0
        %v4603 = vadd.f32 %v4533, %v4602
        %v4604 = vpop.f32.mrb[0].mxu0
        %4605 = vdwg.mxu0
        %v4606 = vld [vmem:[%s12] sm:$0x1]
        %v4608 = vlaneseq
        %v4609 = vshrl.u32 %v4608, 7
        %v4610 = vsub.s32 0, %v4609
        %v4611 = vrot.slane %v4606, %v4610
        %v4613 = vadd.f32 %v4603, %v4611
        %v4614 = vmax.f32 %v4613, 0.0
        %v4615 = vld [vmem:[%s13] sm:$0xff]
        %v4616 = vld [vmem:[%s13 + $0x8] sm:$0xff]
        %v4617 = vld [vmem:[%s13 + $0x10] sm:$0xff]
        %v4618 = vld [vmem:[%s13 + $0x18] sm:$0xff]
        %v4619 = vld [vmem:[%s13 + $0x20] sm:$0xff]
        %v4620 = vld [vmem:[%s13 + $0x28] sm:$0xff]
        %v4621 = vld [vmem:[%s13 + $0x30] sm:$0xff]
        %v4622 = vld [vmem:[%s13 + $0x38] sm:$0xff]
        %v4623 = vld [vmem:[%s13 + $0x40] sm:$0xff]
        %v4624 = vld [vmem:[%s13 + $0x48] sm:$0xff]
        %v4625 = vld [vmem:[%s13 + $0x50] sm:$0xff]
        %v4626 = vld [vmem:[%s13 + $0x58] sm:$0xff]
        %v4627 = vld [vmem:[%s13 + $0x60] sm:$0xff]
        %v4628 = vld [vmem:[%s13 + $0x68] sm:$0xff]
        %v4629 = vld [vmem:[%s13 + $0x70] sm:$0xff]
        %v4630 = vld [vmem:[%s13 + $0x78] sm:$0xff]
        %v4631 = vld [vmem:[%s14] sm:$0x1]
        %v4633 = vlaneseq
        %v4634 = vshrl.u32 %v4633, 7
        %v4635 = vsub.s32 0, %v4634
        %v4636 = vrot.slane %v4631, %v4635
        %4638 = vmatprep.subr.mxu0 0.0
        %4639 = vmatpush1.msra.mxu0 %v4615
        %4640 = vmatprep.subr.mxu0 0.0
        %4641 = vmatpush1.msra.mxu0 %v4616
        %4642 = vmatprep.subr.mxu0 0.0
        %4643 = vmatpush1.msra.mxu0 %v4617
        %4644 = vmatprep.subr.mxu0 0.0
        %4645 = vmatpush1.msra.mxu0 %v4618
        %4646 = vmatprep.subr.mxu0 0.0
        %4647 = vmatpush1.msra.mxu0 %v4619
        %4648 = vmatprep.subr.mxu0 0.0
        %4649 = vmatpush1.msra.mxu0 %v4620
        %4650 = vmatprep.subr.mxu0 0.0
        %4651 = vmatpush1.msra.mxu0 %v4621
        %4652 = vmatprep.subr.mxu0 0.0
        %4653 = vmatpush1.msra.mxu0 %v4622
        %4654 = vmatprep.subr.mxu0 0.0
        %4655 = vmatpush1.msra.mxu0 %v4623
        %4656 = vmatprep.subr.mxu0 0.0
        %4657 = vmatpush1.msra.mxu0 %v4624
        %4658 = vmatprep.subr.mxu0 0.0
        %4659 = vmatpush1.msra.mxu0 %v4625
        %4660 = vmatprep.subr.mxu0 0.0
        %4661 = vmatpush1.msra.mxu0 %v4626
        %4662 = vmatprep.subr.mxu0 0.0
        %4663 = vmatpush1.msra.mxu0 %v4627
        %4664 = vmatprep.subr.mxu0 0.0
        %4665 = vmatpush1.msra.mxu0 %v4628
        %4666 = vmatprep.subr.mxu0 0.0
        %4667 = vmatpush1.msra.mxu0 %v4629
        %4668 = vmatprep.subr.mxu0 0.0
        %4669 = vmatpush1.msra.mxu0 %v4630
        %4670 = vmatprep.subr.mxu0 0.0
        %4671 = vmatpush1.msra.mxu0 0.0
        %4672 = vmatprep.subr.mxu0 0.0
        %4673 = vmatpush1.msra.mxu0 0.0
        %4674 = vmatprep.subr.mxu0 0.0
        %4675 = vmatpush1.msra.mxu0 0.0
        %4676 = vmatprep.subr.mxu0 0.0
        %4677 = vmatpush1.msra.mxu0 0.0
        %4678 = vmatprep.subr.mxu0 0.0
        %4679 = vmatpush1.msra.mxu0 0.0
        %4680 = vmatprep.subr.mxu0 0.0
        %4681 = vmatpush1.msra.mxu0 0.0
        %4682 = vmatprep.subr.mxu0 0.0
        %4683 = vmatpush1.msra.mxu0 0.0
        %4684 = vmatprep.subr.mxu0 0.0
        %4685 = vmatpush1.msra.mxu0 0.0
        %4686 = vmatprep.subr.mxu0 0.0
        %4687 = vmatpush1.msra.mxu0 0.0
        %4688 = vmatprep.subr.mxu0 0.0
        %4689 = vmatpush1.msra.mxu0 0.0
        %4690 = vmatprep.subr.mxu0 0.0
        %4691 = vmatpush1.msra.mxu0 0.0
        %4692 = vmatprep.subr.mxu0 0.0
        %4693 = vmatpush1.msra.mxu0 0.0
        %4694 = vmatprep.subr.mxu0 0.0
        %4695 = vmatpush1.msra.mxu0 0.0
        %4696 = vmatprep.subr.mxu0 0.0
        %4697 = vmatpush1.msra.mxu0 0.0
        %4698 = vmatprep.subr.mxu0 0.0
        %4699 = vmatpush1.msra.mxu0 0.0
        %4700 = vmatprep.subr.mxu0 0.0
        %4701 = vmatpush1.msra.mxu0 0.0
        %4702 = vmatprep.mubr.f32.mxu0 0.0
        %4703 = vmatmul.mubr.f32.gmra.mrb[0].mxu0 %v4614
        %v4704 = vpop.f32.mrb[0].mxu0
        %v4705 = vadd.f32 %v4636, %v4704
        %v4706 = vpop.f32.mrb[0].mxu0
        %4707 = vdwg.mxu0
        %vm4708 = vcmask 31744
        %v4709 = vsel %vm4708, %v4705, -inf
        %4710 = vmax.xlane.f32.xlu0 %v4709
        %v4711 = vpop.xlane.xlu0 %4710
        %v4712 = vsub.f32 %v4705, %v4711
        %v4713 = vmul.f32 %v4712, 1.442695
        %v4714 = vpow.pop %v4713
        %v4715 = vsel %vm4708, %v4714, 0.0
        %4716 = vadd.xlane.f32.xlu0 %v4715
        %v4717 = vpop.xlane.xlu0 %4716
        %v4718 = vrcp.pop %v4717
        %v4719 = vmul.f32 %v4714, %v4718
        %v4720 = vsel %vm4708, %v4719, %v4705
        %vm4721 = vcmask 39936
        %v4722 = vsel %vm4721, %v4720, 0.0
        %4723 = vst [vmem:[%s555] sm:$0xff] %v4722
      $region92: #{image_ppo_network_forward.1} parent=79 // pred_fallthru
        _
      %p4724 = scmp.lt.s32.totalorder %s30, 0
      %s4725 = scalar_select %p4724, %s30, 0
      %s4726 = smul.addr %s4725, 8
      %s4727 = scalar_lea.vmem %s15, %s4726
      // Predicated region
      $region93: #{image_ppo_network_forward.1} parent=79 // pred_check
        %p4728 = pneg %p388
      $region94: #{image_ppo_network_forward.1} parent=79 // pred_check_branch
        %4730 = sbr.rel (%p4728) target = $region96
      $region95: #{image_ppo_network_forward.1} parent=79 // pred_region
        _
      $region96: #{image_ppo_network_forward.1} parent=79 // pred_fallthru
        _
      // Predicated region
      $region97: #{image_ppo_network_forward.1} parent=79 // pred_check
        %p4731 = pneg %p388
      $region98: #{image_ppo_network_forward.1} parent=79 // pred_check_branch
        %4733 = sbr.rel (%p4731) target = $region100
      $region99: #{image_ppo_network_forward.1} parent=79 // pred_region
        %p4734 = scmp.lt.s32.totalorder %s30, 0
        %s4735 = scalar_select %p4734, %s30, 0
        %s4736 = smul.addr %s4735, 8
        %s4737 = scalar_lea.vmem %s15, %s4736
      $region100: #{image_ppo_network_forward.1} parent=79 // pred_fallthru
        _
    $region80: #{image_ppo_network_forward.1} parent=5 // pred_fallthru
      _
    %p4738 = scmp.le.s32.totalorder 2, %s21
    // Predicated region
    $region101: #{image_ppo_network_forward.1} parent=5 // pred_check
      %p4739 = pneg %p4738
    $region102: #{image_ppo_network_forward.1} parent=5 // pred_check_branch
      %4741 = sbr.rel (%p4739) target = $region104
    $region103: #{image_ppo_network_forward.1} parent=5 // pred_region
      %s4742 = ssub.s32 %s21, 2
    $region104: #{image_ppo_network_forward.1} parent=5 // pred_fallthru
      _
  $region6: #{image_ppo_network_forward.1} parent=0 // loop_footer
    %s25 = sadd.s32 1, %s21
  $region7: #{image_ppo_network_forward.1} parent=0 // loop_footer_branch
    %20 = sbr.rel target = $region3
  $region8: #{image_ppo_network_forward.1} parent=0 // loop_exit
    _

</llo_original>
